<compile_context>
chip_gen: v5e
topology: v5e:2x2
jax: 0.10.0
libtpu: 0.0.40
codegen_flags: <defaults>
</compile_context>

<pallas_src>
import numpy as np
import jax
import jax.numpy as jnp
from jax import lax
from jax.experimental import pallas as pl
from jax.experimental.pallas import tpu as pltpu


# -----------------------------------------------------------------------------
# Single fused kernel: B_BLK images per grid step, everything in SSA values.
# Internal row layout is (spatial_row, batch) on sublanes, features on lanes.
# -----------------------------------------------------------------------------
def _net_kernel(x_ref, g1_ref, b1_ref, g2_ref, b2_ref, wg1_ref, bf1_ref,
                w2_ref, bf2_ref, o_ref):
    B = o_ref.shape[0]                      # images per grid step (static)

    # ---- conv1 (1->10, k=5) as 5 banded GEMMs over dy --------------------
    # x_ref: [28, B, 28]  (iy, b, ix).  Output rows r = oy*B + b, cols ox*10+co.
    acc1 = None
    for dy in range(5):
        xs = x_ref[pl.ds(dy, 24), :, :].reshape(24 * B, 28)     # rows (oy, b)
        t = jnp.dot(xs, g1_ref[dy], preferred_element_type=jnp.float32)
        acc1 = t if acc1 is None else acc1 + t
    acc1 = acc1 + b1_ref[...]                                   # [24B, 240]

    # ---- maxpool 2x2 + relu ----------------------------------------------
    t = acc1.reshape(12, 2 * B, 240)
    rp = jnp.maximum(t[:, :B, :], t[:, B:, :])                  # pool over oy
    h1 = jnp.maximum(jnp.maximum(rp[:, :, :230], rp[:, :, 10:]), 0.0)
    # h1: [12, B, 230]; valid cols c with (c % 20) < 10 -> (px=c//20, ci=c%20)

    # ---- conv2 (10->20, k=5) as 5 banded GEMMs over dy --------------------
    acc2 = None
    for dy in range(5):
        hs = h1[dy:dy + 8].reshape(8 * B, 230)                  # rows (oy2, b)
        t2 = jnp.dot(hs, g2_ref[dy], preferred_element_type=jnp.float32)
        acc2 = t2 if acc2 is None else acc2 + t2
    acc2 = acc2 + b2_ref[...]                                   # [8B, 160]

    # ---- maxpool 2x2 + relu ----------------------------------------------
    t = acc2.reshape(4, 2 * B, 160)
    rp2 = jnp.maximum(t[:, :B, :], t[:, B:, :])
    h2 = jnp.maximum(jnp.maximum(rp2[:, :, :140], rp2[:, :, 20:]), 0.0)
    # h2: [4, B, 140]; valid cols c with (c % 40) < 20 -> (px2=c//40, co=c%40)

    # ---- fc1 (320->50): torch's view(-1,320) order folded into wg1 --------
    acc3 = None
    for py in range(4):
        t3 = jnp.dot(h2[py], wg1_ref[py], preferred_element_type=jnp.float32)
        acc3 = t3 if acc3 is None else acc3 + t3
    h = jnp.maximum(acc3 + bf1_ref[...], 0.0)                   # [B, 50]

    # ---- fc2 (50->10) + log_softmax ---------------------------------------
    logits = jnp.dot(h, w2_ref[...], preferred_element_type=jnp.float32) + bf2_ref[...]
    m = jnp.max(logits, axis=-1, keepdims=True)
    sh = logits - m
    lse = jnp.log(jnp.sum(jnp.exp(sh), axis=-1, keepdims=True))
    o_ref[...] = sh - lse


# -----------------------------------------------------------------------------
# One-time parameter re-layout (host side, numpy): banded conv weights etc.
# -----------------------------------------------------------------------------
def prepare_params(params):
    w1 = np.asarray(params["w_conv1"], np.float32)   # [10, 1, 5, 5]
    b1 = np.asarray(params["b_conv1"], np.float32)   # [10]
    w2 = np.asarray(params["w_conv2"], np.float32)   # [20, 10, 5, 5]
    b2 = np.asarray(params["b_conv2"], np.float32)   # [20]
    wf1 = np.asarray(params["w_fc1"], np.float32)    # [50, 320]
    bf1 = np.asarray(params["b_fc1"], np.float32)    # [50]
    wf2 = np.asarray(params["w_fc2"], np.float32)    # [10, 50]
    bf2 = np.asarray(params["b_fc2"], np.float32)    # [10]

    # conv1 banded weights: g1[dy, ix, ox*10+co] = w1[co, 0, dy, ix-ox]
    g1 = np.zeros((5, 28, 240), np.float32)
    for dy in range(5):
        for ox in range(24):
            for dx in range(5):
                g1[dy, ox + dx, 10 * ox:10 * ox + 10] = w1[:, 0, dy, dx]
    b1row = np.tile(b1, 24).reshape(1, 240)

    # conv2 banded weights: g2[dy, 20*ix+ci, 20*ox+co] = w2[co, ci, dy, ix-ox]
    # (rows with (row % 20) >= 10 stay zero -> kill the junk pool1 columns)
    g2 = np.zeros((5, 230, 160), np.float32)
    for dy in range(5):
        for ox in range(8):
            for dx in range(5):
                ix = ox + dx
                g2[dy, 20 * ix:20 * ix + 10, 20 * ox:20 * ox + 20] = w2[:, :, dy, dx].T
    b2row = np.tile(b2, 8).reshape(1, 160)

    # fc1 regrouped so the kernel contracts in torch's flatten order:
    #   wg1[py, 40*px+co, n] = W_fc1[n, co*16 + py*4 + px]
    wg1 = np.zeros((4, 140, 50), np.float32)
    for py in range(4):
        for px in range(4):
            idx = np.arange(20) * 16 + py * 4 + px               # flat indices for ci=0..19
            wg1[py, 40 * px:40 * px + 20, :] = wf1[:, idx].T

    return {
        "g1": jnp.asarray(g1), "b1": jnp.asarray(b1row),
        "g2": jnp.asarray(g2), "b2": jnp.asarray(b2row),
        "wg1": jnp.asarray(wg1), "bf1": jnp.asarray(bf1.reshape(1, 50)),
        "w2": jnp.asarray(wf2.T), "bf2": jnp.asarray(bf2.reshape(1, 10)),
    }


# -----------------------------------------------------------------------------
# Wrapper: one pallas_call for the whole network, batch-blocked grid.
# -----------------------------------------------------------------------------
def net_forward(x_nchw, prep, *, block_b=128):
    B = x_nchw.shape[0]
    assert x_nchw.shape[1:] == (1, 28, 28), x_nchw.shape

    bblk = block_b if B >= block_b else ((B + 7) // 8) * 8
    bblk = max(bblk, 8)
    n_blocks = (B + bblk - 1) // bblk
    B_pad = n_blocks * bblk

    x = x_nchw.reshape(B, 28, 28)
    if B_pad != B:
        x = jnp.pad(x, ((0, B_pad - B), (0, 0), (0, 0)))
    x3 = x.transpose(1, 0, 2)                                   # [28, B_pad, 28]

    flops = int(B_pad) * (5 * 24 * 28 * 240 * 2 + 5 * 8 * 230 * 160 * 2
                          + 4 * 140 * 50 * 2 + 50 * 10 * 2)
    bytes_accessed = int(B_pad) * (784 + 10) * 4 + \
        (5 * 28 * 240 + 240 + 5 * 230 * 160 + 160 + 4 * 140 * 50 + 50 + 500 + 10) * 4

    out = pl.pallas_call(
        _net_kernel,
        out_shape=jax.ShapeDtypeStruct((B_pad, 10), jnp.float32),
        grid=(n_blocks,),
        in_specs=[
            pl.BlockSpec((28, bblk, 28), lambda i: (0, i, 0)),   # images (iy, b, ix)
            pl.BlockSpec((5, 28, 240), lambda i: (0, 0, 0)),     # conv1 banded weights
            pl.BlockSpec((1, 240), lambda i: (0, 0)),
            pl.BlockSpec((5, 230, 160), lambda i: (0, 0, 0)),    # conv2 banded weights
            pl.BlockSpec((1, 160), lambda i: (0, 0)),
            pl.BlockSpec((4, 140, 50), lambda i: (0, 0, 0)),     # fc1 (regrouped)
            pl.BlockSpec((1, 50), lambda i: (0, 0)),
            pl.BlockSpec((50, 10), lambda i: (0, 0)),            # fc2
            pl.BlockSpec((1, 10), lambda i: (0, 0)),
        ],
        out_specs=pl.BlockSpec((bblk, 10), lambda i: (i, 0)),
        compiler_params=pltpu.CompilerParams(
            dimension_semantics=("parallel",),                   # feeds both v7x TCs for >=2 blocks
            vmem_limit_bytes=48 * 1024 * 1024),
        cost_estimate=pl.CostEstimate(flops=flops, transcendentals=int(B_pad) * 11,
                                      bytes_accessed=bytes_accessed),
    )(x3, prep["g1"], prep["b1"], prep["g2"], prep["b2"],
      prep["wg1"], prep["bf1"], prep["w2"], prep["bf2"])
    return out[:B]


# -----------------------------------------------------------------------------
# Pure-JAX reference (eval mode) for correctness checking.
# -----------------------------------------------------------------------------
def net_reference(x, p):
    B = x.shape[0]
    dn = ("NCHW", "OIHW", "NCHW")
    y = lax.conv_general_dilated(x, p["w_conv1"], (1, 1), "VALID",
                                 dimension_numbers=dn) + p["b_conv1"].reshape(1, 10, 1, 1)
    y = jax.nn.relu(lax.reduce_window(y, -jnp.inf, lax.max,
                                      (1, 1, 2, 2), (1, 1, 2, 2), "VALID"))
    y = lax.conv_general_dilated(y, p["w_conv2"], (1, 1), "VALID",
                                 dimension_numbers=dn) + p["b_conv2"].reshape(1, 20, 1, 1)
    y = jax.nn.relu(lax.reduce_window(y, -jnp.inf, lax.max,
                                      (1, 1, 2, 2), (1, 1, 2, 2), "VALID"))
    flat = y.reshape(B, 320)
    h = jax.nn.relu(flat @ p["w_fc1"].T + p["b_fc1"])
    logits = h @ p["w_fc2"].T + p["b_fc2"]
    return jax.nn.log_softmax(logits, axis=-1)


# -----------------------------------------------------------------------------
# Deterministic parameter init (PyTorch-style uniform bounds, synthetic values).
# -----------------------------------------------------------------------------
def init_params(key):
    def u(k, shape, fan_in):
        bound = 1.0 / jnp.sqrt(float(fan_in))
        return jax.random.uniform(k, shape, jnp.float32, -bound, bound)

    keys = jax.random.split(key, 8)
    return {
        "w_conv1": u(keys[0], (10, 1, 5, 5), 1 * 25),
        "b_conv1": u(keys[1], (10,), 1 * 25),
        "w_conv2": u(keys[2], (20, 10, 5, 5), 10 * 25),
        "b_conv2": u(keys[3], (20,), 10 * 25),
        "w_fc1": u(keys[4], (50, 320), 320),
        "b_fc1": u(keys[5], (50,), 320),
        "w_fc2": u(keys[6], (10, 50), 50),
        "b_fc2": u(keys[7], (10,), 50),
    }


if __name__ == "__main__":
    key = jax.random.PRNGKey(0)
    k_x, k_p = jax.random.split(key)
    x = jax.random.normal(k_x, (2, 1, 28, 28), jnp.float32)     # NCHW, MNIST-shaped
    params = init_params(k_p)
    prep = prepare_params(params)

    fwd = jax.jit(net_forward)
    out = jax.block_until_ready(fwd(x, prep))
    assert out.shape == (2, 10), out.shape

    # log_softmax sanity: exp(row) sums to 1
    row_sums = jnp.exp(out).sum(axis=-1)
    assert bool(jnp.all(jnp.abs(row_sums - 1.0) < 1e-4)), row_sums

    # numerical check against the pure-JAX reference
    ref = jax.block_until_ready(jax.jit(net_reference)(x, params))
    assert bool(jnp.allclose(out, ref, atol=2e-4, rtol=2e-4)), (out, ref)

    print("KERNEL_OK")
</pallas_src>

<mosaic_0001>
module attributes {stable_mosaic.version = 11 : i64} {
  func.func @_net_kernel(%arg0: i32, %arg1: memref<28x8x28xf32, #tpu.memory_space<vmem>>, %arg2: memref<5x28x240xf32, #tpu.memory_space<vmem>>, %arg3: memref<1x240xf32, #tpu.memory_space<vmem>>, %arg4: memref<5x230x160xf32, #tpu.memory_space<vmem>>, %arg5: memref<1x160xf32, #tpu.memory_space<vmem>>, %arg6: memref<4x140x50xf32, #tpu.memory_space<vmem>>, %arg7: memref<1x50xf32, #tpu.memory_space<vmem>>, %arg8: memref<50x10xf32, #tpu.memory_space<vmem>>, %arg9: memref<1x10xf32, #tpu.memory_space<vmem>>, %arg10: memref<8x10xf32, #tpu.memory_space<vmem>>) attributes {dimension_semantics = [#tpu.dimension_semantics<parallel>], iteration_bounds = array<i64: 1>, scalar_prefetch = 0 : i64, scratch_operands = 0 : i64, tpu.core_type = #tpu.core_type<tc>, window_params = [{transform_indices = @transform_0, window_bounds = array<i64: 28, 8, 28>}, {pipeline_mode = #tpu.pipeline_mode<synchronous>, transform_indices = @transform_1, window_bounds = array<i64: 5, 28, 240>}, {pipeline_mode = #tpu.pipeline_mode<synchronous>, transform_indices = @transform_2, window_bounds = array<i64: 1, 240>}, {pipeline_mode = #tpu.pipeline_mode<synchronous>, transform_indices = @transform_3, window_bounds = array<i64: 5, 230, 160>}, {pipeline_mode = #tpu.pipeline_mode<synchronous>, transform_indices = @transform_4, window_bounds = array<i64: 1, 160>}, {pipeline_mode = #tpu.pipeline_mode<synchronous>, transform_indices = @transform_5, window_bounds = array<i64: 4, 140, 50>}, {pipeline_mode = #tpu.pipeline_mode<synchronous>, transform_indices = @transform_6, window_bounds = array<i64: 1, 50>}, {pipeline_mode = #tpu.pipeline_mode<synchronous>, transform_indices = @transform_7, window_bounds = array<i64: 50, 10>}, {pipeline_mode = #tpu.pipeline_mode<synchronous>, transform_indices = @transform_8, window_bounds = array<i64: 1, 10>}, {transform_indices = @transform_9, window_bounds = array<i64: 8, 10>}]} {
    %c0 = arith.constant 0 : index
    %c0_0 = arith.constant 0 : index
    %c0_1 = arith.constant 0 : index
    %0 = vector.load %arg1[%c0, %c0_0, %c0_1] : memref<28x8x28xf32, #tpu.memory_space<vmem>>, vector<24x8x28xf32>
    %1 = vector.shape_cast %0 : vector<24x8x28xf32> to vector<192x28xf32>
    %c0_2 = arith.constant 0 : index
    %c0_3 = arith.constant 0 : index
    %c0_4 = arith.constant 0 : index
    %2 = vector.load %arg2[%c0_2, %c0_3, %c0_4] : memref<5x28x240xf32, #tpu.memory_space<vmem>>, vector<1x28x240xf32>
    %3 = vector.shape_cast %2 : vector<1x28x240xf32> to vector<28x240xf32>
    %cst = arith.constant dense<0.000000e+00> : vector<192x240xf32>
    %4 = tpu.matmul %1, %3, %cst {dimension_numbers = #tpu.dot_dimension_numbers<[1], [0], [0], [1], [0, 0, 1, 1], [], []>} : vector<192x28xf32>, vector<28x240xf32>, vector<192x240xf32> -> vector<192x240xf32>
    %c1 = arith.constant 1 : index
    %c0_5 = arith.constant 0 : index
    %c0_6 = arith.constant 0 : index
    %5 = vector.load %arg1[%c1, %c0_5, %c0_6] : memref<28x8x28xf32, #tpu.memory_space<vmem>>, vector<24x8x28xf32>
    %6 = vector.shape_cast %5 : vector<24x8x28xf32> to vector<192x28xf32>
    %c1_7 = arith.constant 1 : index
    %c0_8 = arith.constant 0 : index
    %c0_9 = arith.constant 0 : index
    %7 = vector.load %arg2[%c1_7, %c0_8, %c0_9] : memref<5x28x240xf32, #tpu.memory_space<vmem>>, vector<1x28x240xf32>
    %8 = vector.shape_cast %7 : vector<1x28x240xf32> to vector<28x240xf32>
    %cst_10 = arith.constant dense<0.000000e+00> : vector<192x240xf32>
    %9 = tpu.matmul %6, %8, %cst_10 {dimension_numbers = #tpu.dot_dimension_numbers<[1], [0], [0], [1], [0, 0, 1, 1], [], []>} : vector<192x28xf32>, vector<28x240xf32>, vector<192x240xf32> -> vector<192x240xf32>
    %10 = arith.addf %4, %9 : vector<192x240xf32>
    %c2 = arith.constant 2 : index
    %c0_11 = arith.constant 0 : index
    %c0_12 = arith.constant 0 : index
    %11 = vector.load %arg1[%c2, %c0_11, %c0_12] : memref<28x8x28xf32, #tpu.memory_space<vmem>>, vector<24x8x28xf32>
    %12 = vector.shape_cast %11 : vector<24x8x28xf32> to vector<192x28xf32>
    %c2_13 = arith.constant 2 : index
    %c0_14 = arith.constant 0 : index
    %c0_15 = arith.constant 0 : index
    %13 = vector.load %arg2[%c2_13, %c0_14, %c0_15] : memref<5x28x240xf32, #tpu.memory_space<vmem>>, vector<1x28x240xf32>
    %14 = vector.shape_cast %13 : vector<1x28x240xf32> to vector<28x240xf32>
    %cst_16 = arith.constant dense<0.000000e+00> : vector<192x240xf32>
    %15 = tpu.matmul %12, %14, %cst_16 {dimension_numbers = #tpu.dot_dimension_numbers<[1], [0], [0], [1], [0, 0, 1, 1], [], []>} : vector<192x28xf32>, vector<28x240xf32>, vector<192x240xf32> -> vector<192x240xf32>
    %16 = arith.addf %10, %15 : vector<192x240xf32>
    %c3 = arith.constant 3 : index
    %c0_17 = arith.constant 0 : index
    %c0_18 = arith.constant 0 : index
    %17 = vector.load %arg1[%c3, %c0_17, %c0_18] : memref<28x8x28xf32, #tpu.memory_space<vmem>>, vector<24x8x28xf32>
    %18 = vector.shape_cast %17 : vector<24x8x28xf32> to vector<192x28xf32>
    %c3_19 = arith.constant 3 : index
    %c0_20 = arith.constant 0 : index
    %c0_21 = arith.constant 0 : index
    %19 = vector.load %arg2[%c3_19, %c0_20, %c0_21] : memref<5x28x240xf32, #tpu.memory_space<vmem>>, vector<1x28x240xf32>
    %20 = vector.shape_cast %19 : vector<1x28x240xf32> to vector<28x240xf32>
    %cst_22 = arith.constant dense<0.000000e+00> : vector<192x240xf32>
    %21 = tpu.matmul %18, %20, %cst_22 {dimension_numbers = #tpu.dot_dimension_numbers<[1], [0], [0], [1], [0, 0, 1, 1], [], []>} : vector<192x28xf32>, vector<28x240xf32>, vector<192x240xf32> -> vector<192x240xf32>
    %22 = arith.addf %16, %21 : vector<192x240xf32>
    %c4 = arith.constant 4 : index
    %c0_23 = arith.constant 0 : index
    %c0_24 = arith.constant 0 : index
    %23 = vector.load %arg1[%c4, %c0_23, %c0_24] : memref<28x8x28xf32, #tpu.memory_space<vmem>>, vector<24x8x28xf32>
    %24 = vector.shape_cast %23 : vector<24x8x28xf32> to vector<192x28xf32>
    %c4_25 = arith.constant 4 : index
    %c0_26 = arith.constant 0 : index
    %c0_27 = arith.constant 0 : index
    %25 = vector.load %arg2[%c4_25, %c0_26, %c0_27] : memref<5x28x240xf32, #tpu.memory_space<vmem>>, vector<1x28x240xf32>
    %26 = vector.shape_cast %25 : vector<1x28x240xf32> to vector<28x240xf32>
    %cst_28 = arith.constant dense<0.000000e+00> : vector<192x240xf32>
    %27 = tpu.matmul %24, %26, %cst_28 {dimension_numbers = #tpu.dot_dimension_numbers<[1], [0], [0], [1], [0, 0, 1, 1], [], []>} : vector<192x28xf32>, vector<28x240xf32>, vector<192x240xf32> -> vector<192x240xf32>
    %28 = arith.addf %22, %27 : vector<192x240xf32>
    %c0_29 = arith.constant 0 : index
    %c0_30 = arith.constant 0 : index
    %29 = vector.load %arg3[%c0_29, %c0_30] : memref<1x240xf32, #tpu.memory_space<vmem>>, vector<1x240xf32>
    %30 = vector.broadcast %29 : vector<1x240xf32> to vector<192x240xf32>
    %31 = arith.addf %28, %30 : vector<192x240xf32>
    %32 = vector.shape_cast %31 : vector<192x240xf32> to vector<12x16x240xf32>
    %33 = vector.extract_strided_slice %32 {offsets = [0, 0, 0], sizes = [12, 8, 240], strides = [1, 1, 1]} : vector<12x16x240xf32> to vector<12x8x240xf32>
    %34 = vector.extract_strided_slice %32 {offsets = [0, 8, 0], sizes = [12, 8, 240], strides = [1, 1, 1]} : vector<12x16x240xf32> to vector<12x8x240xf32>
    %35 = arith.maximumf %33, %34 : vector<12x8x240xf32>
    %36 = vector.extract_strided_slice %35 {offsets = [0, 0, 0], sizes = [12, 8, 230], strides = [1, 1, 1]} : vector<12x8x240xf32> to vector<12x8x230xf32>
    %37 = vector.extract_strided_slice %35 {offsets = [0, 0, 10], sizes = [12, 8, 230], strides = [1, 1, 1]} : vector<12x8x240xf32> to vector<12x8x230xf32>
    %38 = arith.maximumf %36, %37 : vector<12x8x230xf32>
    %cst_31 = arith.constant 0.000000e+00 : f32
    %39 = vector.broadcast %cst_31 : f32 to vector<12x8x230xf32>
    %40 = arith.maximumf %38, %39 : vector<12x8x230xf32>
    %41 = vector.extract_strided_slice %40 {offsets = [0, 0, 0], sizes = [8, 8, 230], strides = [1, 1, 1]} : vector<12x8x230xf32> to vector<8x8x230xf32>
    %42 = vector.shape_cast %41 : vector<8x8x230xf32> to vector<64x230xf32>
    %c0_32 = arith.constant 0 : index
    %c0_33 = arith.constant 0 : index
    %c0_34 = arith.constant 0 : index
    %43 = vector.load %arg4[%c0_32, %c0_33, %c0_34] : memref<5x230x160xf32, #tpu.memory_space<vmem>>, vector<1x230x160xf32>
    %44 = vector.shape_cast %43 : vector<1x230x160xf32> to vector<230x160xf32>
    %cst_35 = arith.constant dense<0.000000e+00> : vector<64x160xf32>
    %45 = tpu.matmul %42, %44, %cst_35 {dimension_numbers = #tpu.dot_dimension_numbers<[1], [0], [0], [1], [0, 0, 1, 1], [], []>} : vector<64x230xf32>, vector<230x160xf32>, vector<64x160xf32> -> vector<64x160xf32>
    %46 = vector.extract_strided_slice %40 {offsets = [1, 0, 0], sizes = [8, 8, 230], strides = [1, 1, 1]} : vector<12x8x230xf32> to vector<8x8x230xf32>
    %47 = vector.shape_cast %46 : vector<8x8x230xf32> to vector<64x230xf32>
    %c1_36 = arith.constant 1 : index
    %c0_37 = arith.constant 0 : index
    %c0_38 = arith.constant 0 : index
    %48 = vector.load %arg4[%c1_36, %c0_37, %c0_38] : memref<5x230x160xf32, #tpu.memory_space<vmem>>, vector<1x230x160xf32>
    %49 = vector.shape_cast %48 : vector<1x230x160xf32> to vector<230x160xf32>
    %cst_39 = arith.constant dense<0.000000e+00> : vector<64x160xf32>
    %50 = tpu.matmul %47, %49, %cst_39 {dimension_numbers = #tpu.dot_dimension_numbers<[1], [0], [0], [1], [0, 0, 1, 1], [], []>} : vector<64x230xf32>, vector<230x160xf32>, vector<64x160xf32> -> vector<64x160xf32>
    %51 = arith.addf %45, %50 : vector<64x160xf32>
    %52 = vector.extract_strided_slice %40 {offsets = [2, 0, 0], sizes = [8, 8, 230], strides = [1, 1, 1]} : vector<12x8x230xf32> to vector<8x8x230xf32>
    %53 = vector.shape_cast %52 : vector<8x8x230xf32> to vector<64x230xf32>
    %c2_40 = arith.constant 2 : index
    %c0_41 = arith.constant 0 : index
    %c0_42 = arith.constant 0 : index
    %54 = vector.load %arg4[%c2_40, %c0_41, %c0_42] : memref<5x230x160xf32, #tpu.memory_space<vmem>>, vector<1x230x160xf32>
    %55 = vector.shape_cast %54 : vector<1x230x160xf32> to vector<230x160xf32>
    %cst_43 = arith.constant dense<0.000000e+00> : vector<64x160xf32>
    %56 = tpu.matmul %53, %55, %cst_43 {dimension_numbers = #tpu.dot_dimension_numbers<[1], [0], [0], [1], [0, 0, 1, 1], [], []>} : vector<64x230xf32>, vector<230x160xf32>, vector<64x160xf32> -> vector<64x160xf32>
    %57 = arith.addf %51, %56 : vector<64x160xf32>
    %58 = vector.extract_strided_slice %40 {offsets = [3, 0, 0], sizes = [8, 8, 230], strides = [1, 1, 1]} : vector<12x8x230xf32> to vector<8x8x230xf32>
    %59 = vector.shape_cast %58 : vector<8x8x230xf32> to vector<64x230xf32>
    %c3_44 = arith.constant 3 : index
    %c0_45 = arith.constant 0 : index
    %c0_46 = arith.constant 0 : index
    %60 = vector.load %arg4[%c3_44, %c0_45, %c0_46] : memref<5x230x160xf32, #tpu.memory_space<vmem>>, vector<1x230x160xf32>
    %61 = vector.shape_cast %60 : vector<1x230x160xf32> to vector<230x160xf32>
    %cst_47 = arith.constant dense<0.000000e+00> : vector<64x160xf32>
    %62 = tpu.matmul %59, %61, %cst_47 {dimension_numbers = #tpu.dot_dimension_numbers<[1], [0], [0], [1], [0, 0, 1, 1], [], []>} : vector<64x230xf32>, vector<230x160xf32>, vector<64x160xf32> -> vector<64x160xf32>
    %63 = arith.addf %57, %62 : vector<64x160xf32>
    %64 = vector.extract_strided_slice %40 {offsets = [4, 0, 0], sizes = [8, 8, 230], strides = [1, 1, 1]} : vector<12x8x230xf32> to vector<8x8x230xf32>
    %65 = vector.shape_cast %64 : vector<8x8x230xf32> to vector<64x230xf32>
    %c4_48 = arith.constant 4 : index
    %c0_49 = arith.constant 0 : index
    %c0_50 = arith.constant 0 : index
    %66 = vector.load %arg4[%c4_48, %c0_49, %c0_50] : memref<5x230x160xf32, #tpu.memory_space<vmem>>, vector<1x230x160xf32>
    %67 = vector.shape_cast %66 : vector<1x230x160xf32> to vector<230x160xf32>
    %cst_51 = arith.constant dense<0.000000e+00> : vector<64x160xf32>
    %68 = tpu.matmul %65, %67, %cst_51 {dimension_numbers = #tpu.dot_dimension_numbers<[1], [0], [0], [1], [0, 0, 1, 1], [], []>} : vector<64x230xf32>, vector<230x160xf32>, vector<64x160xf32> -> vector<64x160xf32>
    %69 = arith.addf %63, %68 : vector<64x160xf32>
    %c0_52 = arith.constant 0 : index
    %c0_53 = arith.constant 0 : index
    %70 = vector.load %arg5[%c0_52, %c0_53] : memref<1x160xf32, #tpu.memory_space<vmem>>, vector<1x160xf32>
    %71 = vector.broadcast %70 : vector<1x160xf32> to vector<64x160xf32>
    %72 = arith.addf %69, %71 : vector<64x160xf32>
    %73 = vector.shape_cast %72 : vector<64x160xf32> to vector<4x16x160xf32>
    %74 = vector.extract_strided_slice %73 {offsets = [0, 0, 0], sizes = [4, 8, 160], strides = [1, 1, 1]} : vector<4x16x160xf32> to vector<4x8x160xf32>
    %75 = vector.extract_strided_slice %73 {offsets = [0, 8, 0], sizes = [4, 8, 160], strides = [1, 1, 1]} : vector<4x16x160xf32> to vector<4x8x160xf32>
    %76 = arith.maximumf %74, %75 : vector<4x8x160xf32>
    %77 = vector.extract_strided_slice %76 {offsets = [0, 0, 0], sizes = [4, 8, 140], strides = [1, 1, 1]} : vector<4x8x160xf32> to vector<4x8x140xf32>
    %78 = vector.extract_strided_slice %76 {offsets = [0, 0, 20], sizes = [4, 8, 140], strides = [1, 1, 1]} : vector<4x8x160xf32> to vector<4x8x140xf32>
    %79 = arith.maximumf %77, %78 : vector<4x8x140xf32>
    %cst_54 = arith.constant 0.000000e+00 : f32
    %80 = vector.broadcast %cst_54 : f32 to vector<4x8x140xf32>
    %81 = arith.maximumf %79, %80 : vector<4x8x140xf32>
    %82 = vector.extract_strided_slice %81 {offsets = [0, 0, 0], sizes = [1, 8, 140], strides = [1, 1, 1]} : vector<4x8x140xf32> to vector<1x8x140xf32>
    %83 = vector.shape_cast %82 : vector<1x8x140xf32> to vector<8x140xf32>
    %c0_55 = arith.constant 0 : index
    %c0_56 = arith.constant 0 : index
    %c0_57 = arith.constant 0 : index
    %84 = vector.load %arg6[%c0_55, %c0_56, %c0_57] : memref<4x140x50xf32, #tpu.memory_space<vmem>>, vector<1x140x50xf32>
    %85 = vector.shape_cast %84 : vector<1x140x50xf32> to vector<140x50xf32>
    %cst_58 = arith.constant dense<0.000000e+00> : vector<8x50xf32>
    %86 = tpu.matmul %83, %85, %cst_58 {dimension_numbers = #tpu.dot_dimension_numbers<[1], [0], [0], [1], [0, 0, 1, 1], [], []>} : vector<8x140xf32>, vector<140x50xf32>, vector<8x50xf32> -> vector<8x50xf32>
    %87 = vector.extract_strided_slice %81 {offsets = [1, 0, 0], sizes = [1, 8, 140], strides = [1, 1, 1]} : vector<4x8x140xf32> to vector<1x8x140xf32>
    %88 = vector.shape_cast %87 : vector<1x8x140xf32> to vector<8x140xf32>
    %c1_59 = arith.constant 1 : index
    %c0_60 = arith.constant 0 : index
    %c0_61 = arith.constant 0 : index
    %89 = vector.load %arg6[%c1_59, %c0_60, %c0_61] : memref<4x140x50xf32, #tpu.memory_space<vmem>>, vector<1x140x50xf32>
    %90 = vector.shape_cast %89 : vector<1x140x50xf32> to vector<140x50xf32>
    %cst_62 = arith.constant dense<0.000000e+00> : vector<8x50xf32>
    %91 = tpu.matmul %88, %90, %cst_62 {dimension_numbers = #tpu.dot_dimension_numbers<[1], [0], [0], [1], [0, 0, 1, 1], [], []>} : vector<8x140xf32>, vector<140x50xf32>, vector<8x50xf32> -> vector<8x50xf32>
    %92 = arith.addf %86, %91 : vector<8x50xf32>
    %93 = vector.extract_strided_slice %81 {offsets = [2, 0, 0], sizes = [1, 8, 140], strides = [1, 1, 1]} : vector<4x8x140xf32> to vector<1x8x140xf32>
    %94 = vector.shape_cast %93 : vector<1x8x140xf32> to vector<8x140xf32>
    %c2_63 = arith.constant 2 : index
    %c0_64 = arith.constant 0 : index
    %c0_65 = arith.constant 0 : index
    %95 = vector.load %arg6[%c2_63, %c0_64, %c0_65] : memref<4x140x50xf32, #tpu.memory_space<vmem>>, vector<1x140x50xf32>
    %96 = vector.shape_cast %95 : vector<1x140x50xf32> to vector<140x50xf32>
    %cst_66 = arith.constant dense<0.000000e+00> : vector<8x50xf32>
    %97 = tpu.matmul %94, %96, %cst_66 {dimension_numbers = #tpu.dot_dimension_numbers<[1], [0], [0], [1], [0, 0, 1, 1], [], []>} : vector<8x140xf32>, vector<140x50xf32>, vector<8x50xf32> -> vector<8x50xf32>
    %98 = arith.addf %92, %97 : vector<8x50xf32>
    %99 = vector.extract_strided_slice %81 {offsets = [3, 0, 0], sizes = [1, 8, 140], strides = [1, 1, 1]} : vector<4x8x140xf32> to vector<1x8x140xf32>
    %100 = vector.shape_cast %99 : vector<1x8x140xf32> to vector<8x140xf32>
    %c3_67 = arith.constant 3 : index
    %c0_68 = arith.constant 0 : index
    %c0_69 = arith.constant 0 : index
    %101 = vector.load %arg6[%c3_67, %c0_68, %c0_69] : memref<4x140x50xf32, #tpu.memory_space<vmem>>, vector<1x140x50xf32>
    %102 = vector.shape_cast %101 : vector<1x140x50xf32> to vector<140x50xf32>
    %cst_70 = arith.constant dense<0.000000e+00> : vector<8x50xf32>
    %103 = tpu.matmul %100, %102, %cst_70 {dimension_numbers = #tpu.dot_dimension_numbers<[1], [0], [0], [1], [0, 0, 1, 1], [], []>} : vector<8x140xf32>, vector<140x50xf32>, vector<8x50xf32> -> vector<8x50xf32>
    %104 = arith.addf %98, %103 : vector<8x50xf32>
    %c0_71 = arith.constant 0 : index
    %c0_72 = arith.constant 0 : index
    %105 = vector.load %arg7[%c0_71, %c0_72] : memref<1x50xf32, #tpu.memory_space<vmem>>, vector<1x50xf32>
    %106 = vector.broadcast %105 : vector<1x50xf32> to vector<8x50xf32>
    %107 = arith.addf %104, %106 : vector<8x50xf32>
    %cst_73 = arith.constant 0.000000e+00 : f32
    %108 = vector.broadcast %cst_73 : f32 to vector<8x50xf32>
    %109 = arith.maximumf %107, %108 : vector<8x50xf32>
    %c0_74 = arith.constant 0 : index
    %c0_75 = arith.constant 0 : index
    %110 = vector.load %arg8[%c0_74, %c0_75] : memref<50x10xf32, #tpu.memory_space<vmem>>, vector<50x10xf32>
    %cst_76 = arith.constant dense<0.000000e+00> : vector<8x10xf32>
    %111 = tpu.matmul %109, %110, %cst_76 {dimension_numbers = #tpu.dot_dimension_numbers<[1], [0], [0], [1], [0, 0, 1, 1], [], []>} : vector<8x50xf32>, vector<50x10xf32>, vector<8x10xf32> -> vector<8x10xf32>
    %c0_77 = arith.constant 0 : index
    %c0_78 = arith.constant 0 : index
    %112 = vector.load %arg9[%c0_77, %c0_78] : memref<1x10xf32, #tpu.memory_space<vmem>>, vector<1x10xf32>
    %113 = vector.broadcast %112 : vector<1x10xf32> to vector<8x10xf32>
    %114 = arith.addf %111, %113 : vector<8x10xf32>
    %cst_79 = arith.constant dense<0xFF800000> : vector<8xf32>
    %115 = vector.multi_reduction <maximumf>, %114, %cst_79 [1] : vector<8x10xf32> to vector<8xf32>
    %116 = vector.shape_cast %115 : vector<8xf32> to vector<8x1xf32>
    %117 = vector.broadcast %116 : vector<8x1xf32> to vector<8x10xf32>
    %118 = arith.subf %114, %117 : vector<8x10xf32>
    %119 = math.exp %118 : vector<8x10xf32>
    %cst_80 = arith.constant dense<0.000000e+00> : vector<8xf32>
    %120 = vector.multi_reduction <add>, %119, %cst_80 [1] : vector<8x10xf32> to vector<8xf32>
    %121 = vector.shape_cast %120 : vector<8xf32> to vector<8x1xf32>
    %122 = math.log %121 : vector<8x1xf32>
    %123 = vector.broadcast %122 : vector<8x1xf32> to vector<8x10xf32>
    %124 = arith.subf %118, %123 : vector<8x10xf32>
    %c0_81 = arith.constant 0 : index
    %c0_82 = arith.constant 0 : index
    %125 = vector.load %arg10[%c0_81, %c0_82] : memref<8x10xf32, #tpu.memory_space<vmem>>, vector<8x10xf32>
    tpu.vector_store %arg10[%c0_81, %c0_82], %124 {strides = array<i32>} : memref<8x10xf32, #tpu.memory_space<vmem>>, vector<8x10xf32>,
    return
  }
  func.func @transform_0(%arg0: i32) -> (i32, i32, i32) {
    %c0_i32 = arith.constant 0 : i32
    %c0_i32_0 = arith.constant 0 : i32
    %c0_i32_1 = arith.constant 0 : i32
    return %c0_i32, %arg0, %c0_i32_0 : i32, i32, i32
  }
  func.func @transform_1(%arg0: i32) -> (i32, i32, i32) {
    %c0_i32 = arith.constant 0 : i32
    %c0_i32_0 = arith.constant 0 : i32
    %c0_i32_1 = arith.constant 0 : i32
    %c0_i32_2 = arith.constant 0 : i32
    return %c0_i32, %c0_i32_0, %c0_i32_1 : i32, i32, i32
  }
  func.func @transform_2(%arg0: i32) -> (i32, i32) {
    %c0_i32 = arith.constant 0 : i32
    %c0_i32_0 = arith.constant 0 : i32
    %c0_i32_1 = arith.constant 0 : i32
    return %c0_i32, %c0_i32_0 : i32, i32
  }
  func.func @transform_3(%arg0: i32) -> (i32, i32, i32) {
    %c0_i32 = arith.constant 0 : i32
    %c0_i32_0 = arith.constant 0 : i32
    %c0_i32_1 = arith.constant 0 : i32
    %c0_i32_2 = arith.constant 0 : i32
    return %c0_i32, %c0_i32_0, %c0_i32_1 : i32, i32, i32
  }
  func.func @transform_4(%arg0: i32) -> (i32, i32) {
    %c0_i32 = arith.constant 0 : i32
    %c0_i32_0 = arith.constant 0 : i32
    %c0_i32_1 = arith.constant 0 : i32
    return %c0_i32, %c0_i32_0 : i32, i32
  }
  func.func @transform_5(%arg0: i32) -> (i32, i32, i32) {
    %c0_i32 = arith.constant 0 : i32
    %c0_i32_0 = arith.constant 0 : i32
    %c0_i32_1 = arith.constant 0 : i32
    %c0_i32_2 = arith.constant 0 : i32
    return %c0_i32, %c0_i32_0, %c0_i32_1 : i32, i32, i32
  }
  func.func @transform_6(%arg0: i32) -> (i32, i32) {
    %c0_i32 = arith.constant 0 : i32
    %c0_i32_0 = arith.constant 0 : i32
    %c0_i32_1 = arith.constant 0 : i32
    return %c0_i32, %c0_i32_0 : i32, i32
  }
  func.func @transform_7(%arg0: i32) -> (i32, i32) {
    %c0_i32 = arith.constant 0 : i32
    %c0_i32_0 = arith.constant 0 : i32
    %c0_i32_1 = arith.constant 0 : i32
    return %c0_i32, %c0_i32_0 : i32, i32
  }
  func.func @transform_8(%arg0: i32) -> (i32, i32) {
    %c0_i32 = arith.constant 0 : i32
    %c0_i32_0 = arith.constant 0 : i32
    %c0_i32_1 = arith.constant 0 : i32
    return %c0_i32, %c0_i32_0 : i32, i32
  }
  func.func @transform_9(%arg0: i32) -> (i32, i32) {
    %c0_i32 = arith.constant 0 : i32
    %c0_i32_0 = arith.constant 0 : i32
    return %arg0, %c0_i32 : i32, i32
  }
}

</mosaic_0001>

<llo_original>
// kernel: net_forward.1
$region0: #{net_forward.1}
  #allocation0 [shape = 'u32[]', space=smem, size = 0x4, offset = 0x4, fixed_abs, tag = 'smem constant byte address 0x4 - core index']
  #allocation1 [shape = 'u32[72,128]{1,0:T(1,128)}', space=vmem, size = 0x9000, scoped, tag = 'internal scratch']
  %s0 = inlined_call_operand.vmem [shape: f32[28,8,28], index: 0, kind: input, shape index: {}]
  %s1 = inlined_call_operand.vmem [shape: f32[5,28,240], index: 1, kind: input, shape index: {}]
  %s2 = inlined_call_operand.vmem [shape: f32[1,240], index: 2, kind: input, shape index: {}]
  %s3 = inlined_call_operand.vmem [shape: f32[5,230,160], index: 3, kind: input, shape index: {}]
  %s4 = inlined_call_operand.vmem [shape: f32[1,160], index: 4, kind: input, shape index: {}]
  %s5 = inlined_call_operand.vmem [shape: f32[4,140,50], index: 5, kind: input, shape index: {}]
  %s6 = inlined_call_operand.vmem [shape: f32[1,50], index: 6, kind: input, shape index: {}]
  %s7 = inlined_call_operand.vmem [shape: f32[50,10], index: 7, kind: input, shape index: {}]
  %s8 = inlined_call_operand.vmem [shape: f32[1,10], index: 8, kind: input, shape index: {}]
  %s9 = inlined_call_operand.vmem [shape: f32[8,10], index: 9, kind: output, shape index: {}]
  %s10 = sld [smem:[#allocation0]]
  $region46: #{net_forward.1} parent=0
    _
  %s12 = ssub.s32 1, %s10
  %s13 = scalar_select 0, %s12, %s10
  // Predicated region
  $region2: #{net_forward.1} parent=0 // pred_check
    _
  $region3: #{net_forward.1} parent=0 // pred_check_branch
    %15 = sbr.rel (0) target = $region5
  $region4: #{net_forward.1} parent=0 // pred_region
    _
  $region5: #{net_forward.1} parent=0 // pred_fallthru
    _
  // Predicated region
  $region6: #{net_forward.1} parent=0 // pred_check
    _
  $region7: #{net_forward.1} parent=0 // pred_check_branch
    %17 = sbr.rel (0) target = $region9
  $region8: #{net_forward.1} parent=0 // pred_region
    _
  $region9: #{net_forward.1} parent=0 // pred_fallthru
    _
  // Predicated region
  $region10: #{net_forward.1} parent=0 // pred_check
    _
  $region11: #{net_forward.1} parent=0 // pred_check_branch
    %19 = sbr.rel (0) target = $region13
  $region12: #{net_forward.1} parent=0 // pred_region
    _
  $region13: #{net_forward.1} parent=0 // pred_fallthru
    _
  // Predicated region
  $region14: #{net_forward.1} parent=0 // pred_check
    _
  $region15: #{net_forward.1} parent=0 // pred_check_branch
    %21 = sbr.rel (0) target = $region17
  $region16: #{net_forward.1} parent=0 // pred_region
    _
  $region17: #{net_forward.1} parent=0 // pred_fallthru
    _
  // Predicated region
  $region18: #{net_forward.1} parent=0 // pred_check
    _
  $region19: #{net_forward.1} parent=0 // pred_check_branch
    %23 = sbr.rel (0) target = $region21
  $region20: #{net_forward.1} parent=0 // pred_region
    _
  $region21: #{net_forward.1} parent=0 // pred_fallthru
    _
  // Predicated region
  $region22: #{net_forward.1} parent=0 // pred_check
    _
  $region23: #{net_forward.1} parent=0 // pred_check_branch
    %25 = sbr.rel (0) target = $region25
  $region24: #{net_forward.1} parent=0 // pred_region
    _
  $region25: #{net_forward.1} parent=0 // pred_fallthru
    _
  // Predicated region
  $region26: #{net_forward.1} parent=0 // pred_check
    _
  $region27: #{net_forward.1} parent=0 // pred_check_branch
    %27 = sbr.rel (0) target = $region29
  $region28: #{net_forward.1} parent=0 // pred_region
    _
  $region29: #{net_forward.1} parent=0 // pred_fallthru
    _
  // Predicated region
  $region30: #{net_forward.1} parent=0 // pred_check
    _
  $region31: #{net_forward.1} parent=0 // pred_check_branch
    %29 = sbr.rel (0) target = $region33
  $region32: #{net_forward.1} parent=0 // pred_region
    _
  $region33: #{net_forward.1} parent=0 // pred_fallthru
    _
  // Predicated region
  $region34: #{net_forward.1} parent=0 // pred_check
    _
  $region35: #{net_forward.1} parent=0 // pred_check_branch
    %31 = sbr.rel (0) target = $region37
  $region36: #{net_forward.1} parent=0 // pred_region
    _
  $region37: #{net_forward.1} parent=0 // pred_fallthru
    _
  %v32 = vld [vmem:[%s0] sm:$0xff]
  %v33 = vld [vmem:[%s0 + $0x8] sm:$0xff]
  %v34 = vld [vmem:[%s0 + $0x10] sm:$0xff]
  %v35 = vld [vmem:[%s0 + $0x18] sm:$0xff]
  %v36 = vld [vmem:[%s0 + $0x20] sm:$0xff]
  %v37 = vld [vmem:[%s0 + $0x28] sm:$0xff]
  %v38 = vld [vmem:[%s0 + $0x30] sm:$0xff]
  %v39 = vld [vmem:[%s0 + $0x38] sm:$0xff]
  %v40 = vld [vmem:[%s0 + $0x40] sm:$0xff]
  %v41 = vld [vmem:[%s0 + $0x48] sm:$0xff]
  %v42 = vld [vmem:[%s0 + $0x50] sm:$0xff]
  %v43 = vld [vmem:[%s0 + $0x58] sm:$0xff]
  %v44 = vld [vmem:[%s0 + $0x60] sm:$0xff]
  %v45 = vld [vmem:[%s0 + $0x68] sm:$0xff]
  %v46 = vld [vmem:[%s0 + $0x70] sm:$0xff]
  %v47 = vld [vmem:[%s0 + $0x78] sm:$0xff]
  %v48 = vld [vmem:[%s0 + $0x80] sm:$0xff]
  %v49 = vld [vmem:[%s0 + $0x88] sm:$0xff]
  %v50 = vld [vmem:[%s0 + $0x90] sm:$0xff]
  %v51 = vld [vmem:[%s0 + $0x98] sm:$0xff]
  %v52 = vld [vmem:[%s0 + $0xa0] sm:$0xff]
  %v53 = vld [vmem:[%s0 + $0xa8] sm:$0xff]
  %v54 = vld [vmem:[%s0 + $0xb0] sm:$0xff]
  %v55 = vld [vmem:[%s0 + $0xb8] sm:$0xff]
  %v56 = vld [vmem:[%s1] sm:$0xff]
  %v57 = vld [vmem:[%s1 + $0x8] sm:$0xff]
  %v58 = vld [vmem:[%s1 + $0x10] sm:$0xff]
  %v59 = vld [vmem:[%s1 + $0x18] sm:$0xff]
  %v60 = vld [vmem:[%s1 + $0x20] sm:$0xff]
  %v61 = vld [vmem:[%s1 + $0x28] sm:$0xff]
  %v62 = vld [vmem:[%s1 + $0x30] sm:$0xf]
  %v63 = vld [vmem:[%s1 + $0x38] sm:$0xf]
  %s64 = scalar_lea.vmem %s0, 8
  %v65 = vld [vmem:[%s64] sm:$0xff]
  %v66 = vld [vmem:[%s64 + $0x8] sm:$0xff]
  %v67 = vld [vmem:[%s64 + $0x10] sm:$0xff]
  %v68 = vld [vmem:[%s64 + $0x18] sm:$0xff]
  %v69 = vld [vmem:[%s64 + $0x20] sm:$0xff]
  %v70 = vld [vmem:[%s64 + $0x28] sm:$0xff]
  %v71 = vld [vmem:[%s64 + $0x30] sm:$0xff]
  %v72 = vld [vmem:[%s64 + $0x38] sm:$0xff]
  %v73 = vld [vmem:[%s64 + $0x40] sm:$0xff]
  %v74 = vld [vmem:[%s64 + $0x48] sm:$0xff]
  %v75 = vld [vmem:[%s64 + $0x50] sm:$0xff]
  %v76 = vld [vmem:[%s64 + $0x58] sm:$0xff]
  %v77 = vld [vmem:[%s64 + $0x60] sm:$0xff]
  %v78 = vld [vmem:[%s64 + $0x68] sm:$0xff]
  %v79 = vld [vmem:[%s64 + $0x70] sm:$0xff]
  %v80 = vld [vmem:[%s64 + $0x78] sm:$0xff]
  %v81 = vld [vmem:[%s64 + $0x80] sm:$0xff]
  %v82 = vld [vmem:[%s64 + $0x88] sm:$0xff]
  %v83 = vld [vmem:[%s64 + $0x90] sm:$0xff]
  %v84 = vld [vmem:[%s64 + $0x98] sm:$0xff]
  %v85 = vld [vmem:[%s64 + $0xa0] sm:$0xff]
  %v86 = vld [vmem:[%s64 + $0xa8] sm:$0xff]
  %v87 = vld [vmem:[%s64 + $0xb0] sm:$0xff]
  %v88 = vld [vmem:[%s64 + $0xb8] sm:$0xff]
  %s89 = scalar_lea.vmem %s1, 64
  %v90 = vld [vmem:[%s89] sm:$0xff]
  %v91 = vld [vmem:[%s89 + $0x8] sm:$0xff]
  %v92 = vld [vmem:[%s89 + $0x10] sm:$0xff]
  %v93 = vld [vmem:[%s89 + $0x18] sm:$0xff]
  %v94 = vld [vmem:[%s89 + $0x20] sm:$0xff]
  %v95 = vld [vmem:[%s89 + $0x28] sm:$0xff]
  %v96 = vld [vmem:[%s89 + $0x30] sm:$0xf]
  %v97 = vld [vmem:[%s89 + $0x38] sm:$0xf]
  %vm98 = vcmask 228352
  %v100 = vsel %vm98, %v65, 0
  %v103 = vsel %vm98, %v66, 0
  %v106 = vsel %vm98, %v67, 0
  %v109 = vsel %vm98, %v68, 0
  %v112 = vsel %vm98, %v69, 0
  %v115 = vsel %vm98, %v70, 0
  %v118 = vsel %vm98, %v71, 0
  %v121 = vsel %vm98, %v72, 0
  %v124 = vsel %vm98, %v73, 0
  %v127 = vsel %vm98, %v74, 0
  %v130 = vsel %vm98, %v75, 0
  %v133 = vsel %vm98, %v76, 0
  %v136 = vsel %vm98, %v77, 0
  %v139 = vsel %vm98, %v78, 0
  %v142 = vsel %vm98, %v79, 0
  %v145 = vsel %vm98, %v80, 0
  %v148 = vsel %vm98, %v81, 0
  %v151 = vsel %vm98, %v82, 0
  %v154 = vsel %vm98, %v83, 0
  %v157 = vsel %vm98, %v84, 0
  %v160 = vsel %vm98, %v85, 0
  %v163 = vsel %vm98, %v86, 0
  %v166 = vsel %vm98, %v87, 0
  %v169 = vsel %vm98, %v88, 0
  %vm171 = vcmask 1043456
  %v173 = vsel %vm171, %v96, 0
  %v176 = vsel %vm171, %v97, 0
  %178 = vmatpush.msra.mxu0 0.0
  %179 = vmatpush.msra.mxu0 0.0
  %180 = vmatpush.msra.mxu0 0.0
  %181 = vmatpush.msra.mxu0 0.0
  %182 = vmatpush.msra.mxu0 0.0
  %183 = vmatpush.msra.mxu0 0.0
  %184 = vmatpush.msra.mxu0 0.0
  %185 = vmatpush.msra.mxu0 0.0
  %186 = vmatpush.msra.mxu0 0.0
  %187 = vmatpush.msra.mxu0 0.0
  %188 = vmatpush.msra.mxu0 0.0
  %189 = vmatpush.msra.mxu0 0.0
  %190 = vmatpush.msra.mxu0 %v173
  %191 = vmatpush.msra.mxu0 %v94
  %192 = vmatpush.msra.mxu0 %v92
  %193 = vmatpush.msra.mxu0 %v90
  %194 = vmatmul.f32.gmra.mxu0 %v100
  %v195 = vpop.f32.mrf.mxu0
  %v196 = vadd.f32 0.0, %v195
  %197 = vmatmul.f32.gmra.mxu0 %v103
  %v198 = vpop.f32.mrf.mxu0
  %v199 = vadd.f32 0.0, %v198
  %200 = vmatmul.f32.gmra.mxu0 %v106
  %v201 = vpop.f32.mrf.mxu0
  %v202 = vadd.f32 0.0, %v201
  %203 = vmatmul.f32.gmra.mxu0 %v109
  %v204 = vpop.f32.mrf.mxu0
  %v205 = vadd.f32 0.0, %v204
  %206 = vmatmul.f32.gmra.mxu0 %v112
  %v207 = vpop.f32.mrf.mxu0
  %v208 = vadd.f32 0.0, %v207
  %209 = vmatmul.f32.gmra.mxu0 %v115
  %v210 = vpop.f32.mrf.mxu0
  %v211 = vadd.f32 0.0, %v210
  %212 = vmatmul.f32.gmra.mxu0 %v118
  %v213 = vpop.f32.mrf.mxu0
  %v214 = vadd.f32 0.0, %v213
  %215 = vmatmul.f32.gmra.mxu0 %v121
  %v216 = vpop.f32.mrf.mxu0
  %v217 = vadd.f32 0.0, %v216
  %218 = vmatmul.f32.gmra.mxu0 %v124
  %v219 = vpop.f32.mrf.mxu0
  %v220 = vadd.f32 0.0, %v219
  %221 = vmatmul.f32.gmra.mxu0 %v127
  %v222 = vpop.f32.mrf.mxu0
  %v223 = vadd.f32 0.0, %v222
  %224 = vmatmul.f32.gmra.mxu0 %v130
  %v225 = vpop.f32.mrf.mxu0
  %v226 = vadd.f32 0.0, %v225
  %227 = vmatmul.f32.gmra.mxu0 %v133
  %v228 = vpop.f32.mrf.mxu0
  %v229 = vadd.f32 0.0, %v228
  %230 = vmatmul.f32.gmra.mxu0 %v136
  %v231 = vpop.f32.mrf.mxu0
  %v232 = vadd.f32 0.0, %v231
  %233 = vmatmul.f32.gmra.mxu0 %v139
  %v234 = vpop.f32.mrf.mxu0
  %v235 = vadd.f32 0.0, %v234
  %236 = vmatmul.f32.gmra.mxu0 %v142
  %v237 = vpop.f32.mrf.mxu0
  %v238 = vadd.f32 0.0, %v237
  %239 = vmatmul.f32.gmra.mxu0 %v145
  %v240 = vpop.f32.mrf.mxu0
  %v241 = vadd.f32 0.0, %v240
  %242 = vmatmul.f32.gmra.mxu0 %v148
  %v243 = vpop.f32.mrf.mxu0
  %v244 = vadd.f32 0.0, %v243
  %245 = vmatmul.f32.gmra.mxu0 %v151
  %v246 = vpop.f32.mrf.mxu0
  %v247 = vadd.f32 0.0, %v246
  %248 = vmatmul.f32.gmra.mxu0 %v154
  %v249 = vpop.f32.mrf.mxu0
  %v250 = vadd.f32 0.0, %v249
  %251 = vmatmul.f32.gmra.mxu0 %v157
  %v252 = vpop.f32.mrf.mxu0
  %v253 = vadd.f32 0.0, %v252
  %254 = vmatmul.f32.gmra.mxu0 %v160
  %v255 = vpop.f32.mrf.mxu0
  %v256 = vadd.f32 0.0, %v255
  %257 = vmatmul.f32.gmra.mxu0 %v163
  %v258 = vpop.f32.mrf.mxu0
  %v259 = vadd.f32 0.0, %v258
  %260 = vmatmul.f32.gmra.mxu0 %v166
  %v261 = vpop.f32.mrf.mxu0
  %v262 = vadd.f32 0.0, %v261
  %263 = vmatmul.f32.gmra.mxu0 %v169
  %v264 = vpop.f32.mrf.mxu0
  %v265 = vadd.f32 0.0, %v264
  %266 = vdwg.mxu0
  %267 = vmatpush.msra.mxu0 0.0
  %268 = vmatpush.msra.mxu0 0.0
  %269 = vmatpush.msra.mxu0 0.0
  %270 = vmatpush.msra.mxu0 0.0
  %271 = vmatpush.msra.mxu0 0.0
  %272 = vmatpush.msra.mxu0 0.0
  %273 = vmatpush.msra.mxu0 0.0
  %274 = vmatpush.msra.mxu0 0.0
  %275 = vmatpush.msra.mxu0 0.0
  %276 = vmatpush.msra.mxu0 0.0
  %277 = vmatpush.msra.mxu0 0.0
  %278 = vmatpush.msra.mxu0 0.0
  %279 = vmatpush.msra.mxu0 %v176
  %280 = vmatpush.msra.mxu0 %v95
  %281 = vmatpush.msra.mxu0 %v93
  %282 = vmatpush.msra.mxu0 %v91
  %283 = vmatmul.f32.gmra.mxu0 %v100
  %v284 = vpop.f32.mrf.mxu0
  %v285 = vadd.f32 0.0, %v284
  %286 = vmatmul.f32.gmra.mxu0 %v103
  %v287 = vpop.f32.mrf.mxu0
  %v288 = vadd.f32 0.0, %v287
  %289 = vmatmul.f32.gmra.mxu0 %v106
  %v290 = vpop.f32.mrf.mxu0
  %v291 = vadd.f32 0.0, %v290
  %292 = vmatmul.f32.gmra.mxu0 %v109
  %v293 = vpop.f32.mrf.mxu0
  %v294 = vadd.f32 0.0, %v293
  %295 = vmatmul.f32.gmra.mxu0 %v112
  %v296 = vpop.f32.mrf.mxu0
  %v297 = vadd.f32 0.0, %v296
  %298 = vmatmul.f32.gmra.mxu0 %v115
  %v299 = vpop.f32.mrf.mxu0
  %v300 = vadd.f32 0.0, %v299
  %301 = vmatmul.f32.gmra.mxu0 %v118
  %v302 = vpop.f32.mrf.mxu0
  %v303 = vadd.f32 0.0, %v302
  %304 = vmatmul.f32.gmra.mxu0 %v121
  %v305 = vpop.f32.mrf.mxu0
  %v306 = vadd.f32 0.0, %v305
  %307 = vmatmul.f32.gmra.mxu0 %v124
  %v308 = vpop.f32.mrf.mxu0
  %v309 = vadd.f32 0.0, %v308
  %310 = vmatmul.f32.gmra.mxu0 %v127
  %v311 = vpop.f32.mrf.mxu0
  %v312 = vadd.f32 0.0, %v311
  %313 = vmatmul.f32.gmra.mxu0 %v130
  %v314 = vpop.f32.mrf.mxu0
  %v315 = vadd.f32 0.0, %v314
  %316 = vmatmul.f32.gmra.mxu0 %v133
  %v317 = vpop.f32.mrf.mxu0
  %v318 = vadd.f32 0.0, %v317
  %319 = vmatmul.f32.gmra.mxu0 %v136
  %v320 = vpop.f32.mrf.mxu0
  %v321 = vadd.f32 0.0, %v320
  %322 = vmatmul.f32.gmra.mxu0 %v139
  %v323 = vpop.f32.mrf.mxu0
  %v324 = vadd.f32 0.0, %v323
  %325 = vmatmul.f32.gmra.mxu0 %v142
  %v326 = vpop.f32.mrf.mxu0
  %v327 = vadd.f32 0.0, %v326
  %328 = vmatmul.f32.gmra.mxu0 %v145
  %v329 = vpop.f32.mrf.mxu0
  %v330 = vadd.f32 0.0, %v329
  %331 = vmatmul.f32.gmra.mxu0 %v148
  %v332 = vpop.f32.mrf.mxu0
  %v333 = vadd.f32 0.0, %v332
  %334 = vmatmul.f32.gmra.mxu0 %v151
  %v335 = vpop.f32.mrf.mxu0
  %v336 = vadd.f32 0.0, %v335
  %337 = vmatmul.f32.gmra.mxu0 %v154
  %v338 = vpop.f32.mrf.mxu0
  %v339 = vadd.f32 0.0, %v338
  %340 = vmatmul.f32.gmra.mxu0 %v157
  %v341 = vpop.f32.mrf.mxu0
  %v342 = vadd.f32 0.0, %v341
  %343 = vmatmul.f32.gmra.mxu0 %v160
  %v344 = vpop.f32.mrf.mxu0
  %v345 = vadd.f32 0.0, %v344
  %346 = vmatmul.f32.gmra.mxu0 %v163
  %v347 = vpop.f32.mrf.mxu0
  %v348 = vadd.f32 0.0, %v347
  %349 = vmatmul.f32.gmra.mxu0 %v166
  %v350 = vpop.f32.mrf.mxu0
  %v351 = vadd.f32 0.0, %v350
  %352 = vmatmul.f32.gmra.mxu0 %v169
  %v353 = vpop.f32.mrf.mxu0
  %v354 = vadd.f32 0.0, %v353
  %355 = vdwg.mxu0
  %v357 = vsel %vm98, %v32, 0
  %v360 = vsel %vm98, %v33, 0
  %v363 = vsel %vm98, %v34, 0
  %v366 = vsel %vm98, %v35, 0
  %v369 = vsel %vm98, %v36, 0
  %v372 = vsel %vm98, %v37, 0
  %v375 = vsel %vm98, %v38, 0
  %v378 = vsel %vm98, %v39, 0
  %v381 = vsel %vm98, %v40, 0
  %v384 = vsel %vm98, %v41, 0
  %v387 = vsel %vm98, %v42, 0
  %v390 = vsel %vm98, %v43, 0
  %v393 = vsel %vm98, %v44, 0
  %v396 = vsel %vm98, %v45, 0
  %v399 = vsel %vm98, %v46, 0
  %v402 = vsel %vm98, %v47, 0
  %v405 = vsel %vm98, %v48, 0
  %v408 = vsel %vm98, %v49, 0
  %v411 = vsel %vm98, %v50, 0
  %v414 = vsel %vm98, %v51, 0
  %v417 = vsel %vm98, %v52, 0
  %v420 = vsel %vm98, %v53, 0
  %v423 = vsel %vm98, %v54, 0
  %v426 = vsel %vm98, %v55, 0
  %v429 = vsel %vm171, %v62, 0
  %v432 = vsel %vm171, %v63, 0
  %434 = vmatpush.msra.mxu0 0.0
  %435 = vmatpush.msra.mxu0 0.0
  %436 = vmatpush.msra.mxu0 0.0
  %437 = vmatpush.msra.mxu0 0.0
  %438 = vmatpush.msra.mxu0 0.0
  %439 = vmatpush.msra.mxu0 0.0
  %440 = vmatpush.msra.mxu0 0.0
  %441 = vmatpush.msra.mxu0 0.0
  %442 = vmatpush.msra.mxu0 0.0
  %443 = vmatpush.msra.mxu0 0.0
  %444 = vmatpush.msra.mxu0 0.0
  %445 = vmatpush.msra.mxu0 0.0
  %446 = vmatpush.msra.mxu0 %v429
  %447 = vmatpush.msra.mxu0 %v60
  %448 = vmatpush.msra.mxu0 %v58
  %449 = vmatpush.msra.mxu0 %v56
  %450 = vmatmul.f32.gmra.mxu0 %v357
  %v451 = vpop.f32.mrf.mxu0
  %v452 = vadd.f32 %v196, %v451
  %453 = vmatmul.f32.gmra.mxu0 %v360
  %v454 = vpop.f32.mrf.mxu0
  %v455 = vadd.f32 %v199, %v454
  %456 = vmatmul.f32.gmra.mxu0 %v363
  %v457 = vpop.f32.mrf.mxu0
  %v458 = vadd.f32 %v202, %v457
  %459 = vmatmul.f32.gmra.mxu0 %v366
  %v460 = vpop.f32.mrf.mxu0
  %v461 = vadd.f32 %v205, %v460
  %462 = vmatmul.f32.gmra.mxu0 %v369
  %v463 = vpop.f32.mrf.mxu0
  %v464 = vadd.f32 %v208, %v463
  %465 = vmatmul.f32.gmra.mxu0 %v372
  %v466 = vpop.f32.mrf.mxu0
  %v467 = vadd.f32 %v211, %v466
  %468 = vmatmul.f32.gmra.mxu0 %v375
  %v469 = vpop.f32.mrf.mxu0
  %v470 = vadd.f32 %v214, %v469
  %471 = vmatmul.f32.gmra.mxu0 %v378
  %v472 = vpop.f32.mrf.mxu0
  %v473 = vadd.f32 %v217, %v472
  %474 = vmatmul.f32.gmra.mxu0 %v381
  %v475 = vpop.f32.mrf.mxu0
  %v476 = vadd.f32 %v220, %v475
  %477 = vmatmul.f32.gmra.mxu0 %v384
  %v478 = vpop.f32.mrf.mxu0
  %v479 = vadd.f32 %v223, %v478
  %480 = vmatmul.f32.gmra.mxu0 %v387
  %v481 = vpop.f32.mrf.mxu0
  %v482 = vadd.f32 %v226, %v481
  %483 = vmatmul.f32.gmra.mxu0 %v390
  %v484 = vpop.f32.mrf.mxu0
  %v485 = vadd.f32 %v229, %v484
  %486 = vmatmul.f32.gmra.mxu0 %v393
  %v487 = vpop.f32.mrf.mxu0
  %v488 = vadd.f32 %v232, %v487
  %489 = vmatmul.f32.gmra.mxu0 %v396
  %v490 = vpop.f32.mrf.mxu0
  %v491 = vadd.f32 %v235, %v490
  %492 = vmatmul.f32.gmra.mxu0 %v399
  %v493 = vpop.f32.mrf.mxu0
  %v494 = vadd.f32 %v238, %v493
  %495 = vmatmul.f32.gmra.mxu0 %v402
  %v496 = vpop.f32.mrf.mxu0
  %v497 = vadd.f32 %v241, %v496
  %498 = vmatmul.f32.gmra.mxu0 %v405
  %v499 = vpop.f32.mrf.mxu0
  %v500 = vadd.f32 %v244, %v499
  %501 = vmatmul.f32.gmra.mxu0 %v408
  %v502 = vpop.f32.mrf.mxu0
  %v503 = vadd.f32 %v247, %v502
  %504 = vmatmul.f32.gmra.mxu0 %v411
  %v505 = vpop.f32.mrf.mxu0
  %v506 = vadd.f32 %v250, %v505
  %507 = vmatmul.f32.gmra.mxu0 %v414
  %v508 = vpop.f32.mrf.mxu0
  %v509 = vadd.f32 %v253, %v508
  %510 = vmatmul.f32.gmra.mxu0 %v417
  %v511 = vpop.f32.mrf.mxu0
  %v512 = vadd.f32 %v256, %v511
  %513 = vmatmul.f32.gmra.mxu0 %v420
  %v514 = vpop.f32.mrf.mxu0
  %v515 = vadd.f32 %v259, %v514
  %516 = vmatmul.f32.gmra.mxu0 %v423
  %v517 = vpop.f32.mrf.mxu0
  %v518 = vadd.f32 %v262, %v517
  %519 = vmatmul.f32.gmra.mxu0 %v426
  %v520 = vpop.f32.mrf.mxu0
  %v521 = vadd.f32 %v265, %v520
  %522 = vdwg.mxu0
  %523 = vmatpush.msra.mxu0 0.0
  %524 = vmatpush.msra.mxu0 0.0
  %525 = vmatpush.msra.mxu0 0.0
  %526 = vmatpush.msra.mxu0 0.0
  %527 = vmatpush.msra.mxu0 0.0
  %528 = vmatpush.msra.mxu0 0.0
  %529 = vmatpush.msra.mxu0 0.0
  %530 = vmatpush.msra.mxu0 0.0
  %531 = vmatpush.msra.mxu0 0.0
  %532 = vmatpush.msra.mxu0 0.0
  %533 = vmatpush.msra.mxu0 0.0
  %534 = vmatpush.msra.mxu0 0.0
  %535 = vmatpush.msra.mxu0 %v432
  %536 = vmatpush.msra.mxu0 %v61
  %537 = vmatpush.msra.mxu0 %v59
  %538 = vmatpush.msra.mxu0 %v57
  %539 = vmatmul.f32.gmra.mxu0 %v357
  %v540 = vpop.f32.mrf.mxu0
  %v541 = vadd.f32 %v285, %v540
  %542 = vmatmul.f32.gmra.mxu0 %v360
  %v543 = vpop.f32.mrf.mxu0
  %v544 = vadd.f32 %v288, %v543
  %545 = vmatmul.f32.gmra.mxu0 %v363
  %v546 = vpop.f32.mrf.mxu0
  %v547 = vadd.f32 %v291, %v546
  %548 = vmatmul.f32.gmra.mxu0 %v366
  %v549 = vpop.f32.mrf.mxu0
  %v550 = vadd.f32 %v294, %v549
  %551 = vmatmul.f32.gmra.mxu0 %v369
  %v552 = vpop.f32.mrf.mxu0
  %v553 = vadd.f32 %v297, %v552
  %554 = vmatmul.f32.gmra.mxu0 %v372
  %v555 = vpop.f32.mrf.mxu0
  %v556 = vadd.f32 %v300, %v555
  %557 = vmatmul.f32.gmra.mxu0 %v375
  %v558 = vpop.f32.mrf.mxu0
  %v559 = vadd.f32 %v303, %v558
  %560 = vmatmul.f32.gmra.mxu0 %v378
  %v561 = vpop.f32.mrf.mxu0
  %v562 = vadd.f32 %v306, %v561
  %563 = vmatmul.f32.gmra.mxu0 %v381
  %v564 = vpop.f32.mrf.mxu0
  %v565 = vadd.f32 %v309, %v564
  %566 = vmatmul.f32.gmra.mxu0 %v384
  %v567 = vpop.f32.mrf.mxu0
  %v568 = vadd.f32 %v312, %v567
  %569 = vmatmul.f32.gmra.mxu0 %v387
  %v570 = vpop.f32.mrf.mxu0
  %v571 = vadd.f32 %v315, %v570
  %572 = vmatmul.f32.gmra.mxu0 %v390
  %v573 = vpop.f32.mrf.mxu0
  %v574 = vadd.f32 %v318, %v573
  %575 = vmatmul.f32.gmra.mxu0 %v393
  %v576 = vpop.f32.mrf.mxu0
  %v577 = vadd.f32 %v321, %v576
  %578 = vmatmul.f32.gmra.mxu0 %v396
  %v579 = vpop.f32.mrf.mxu0
  %v580 = vadd.f32 %v324, %v579
  %581 = vmatmul.f32.gmra.mxu0 %v399
  %v582 = vpop.f32.mrf.mxu0
  %v583 = vadd.f32 %v327, %v582
  %584 = vmatmul.f32.gmra.mxu0 %v402
  %v585 = vpop.f32.mrf.mxu0
  %v586 = vadd.f32 %v330, %v585
  %587 = vmatmul.f32.gmra.mxu0 %v405
  %v588 = vpop.f32.mrf.mxu0
  %v589 = vadd.f32 %v333, %v588
  %590 = vmatmul.f32.gmra.mxu0 %v408
  %v591 = vpop.f32.mrf.mxu0
  %v592 = vadd.f32 %v336, %v591
  %593 = vmatmul.f32.gmra.mxu0 %v411
  %v594 = vpop.f32.mrf.mxu0
  %v595 = vadd.f32 %v339, %v594
  %596 = vmatmul.f32.gmra.mxu0 %v414
  %v597 = vpop.f32.mrf.mxu0
  %v598 = vadd.f32 %v342, %v597
  %599 = vmatmul.f32.gmra.mxu0 %v417
  %v600 = vpop.f32.mrf.mxu0
  %v601 = vadd.f32 %v345, %v600
  %602 = vmatmul.f32.gmra.mxu0 %v420
  %v603 = vpop.f32.mrf.mxu0
  %v604 = vadd.f32 %v348, %v603
  %605 = vmatmul.f32.gmra.mxu0 %v423
  %v606 = vpop.f32.mrf.mxu0
  %v607 = vadd.f32 %v351, %v606
  %608 = vmatmul.f32.gmra.mxu0 %v426
  %v609 = vpop.f32.mrf.mxu0
  %v610 = vadd.f32 %v354, %v609
  %611 = vdwg.mxu0
  %s612 = scalar_lea.vmem %s0, 16
  %v613 = vld [vmem:[%s612] sm:$0xff]
  %v614 = vld [vmem:[%s612 + $0x8] sm:$0xff]
  %v615 = vld [vmem:[%s612 + $0x10] sm:$0xff]
  %v616 = vld [vmem:[%s612 + $0x18] sm:$0xff]
  %v617 = vld [vmem:[%s612 + $0x20] sm:$0xff]
  %v618 = vld [vmem:[%s612 + $0x28] sm:$0xff]
  %v619 = vld [vmem:[%s612 + $0x30] sm:$0xff]
  %v620 = vld [vmem:[%s612 + $0x38] sm:$0xff]
  %v621 = vld [vmem:[%s612 + $0x40] sm:$0xff]
  %v622 = vld [vmem:[%s612 + $0x48] sm:$0xff]
  %v623 = vld [vmem:[%s612 + $0x50] sm:$0xff]
  %v624 = vld [vmem:[%s612 + $0x58] sm:$0xff]
  %v625 = vld [vmem:[%s612 + $0x60] sm:$0xff]
  %v626 = vld [vmem:[%s612 + $0x68] sm:$0xff]
  %v627 = vld [vmem:[%s612 + $0x70] sm:$0xff]
  %v628 = vld [vmem:[%s612 + $0x78] sm:$0xff]
  %v629 = vld [vmem:[%s612 + $0x80] sm:$0xff]
  %v630 = vld [vmem:[%s612 + $0x88] sm:$0xff]
  %v631 = vld [vmem:[%s612 + $0x90] sm:$0xff]
  %v632 = vld [vmem:[%s612 + $0x98] sm:$0xff]
  %v633 = vld [vmem:[%s612 + $0xa0] sm:$0xff]
  %v634 = vld [vmem:[%s612 + $0xa8] sm:$0xff]
  %v635 = vld [vmem:[%s612 + $0xb0] sm:$0xff]
  %v636 = vld [vmem:[%s612 + $0xb8] sm:$0xff]
  %s637 = scalar_lea.vmem %s1, 128
  %v638 = vld [vmem:[%s637] sm:$0xff]
  %v639 = vld [vmem:[%s637 + $0x8] sm:$0xff]
  %v640 = vld [vmem:[%s637 + $0x10] sm:$0xff]
  %v641 = vld [vmem:[%s637 + $0x18] sm:$0xff]
  %v642 = vld [vmem:[%s637 + $0x20] sm:$0xff]
  %v643 = vld [vmem:[%s637 + $0x28] sm:$0xff]
  %v644 = vld [vmem:[%s637 + $0x30] sm:$0xf]
  %v645 = vld [vmem:[%s637 + $0x38] sm:$0xf]
  %v647 = vsel %vm98, %v613, 0
  %v650 = vsel %vm98, %v614, 0
  %v653 = vsel %vm98, %v615, 0
  %v656 = vsel %vm98, %v616, 0
  %v659 = vsel %vm98, %v617, 0
  %v662 = vsel %vm98, %v618, 0
  %v665 = vsel %vm98, %v619, 0
  %v668 = vsel %vm98, %v620, 0
  %v671 = vsel %vm98, %v621, 0
  %v674 = vsel %vm98, %v622, 0
  %v677 = vsel %vm98, %v623, 0
  %v680 = vsel %vm98, %v624, 0
  %v683 = vsel %vm98, %v625, 0
  %v686 = vsel %vm98, %v626, 0
  %v689 = vsel %vm98, %v627, 0
  %v692 = vsel %vm98, %v628, 0
  %v695 = vsel %vm98, %v629, 0
  %v698 = vsel %vm98, %v630, 0
  %v701 = vsel %vm98, %v631, 0
  %v704 = vsel %vm98, %v632, 0
  %v707 = vsel %vm98, %v633, 0
  %v710 = vsel %vm98, %v634, 0
  %v713 = vsel %vm98, %v635, 0
  %v716 = vsel %vm98, %v636, 0
  %v719 = vsel %vm171, %v644, 0
  %v722 = vsel %vm171, %v645, 0
  %724 = vmatpush.msra.mxu0 0.0
  %725 = vmatpush.msra.mxu0 0.0
  %726 = vmatpush.msra.mxu0 0.0
  %727 = vmatpush.msra.mxu0 0.0
  %728 = vmatpush.msra.mxu0 0.0
  %729 = vmatpush.msra.mxu0 0.0
  %730 = vmatpush.msra.mxu0 0.0
  %731 = vmatpush.msra.mxu0 0.0
  %732 = vmatpush.msra.mxu0 0.0
  %733 = vmatpush.msra.mxu0 0.0
  %734 = vmatpush.msra.mxu0 0.0
  %735 = vmatpush.msra.mxu0 0.0
  %736 = vmatpush.msra.mxu0 %v719
  %737 = vmatpush.msra.mxu0 %v642
  %738 = vmatpush.msra.mxu0 %v640
  %739 = vmatpush.msra.mxu0 %v638
  %740 = vmatmul.f32.gmra.mxu0 %v647
  %v741 = vpop.f32.mrf.mxu0
  %v742 = vadd.f32 0.0, %v741
  %743 = vmatmul.f32.gmra.mxu0 %v650
  %v744 = vpop.f32.mrf.mxu0
  %v745 = vadd.f32 0.0, %v744
  %746 = vmatmul.f32.gmra.mxu0 %v653
  %v747 = vpop.f32.mrf.mxu0
  %v748 = vadd.f32 0.0, %v747
  %749 = vmatmul.f32.gmra.mxu0 %v656
  %v750 = vpop.f32.mrf.mxu0
  %v751 = vadd.f32 0.0, %v750
  %752 = vmatmul.f32.gmra.mxu0 %v659
  %v753 = vpop.f32.mrf.mxu0
  %v754 = vadd.f32 0.0, %v753
  %755 = vmatmul.f32.gmra.mxu0 %v662
  %v756 = vpop.f32.mrf.mxu0
  %v757 = vadd.f32 0.0, %v756
  %758 = vmatmul.f32.gmra.mxu0 %v665
  %v759 = vpop.f32.mrf.mxu0
  %v760 = vadd.f32 0.0, %v759
  %761 = vmatmul.f32.gmra.mxu0 %v668
  %v762 = vpop.f32.mrf.mxu0
  %v763 = vadd.f32 0.0, %v762
  %764 = vmatmul.f32.gmra.mxu0 %v671
  %v765 = vpop.f32.mrf.mxu0
  %v766 = vadd.f32 0.0, %v765
  %767 = vmatmul.f32.gmra.mxu0 %v674
  %v768 = vpop.f32.mrf.mxu0
  %v769 = vadd.f32 0.0, %v768
  %770 = vmatmul.f32.gmra.mxu0 %v677
  %v771 = vpop.f32.mrf.mxu0
  %v772 = vadd.f32 0.0, %v771
  %773 = vmatmul.f32.gmra.mxu0 %v680
  %v774 = vpop.f32.mrf.mxu0
  %v775 = vadd.f32 0.0, %v774
  %776 = vmatmul.f32.gmra.mxu0 %v683
  %v777 = vpop.f32.mrf.mxu0
  %v778 = vadd.f32 0.0, %v777
  %779 = vmatmul.f32.gmra.mxu0 %v686
  %v780 = vpop.f32.mrf.mxu0
  %v781 = vadd.f32 0.0, %v780
  %782 = vmatmul.f32.gmra.mxu0 %v689
  %v783 = vpop.f32.mrf.mxu0
  %v784 = vadd.f32 0.0, %v783
  %785 = vmatmul.f32.gmra.mxu0 %v692
  %v786 = vpop.f32.mrf.mxu0
  %v787 = vadd.f32 0.0, %v786
  %788 = vmatmul.f32.gmra.mxu0 %v695
  %v789 = vpop.f32.mrf.mxu0
  %v790 = vadd.f32 0.0, %v789
  %791 = vmatmul.f32.gmra.mxu0 %v698
  %v792 = vpop.f32.mrf.mxu0
  %v793 = vadd.f32 0.0, %v792
  %794 = vmatmul.f32.gmra.mxu0 %v701
  %v795 = vpop.f32.mrf.mxu0
  %v796 = vadd.f32 0.0, %v795
  %797 = vmatmul.f32.gmra.mxu0 %v704
  %v798 = vpop.f32.mrf.mxu0
  %v799 = vadd.f32 0.0, %v798
  %800 = vmatmul.f32.gmra.mxu0 %v707
  %v801 = vpop.f32.mrf.mxu0
  %v802 = vadd.f32 0.0, %v801
  %803 = vmatmul.f32.gmra.mxu0 %v710
  %v804 = vpop.f32.mrf.mxu0
  %v805 = vadd.f32 0.0, %v804
  %806 = vmatmul.f32.gmra.mxu0 %v713
  %v807 = vpop.f32.mrf.mxu0
  %v808 = vadd.f32 0.0, %v807
  %809 = vmatmul.f32.gmra.mxu0 %v716
  %v810 = vpop.f32.mrf.mxu0
  %v811 = vadd.f32 0.0, %v810
  %812 = vdwg.mxu0
  %813 = vmatpush.msra.mxu0 0.0
  %814 = vmatpush.msra.mxu0 0.0
  %815 = vmatpush.msra.mxu0 0.0
  %816 = vmatpush.msra.mxu0 0.0
  %817 = vmatpush.msra.mxu0 0.0
  %818 = vmatpush.msra.mxu0 0.0
  %819 = vmatpush.msra.mxu0 0.0
  %820 = vmatpush.msra.mxu0 0.0
  %821 = vmatpush.msra.mxu0 0.0
  %822 = vmatpush.msra.mxu0 0.0
  %823 = vmatpush.msra.mxu0 0.0
  %824 = vmatpush.msra.mxu0 0.0
  %825 = vmatpush.msra.mxu0 %v722
  %826 = vmatpush.msra.mxu0 %v643
  %827 = vmatpush.msra.mxu0 %v641
  %828 = vmatpush.msra.mxu0 %v639
  %829 = vmatmul.f32.gmra.mxu0 %v647
  %v830 = vpop.f32.mrf.mxu0
  %v831 = vadd.f32 0.0, %v830
  %832 = vmatmul.f32.gmra.mxu0 %v650
  %v833 = vpop.f32.mrf.mxu0
  %v834 = vadd.f32 0.0, %v833
  %835 = vmatmul.f32.gmra.mxu0 %v653
  %v836 = vpop.f32.mrf.mxu0
  %v837 = vadd.f32 0.0, %v836
  %838 = vmatmul.f32.gmra.mxu0 %v656
  %v839 = vpop.f32.mrf.mxu0
  %v840 = vadd.f32 0.0, %v839
  %841 = vmatmul.f32.gmra.mxu0 %v659
  %v842 = vpop.f32.mrf.mxu0
  %v843 = vadd.f32 0.0, %v842
  %844 = vmatmul.f32.gmra.mxu0 %v662
  %v845 = vpop.f32.mrf.mxu0
  %v846 = vadd.f32 0.0, %v845
  %847 = vmatmul.f32.gmra.mxu0 %v665
  %v848 = vpop.f32.mrf.mxu0
  %v849 = vadd.f32 0.0, %v848
  %850 = vmatmul.f32.gmra.mxu0 %v668
  %v851 = vpop.f32.mrf.mxu0
  %v852 = vadd.f32 0.0, %v851
  %853 = vmatmul.f32.gmra.mxu0 %v671
  %v854 = vpop.f32.mrf.mxu0
  %v855 = vadd.f32 0.0, %v854
  %856 = vmatmul.f32.gmra.mxu0 %v674
  %v857 = vpop.f32.mrf.mxu0
  %v858 = vadd.f32 0.0, %v857
  %859 = vmatmul.f32.gmra.mxu0 %v677
  %v860 = vpop.f32.mrf.mxu0
  %v861 = vadd.f32 0.0, %v860
  %862 = vmatmul.f32.gmra.mxu0 %v680
  %v863 = vpop.f32.mrf.mxu0
  %v864 = vadd.f32 0.0, %v863
  %865 = vmatmul.f32.gmra.mxu0 %v683
  %v866 = vpop.f32.mrf.mxu0
  %v867 = vadd.f32 0.0, %v866
  %868 = vmatmul.f32.gmra.mxu0 %v686
  %v869 = vpop.f32.mrf.mxu0
  %v870 = vadd.f32 0.0, %v869
  %871 = vmatmul.f32.gmra.mxu0 %v689
  %v872 = vpop.f32.mrf.mxu0
  %v873 = vadd.f32 0.0, %v872
  %874 = vmatmul.f32.gmra.mxu0 %v692
  %v875 = vpop.f32.mrf.mxu0
  %v876 = vadd.f32 0.0, %v875
  %877 = vmatmul.f32.gmra.mxu0 %v695
  %v878 = vpop.f32.mrf.mxu0
  %v879 = vadd.f32 0.0, %v878
  %880 = vmatmul.f32.gmra.mxu0 %v698
  %v881 = vpop.f32.mrf.mxu0
  %v882 = vadd.f32 0.0, %v881
  %883 = vmatmul.f32.gmra.mxu0 %v701
  %v884 = vpop.f32.mrf.mxu0
  %v885 = vadd.f32 0.0, %v884
  %886 = vmatmul.f32.gmra.mxu0 %v704
  %v887 = vpop.f32.mrf.mxu0
  %v888 = vadd.f32 0.0, %v887
  %889 = vmatmul.f32.gmra.mxu0 %v707
  %v890 = vpop.f32.mrf.mxu0
  %v891 = vadd.f32 0.0, %v890
  %892 = vmatmul.f32.gmra.mxu0 %v710
  %v893 = vpop.f32.mrf.mxu0
  %v894 = vadd.f32 0.0, %v893
  %895 = vmatmul.f32.gmra.mxu0 %v713
  %v896 = vpop.f32.mrf.mxu0
  %v897 = vadd.f32 0.0, %v896
  %898 = vmatmul.f32.gmra.mxu0 %v716
  %v899 = vpop.f32.mrf.mxu0
  %v900 = vadd.f32 0.0, %v899
  %901 = vdwg.mxu0
  %v902 = vadd.f32 %v452, %v742
  %v903 = vadd.f32 %v541, %v831
  %v904 = vadd.f32 %v455, %v745
  %v905 = vadd.f32 %v544, %v834
  %v906 = vadd.f32 %v458, %v748
  %v907 = vadd.f32 %v547, %v837
  %v908 = vadd.f32 %v461, %v751
  %v909 = vadd.f32 %v550, %v840
  %v910 = vadd.f32 %v464, %v754
  %v911 = vadd.f32 %v553, %v843
  %v912 = vadd.f32 %v467, %v757
  %v913 = vadd.f32 %v556, %v846
  %v914 = vadd.f32 %v470, %v760
  %v915 = vadd.f32 %v559, %v849
  %v916 = vadd.f32 %v473, %v763
  %v917 = vadd.f32 %v562, %v852
  %v918 = vadd.f32 %v476, %v766
  %v919 = vadd.f32 %v565, %v855
  %v920 = vadd.f32 %v479, %v769
  %v921 = vadd.f32 %v568, %v858
  %v922 = vadd.f32 %v482, %v772
  %v923 = vadd.f32 %v571, %v861
  %v924 = vadd.f32 %v485, %v775
  %v925 = vadd.f32 %v574, %v864
  %v926 = vadd.f32 %v488, %v778
  %v927 = vadd.f32 %v577, %v867
  %v928 = vadd.f32 %v491, %v781
  %v929 = vadd.f32 %v580, %v870
  %v930 = vadd.f32 %v494, %v784
  %v931 = vadd.f32 %v583, %v873
  %v932 = vadd.f32 %v497, %v787
  %v933 = vadd.f32 %v586, %v876
  %v934 = vadd.f32 %v500, %v790
  %v935 = vadd.f32 %v589, %v879
  %v936 = vadd.f32 %v503, %v793
  %v937 = vadd.f32 %v592, %v882
  %v938 = vadd.f32 %v506, %v796
  %v939 = vadd.f32 %v595, %v885
  %v940 = vadd.f32 %v509, %v799
  %v941 = vadd.f32 %v598, %v888
  %v942 = vadd.f32 %v512, %v802
  %v943 = vadd.f32 %v601, %v891
  %v944 = vadd.f32 %v515, %v805
  %v945 = vadd.f32 %v604, %v894
  %v946 = vadd.f32 %v518, %v808
  %v947 = vadd.f32 %v607, %v897
  %v948 = vadd.f32 %v521, %v811
  %v949 = vadd.f32 %v610, %v900
  %s950 = scalar_lea.vmem %s0, 24
  %v951 = vld [vmem:[%s950] sm:$0xff]
  %v952 = vld [vmem:[%s950 + $0x8] sm:$0xff]
  %v953 = vld [vmem:[%s950 + $0x10] sm:$0xff]
  %v954 = vld [vmem:[%s950 + $0x18] sm:$0xff]
  %v955 = vld [vmem:[%s950 + $0x20] sm:$0xff]
  %v956 = vld [vmem:[%s950 + $0x28] sm:$0xff]
  %v957 = vld [vmem:[%s950 + $0x30] sm:$0xff]
  %v958 = vld [vmem:[%s950 + $0x38] sm:$0xff]
  %v959 = vld [vmem:[%s950 + $0x40] sm:$0xff]
  %v960 = vld [vmem:[%s950 + $0x48] sm:$0xff]
  %v961 = vld [vmem:[%s950 + $0x50] sm:$0xff]
  %v962 = vld [vmem:[%s950 + $0x58] sm:$0xff]
  %v963 = vld [vmem:[%s950 + $0x60] sm:$0xff]
  %v964 = vld [vmem:[%s950 + $0x68] sm:$0xff]
  %v965 = vld [vmem:[%s950 + $0x70] sm:$0xff]
  %v966 = vld [vmem:[%s950 + $0x78] sm:$0xff]
  %v967 = vld [vmem:[%s950 + $0x80] sm:$0xff]
  %v968 = vld [vmem:[%s950 + $0x88] sm:$0xff]
  %v969 = vld [vmem:[%s950 + $0x90] sm:$0xff]
  %v970 = vld [vmem:[%s950 + $0x98] sm:$0xff]
  %v971 = vld [vmem:[%s950 + $0xa0] sm:$0xff]
  %v972 = vld [vmem:[%s950 + $0xa8] sm:$0xff]
  %v973 = vld [vmem:[%s950 + $0xb0] sm:$0xff]
  %v974 = vld [vmem:[%s950 + $0xb8] sm:$0xff]
  %s975 = scalar_lea.vmem %s1, 192
  %v976 = vld [vmem:[%s975] sm:$0xff]
  %v977 = vld [vmem:[%s975 + $0x8] sm:$0xff]
  %v978 = vld [vmem:[%s975 + $0x10] sm:$0xff]
  %v979 = vld [vmem:[%s975 + $0x18] sm:$0xff]
  %v980 = vld [vmem:[%s975 + $0x20] sm:$0xff]
  %v981 = vld [vmem:[%s975 + $0x28] sm:$0xff]
  %v982 = vld [vmem:[%s975 + $0x30] sm:$0xf]
  %v983 = vld [vmem:[%s975 + $0x38] sm:$0xf]
  %v985 = vsel %vm98, %v951, 0
  %v988 = vsel %vm98, %v952, 0
  %v991 = vsel %vm98, %v953, 0
  %v994 = vsel %vm98, %v954, 0
  %v997 = vsel %vm98, %v955, 0
  %v1000 = vsel %vm98, %v956, 0
  %v1003 = vsel %vm98, %v957, 0
  %v1006 = vsel %vm98, %v958, 0
  %v1009 = vsel %vm98, %v959, 0
  %v1012 = vsel %vm98, %v960, 0
  %v1015 = vsel %vm98, %v961, 0
  %v1018 = vsel %vm98, %v962, 0
  %v1021 = vsel %vm98, %v963, 0
  %v1024 = vsel %vm98, %v964, 0
  %v1027 = vsel %vm98, %v965, 0
  %v1030 = vsel %vm98, %v966, 0
  %v1033 = vsel %vm98, %v967, 0
  %v1036 = vsel %vm98, %v968, 0
  %v1039 = vsel %vm98, %v969, 0
  %v1042 = vsel %vm98, %v970, 0
  %v1045 = vsel %vm98, %v971, 0
  %v1048 = vsel %vm98, %v972, 0
  %v1051 = vsel %vm98, %v973, 0
  %v1054 = vsel %vm98, %v974, 0
  %v1057 = vsel %vm171, %v982, 0
  %v1060 = vsel %vm171, %v983, 0
  %1062 = vmatpush.msra.mxu0 0.0
  %1063 = vmatpush.msra.mxu0 0.0
  %1064 = vmatpush.msra.mxu0 0.0
  %1065 = vmatpush.msra.mxu0 0.0
  %1066 = vmatpush.msra.mxu0 0.0
  %1067 = vmatpush.msra.mxu0 0.0
  %1068 = vmatpush.msra.mxu0 0.0
  %1069 = vmatpush.msra.mxu0 0.0
  %1070 = vmatpush.msra.mxu0 0.0
  %1071 = vmatpush.msra.mxu0 0.0
  %1072 = vmatpush.msra.mxu0 0.0
  %1073 = vmatpush.msra.mxu0 0.0
  %1074 = vmatpush.msra.mxu0 %v1057
  %1075 = vmatpush.msra.mxu0 %v980
  %1076 = vmatpush.msra.mxu0 %v978
  %1077 = vmatpush.msra.mxu0 %v976
  %1078 = vmatmul.f32.gmra.mxu0 %v985
  %v1079 = vpop.f32.mrf.mxu0
  %v1080 = vadd.f32 0.0, %v1079
  %1081 = vmatmul.f32.gmra.mxu0 %v988
  %v1082 = vpop.f32.mrf.mxu0
  %v1083 = vadd.f32 0.0, %v1082
  %1084 = vmatmul.f32.gmra.mxu0 %v991
  %v1085 = vpop.f32.mrf.mxu0
  %v1086 = vadd.f32 0.0, %v1085
  %1087 = vmatmul.f32.gmra.mxu0 %v994
  %v1088 = vpop.f32.mrf.mxu0
  %v1089 = vadd.f32 0.0, %v1088
  %1090 = vmatmul.f32.gmra.mxu0 %v997
  %v1091 = vpop.f32.mrf.mxu0
  %v1092 = vadd.f32 0.0, %v1091
  %1093 = vmatmul.f32.gmra.mxu0 %v1000
  %v1094 = vpop.f32.mrf.mxu0
  %v1095 = vadd.f32 0.0, %v1094
  %1096 = vmatmul.f32.gmra.mxu0 %v1003
  %v1097 = vpop.f32.mrf.mxu0
  %v1098 = vadd.f32 0.0, %v1097
  %1099 = vmatmul.f32.gmra.mxu0 %v1006
  %v1100 = vpop.f32.mrf.mxu0
  %v1101 = vadd.f32 0.0, %v1100
  %1102 = vmatmul.f32.gmra.mxu0 %v1009
  %v1103 = vpop.f32.mrf.mxu0
  %v1104 = vadd.f32 0.0, %v1103
  %1105 = vmatmul.f32.gmra.mxu0 %v1012
  %v1106 = vpop.f32.mrf.mxu0
  %v1107 = vadd.f32 0.0, %v1106
  %1108 = vmatmul.f32.gmra.mxu0 %v1015
  %v1109 = vpop.f32.mrf.mxu0
  %v1110 = vadd.f32 0.0, %v1109
  %1111 = vmatmul.f32.gmra.mxu0 %v1018
  %v1112 = vpop.f32.mrf.mxu0
  %v1113 = vadd.f32 0.0, %v1112
  %1114 = vmatmul.f32.gmra.mxu0 %v1021
  %v1115 = vpop.f32.mrf.mxu0
  %v1116 = vadd.f32 0.0, %v1115
  %1117 = vmatmul.f32.gmra.mxu0 %v1024
  %v1118 = vpop.f32.mrf.mxu0
  %v1119 = vadd.f32 0.0, %v1118
  %1120 = vmatmul.f32.gmra.mxu0 %v1027
  %v1121 = vpop.f32.mrf.mxu0
  %v1122 = vadd.f32 0.0, %v1121
  %1123 = vmatmul.f32.gmra.mxu0 %v1030
  %v1124 = vpop.f32.mrf.mxu0
  %v1125 = vadd.f32 0.0, %v1124
  %1126 = vmatmul.f32.gmra.mxu0 %v1033
  %v1127 = vpop.f32.mrf.mxu0
  %v1128 = vadd.f32 0.0, %v1127
  %1129 = vmatmul.f32.gmra.mxu0 %v1036
  %v1130 = vpop.f32.mrf.mxu0
  %v1131 = vadd.f32 0.0, %v1130
  %1132 = vmatmul.f32.gmra.mxu0 %v1039
  %v1133 = vpop.f32.mrf.mxu0
  %v1134 = vadd.f32 0.0, %v1133
  %1135 = vmatmul.f32.gmra.mxu0 %v1042
  %v1136 = vpop.f32.mrf.mxu0
  %v1137 = vadd.f32 0.0, %v1136
  %1138 = vmatmul.f32.gmra.mxu0 %v1045
  %v1139 = vpop.f32.mrf.mxu0
  %v1140 = vadd.f32 0.0, %v1139
  %1141 = vmatmul.f32.gmra.mxu0 %v1048
  %v1142 = vpop.f32.mrf.mxu0
  %v1143 = vadd.f32 0.0, %v1142
  %1144 = vmatmul.f32.gmra.mxu0 %v1051
  %v1145 = vpop.f32.mrf.mxu0
  %v1146 = vadd.f32 0.0, %v1145
  %1147 = vmatmul.f32.gmra.mxu0 %v1054
  %v1148 = vpop.f32.mrf.mxu0
  %v1149 = vadd.f32 0.0, %v1148
  %1150 = vdwg.mxu0
  %1151 = vmatpush.msra.mxu0 0.0
  %1152 = vmatpush.msra.mxu0 0.0
  %1153 = vmatpush.msra.mxu0 0.0
  %1154 = vmatpush.msra.mxu0 0.0
  %1155 = vmatpush.msra.mxu0 0.0
  %1156 = vmatpush.msra.mxu0 0.0
  %1157 = vmatpush.msra.mxu0 0.0
  %1158 = vmatpush.msra.mxu0 0.0
  %1159 = vmatpush.msra.mxu0 0.0
  %1160 = vmatpush.msra.mxu0 0.0
  %1161 = vmatpush.msra.mxu0 0.0
  %1162 = vmatpush.msra.mxu0 0.0
  %1163 = vmatpush.msra.mxu0 %v1060
  %1164 = vmatpush.msra.mxu0 %v981
  %1165 = vmatpush.msra.mxu0 %v979
  %1166 = vmatpush.msra.mxu0 %v977
  %1167 = vmatmul.f32.gmra.mxu0 %v985
  %v1168 = vpop.f32.mrf.mxu0
  %v1169 = vadd.f32 0.0, %v1168
  %1170 = vmatmul.f32.gmra.mxu0 %v988
  %v1171 = vpop.f32.mrf.mxu0
  %v1172 = vadd.f32 0.0, %v1171
  %1173 = vmatmul.f32.gmra.mxu0 %v991
  %v1174 = vpop.f32.mrf.mxu0
  %v1175 = vadd.f32 0.0, %v1174
  %1176 = vmatmul.f32.gmra.mxu0 %v994
  %v1177 = vpop.f32.mrf.mxu0
  %v1178 = vadd.f32 0.0, %v1177
  %1179 = vmatmul.f32.gmra.mxu0 %v997
  %v1180 = vpop.f32.mrf.mxu0
  %v1181 = vadd.f32 0.0, %v1180
  %1182 = vmatmul.f32.gmra.mxu0 %v1000
  %v1183 = vpop.f32.mrf.mxu0
  %v1184 = vadd.f32 0.0, %v1183
  %1185 = vmatmul.f32.gmra.mxu0 %v1003
  %v1186 = vpop.f32.mrf.mxu0
  %v1187 = vadd.f32 0.0, %v1186
  %1188 = vmatmul.f32.gmra.mxu0 %v1006
  %v1189 = vpop.f32.mrf.mxu0
  %v1190 = vadd.f32 0.0, %v1189
  %1191 = vmatmul.f32.gmra.mxu0 %v1009
  %v1192 = vpop.f32.mrf.mxu0
  %v1193 = vadd.f32 0.0, %v1192
  %1194 = vmatmul.f32.gmra.mxu0 %v1012
  %v1195 = vpop.f32.mrf.mxu0
  %v1196 = vadd.f32 0.0, %v1195
  %1197 = vmatmul.f32.gmra.mxu0 %v1015
  %v1198 = vpop.f32.mrf.mxu0
  %v1199 = vadd.f32 0.0, %v1198
  %1200 = vmatmul.f32.gmra.mxu0 %v1018
  %v1201 = vpop.f32.mrf.mxu0
  %v1202 = vadd.f32 0.0, %v1201
  %1203 = vmatmul.f32.gmra.mxu0 %v1021
  %v1204 = vpop.f32.mrf.mxu0
  %v1205 = vadd.f32 0.0, %v1204
  %1206 = vmatmul.f32.gmra.mxu0 %v1024
  %v1207 = vpop.f32.mrf.mxu0
  %v1208 = vadd.f32 0.0, %v1207
  %1209 = vmatmul.f32.gmra.mxu0 %v1027
  %v1210 = vpop.f32.mrf.mxu0
  %v1211 = vadd.f32 0.0, %v1210
  %1212 = vmatmul.f32.gmra.mxu0 %v1030
  %v1213 = vpop.f32.mrf.mxu0
  %v1214 = vadd.f32 0.0, %v1213
  %1215 = vmatmul.f32.gmra.mxu0 %v1033
  %v1216 = vpop.f32.mrf.mxu0
  %v1217 = vadd.f32 0.0, %v1216
  %1218 = vmatmul.f32.gmra.mxu0 %v1036
  %v1219 = vpop.f32.mrf.mxu0
  %v1220 = vadd.f32 0.0, %v1219
  %1221 = vmatmul.f32.gmra.mxu0 %v1039
  %v1222 = vpop.f32.mrf.mxu0
  %v1223 = vadd.f32 0.0, %v1222
  %1224 = vmatmul.f32.gmra.mxu0 %v1042
  %v1225 = vpop.f32.mrf.mxu0
  %v1226 = vadd.f32 0.0, %v1225
  %1227 = vmatmul.f32.gmra.mxu0 %v1045
  %v1228 = vpop.f32.mrf.mxu0
  %v1229 = vadd.f32 0.0, %v1228
  %1230 = vmatmul.f32.gmra.mxu0 %v1048
  %v1231 = vpop.f32.mrf.mxu0
  %v1232 = vadd.f32 0.0, %v1231
  %1233 = vmatmul.f32.gmra.mxu0 %v1051
  %v1234 = vpop.f32.mrf.mxu0
  %v1235 = vadd.f32 0.0, %v1234
  %1236 = vmatmul.f32.gmra.mxu0 %v1054
  %v1237 = vpop.f32.mrf.mxu0
  %v1238 = vadd.f32 0.0, %v1237
  %1239 = vdwg.mxu0
  %v1240 = vadd.f32 %v902, %v1080
  %v1241 = vadd.f32 %v903, %v1169
  %v1242 = vadd.f32 %v904, %v1083
  %v1243 = vadd.f32 %v905, %v1172
  %v1244 = vadd.f32 %v906, %v1086
  %v1245 = vadd.f32 %v907, %v1175
  %v1246 = vadd.f32 %v908, %v1089
  %v1247 = vadd.f32 %v909, %v1178
  %v1248 = vadd.f32 %v910, %v1092
  %v1249 = vadd.f32 %v911, %v1181
  %v1250 = vadd.f32 %v912, %v1095
  %v1251 = vadd.f32 %v913, %v1184
  %v1252 = vadd.f32 %v914, %v1098
  %v1253 = vadd.f32 %v915, %v1187
  %v1254 = vadd.f32 %v916, %v1101
  %v1255 = vadd.f32 %v917, %v1190
  %v1256 = vadd.f32 %v918, %v1104
  %v1257 = vadd.f32 %v919, %v1193
  %v1258 = vadd.f32 %v920, %v1107
  %v1259 = vadd.f32 %v921, %v1196
  %v1260 = vadd.f32 %v922, %v1110
  %v1261 = vadd.f32 %v923, %v1199
  %v1262 = vadd.f32 %v924, %v1113
  %v1263 = vadd.f32 %v925, %v1202
  %v1264 = vadd.f32 %v926, %v1116
  %v1265 = vadd.f32 %v927, %v1205
  %v1266 = vadd.f32 %v928, %v1119
  %v1267 = vadd.f32 %v929, %v1208
  %v1268 = vadd.f32 %v930, %v1122
  %v1269 = vadd.f32 %v931, %v1211
  %v1270 = vadd.f32 %v932, %v1125
  %v1271 = vadd.f32 %v933, %v1214
  %v1272 = vadd.f32 %v934, %v1128
  %v1273 = vadd.f32 %v935, %v1217
  %v1274 = vadd.f32 %v936, %v1131
  %v1275 = vadd.f32 %v937, %v1220
  %v1276 = vadd.f32 %v938, %v1134
  %v1277 = vadd.f32 %v939, %v1223
  %v1278 = vadd.f32 %v940, %v1137
  %v1279 = vadd.f32 %v941, %v1226
  %v1280 = vadd.f32 %v942, %v1140
  %v1281 = vadd.f32 %v943, %v1229
  %v1282 = vadd.f32 %v944, %v1143
  %v1283 = vadd.f32 %v945, %v1232
  %v1284 = vadd.f32 %v946, %v1146
  %v1285 = vadd.f32 %v947, %v1235
  %v1286 = vadd.f32 %v948, %v1149
  %v1287 = vadd.f32 %v949, %v1238
  %s1288 = scalar_lea.vmem %s0, 32
  %v1289 = vld [vmem:[%s1288] sm:$0xff]
  %v1290 = vld [vmem:[%s1288 + $0x8] sm:$0xff]
  %v1291 = vld [vmem:[%s1288 + $0x10] sm:$0xff]
  %v1292 = vld [vmem:[%s1288 + $0x18] sm:$0xff]
  %v1293 = vld [vmem:[%s1288 + $0x20] sm:$0xff]
  %v1294 = vld [vmem:[%s1288 + $0x28] sm:$0xff]
  %v1295 = vld [vmem:[%s1288 + $0x30] sm:$0xff]
  %v1296 = vld [vmem:[%s1288 + $0x38] sm:$0xff]
  %v1297 = vld [vmem:[%s1288 + $0x40] sm:$0xff]
  %v1298 = vld [vmem:[%s1288 + $0x48] sm:$0xff]
  %v1299 = vld [vmem:[%s1288 + $0x50] sm:$0xff]
  %v1300 = vld [vmem:[%s1288 + $0x58] sm:$0xff]
  %v1301 = vld [vmem:[%s1288 + $0x60] sm:$0xff]
  %v1302 = vld [vmem:[%s1288 + $0x68] sm:$0xff]
  %v1303 = vld [vmem:[%s1288 + $0x70] sm:$0xff]
  %v1304 = vld [vmem:[%s1288 + $0x78] sm:$0xff]
  %v1305 = vld [vmem:[%s1288 + $0x80] sm:$0xff]
  %v1306 = vld [vmem:[%s1288 + $0x88] sm:$0xff]
  %v1307 = vld [vmem:[%s1288 + $0x90] sm:$0xff]
  %v1308 = vld [vmem:[%s1288 + $0x98] sm:$0xff]
  %v1309 = vld [vmem:[%s1288 + $0xa0] sm:$0xff]
  %v1310 = vld [vmem:[%s1288 + $0xa8] sm:$0xff]
  %v1311 = vld [vmem:[%s1288 + $0xb0] sm:$0xff]
  %v1312 = vld [vmem:[%s1288 + $0xb8] sm:$0xff]
  %s1313 = scalar_lea.vmem %s1, 256
  %v1314 = vld [vmem:[%s1313] sm:$0xff]
  %v1315 = vld [vmem:[%s1313 + $0x8] sm:$0xff]
  %v1316 = vld [vmem:[%s1313 + $0x10] sm:$0xff]
  %v1317 = vld [vmem:[%s1313 + $0x18] sm:$0xff]
  %v1318 = vld [vmem:[%s1313 + $0x20] sm:$0xff]
  %v1319 = vld [vmem:[%s1313 + $0x28] sm:$0xff]
  %v1320 = vld [vmem:[%s1313 + $0x30] sm:$0xf]
  %v1321 = vld [vmem:[%s1313 + $0x38] sm:$0xf]
  %v1323 = vsel %vm98, %v1289, 0
  %v1326 = vsel %vm98, %v1290, 0
  %v1329 = vsel %vm98, %v1291, 0
  %v1332 = vsel %vm98, %v1292, 0
  %v1335 = vsel %vm98, %v1293, 0
  %v1338 = vsel %vm98, %v1294, 0
  %v1341 = vsel %vm98, %v1295, 0
  %v1344 = vsel %vm98, %v1296, 0
  %v1347 = vsel %vm98, %v1297, 0
  %v1350 = vsel %vm98, %v1298, 0
  %v1353 = vsel %vm98, %v1299, 0
  %v1356 = vsel %vm98, %v1300, 0
  %v1359 = vsel %vm98, %v1301, 0
  %v1362 = vsel %vm98, %v1302, 0
  %v1365 = vsel %vm98, %v1303, 0
  %v1368 = vsel %vm98, %v1304, 0
  %v1371 = vsel %vm98, %v1305, 0
  %v1374 = vsel %vm98, %v1306, 0
  %v1377 = vsel %vm98, %v1307, 0
  %v1380 = vsel %vm98, %v1308, 0
  %v1383 = vsel %vm98, %v1309, 0
  %v1386 = vsel %vm98, %v1310, 0
  %v1389 = vsel %vm98, %v1311, 0
  %v1392 = vsel %vm98, %v1312, 0
  %v1395 = vsel %vm171, %v1320, 0
  %v1398 = vsel %vm171, %v1321, 0
  %1400 = vmatpush.msra.mxu0 0.0
  %1401 = vmatpush.msra.mxu0 0.0
  %1402 = vmatpush.msra.mxu0 0.0
  %1403 = vmatpush.msra.mxu0 0.0
  %1404 = vmatpush.msra.mxu0 0.0
  %1405 = vmatpush.msra.mxu0 0.0
  %1406 = vmatpush.msra.mxu0 0.0
  %1407 = vmatpush.msra.mxu0 0.0
  %1408 = vmatpush.msra.mxu0 0.0
  %1409 = vmatpush.msra.mxu0 0.0
  %1410 = vmatpush.msra.mxu0 0.0
  %1411 = vmatpush.msra.mxu0 0.0
  %1412 = vmatpush.msra.mxu0 %v1395
  %1413 = vmatpush.msra.mxu0 %v1318
  %1414 = vmatpush.msra.mxu0 %v1316
  %1415 = vmatpush.msra.mxu0 %v1314
  %1416 = vmatmul.f32.gmra.mxu0 %v1323
  %v1417 = vpop.f32.mrf.mxu0
  %v1418 = vadd.f32 0.0, %v1417
  %1419 = vmatmul.f32.gmra.mxu0 %v1326
  %v1420 = vpop.f32.mrf.mxu0
  %v1421 = vadd.f32 0.0, %v1420
  %1422 = vmatmul.f32.gmra.mxu0 %v1329
  %v1423 = vpop.f32.mrf.mxu0
  %v1424 = vadd.f32 0.0, %v1423
  %1425 = vmatmul.f32.gmra.mxu0 %v1332
  %v1426 = vpop.f32.mrf.mxu0
  %v1427 = vadd.f32 0.0, %v1426
  %1428 = vmatmul.f32.gmra.mxu0 %v1335
  %v1429 = vpop.f32.mrf.mxu0
  %v1430 = vadd.f32 0.0, %v1429
  %1431 = vmatmul.f32.gmra.mxu0 %v1338
  %v1432 = vpop.f32.mrf.mxu0
  %v1433 = vadd.f32 0.0, %v1432
  %1434 = vmatmul.f32.gmra.mxu0 %v1341
  %v1435 = vpop.f32.mrf.mxu0
  %v1436 = vadd.f32 0.0, %v1435
  %1437 = vmatmul.f32.gmra.mxu0 %v1344
  %v1438 = vpop.f32.mrf.mxu0
  %v1439 = vadd.f32 0.0, %v1438
  %1440 = vmatmul.f32.gmra.mxu0 %v1347
  %v1441 = vpop.f32.mrf.mxu0
  %v1442 = vadd.f32 0.0, %v1441
  %1443 = vmatmul.f32.gmra.mxu0 %v1350
  %v1444 = vpop.f32.mrf.mxu0
  %v1445 = vadd.f32 0.0, %v1444
  %1446 = vmatmul.f32.gmra.mxu0 %v1353
  %v1447 = vpop.f32.mrf.mxu0
  %v1448 = vadd.f32 0.0, %v1447
  %1449 = vmatmul.f32.gmra.mxu0 %v1356
  %v1450 = vpop.f32.mrf.mxu0
  %v1451 = vadd.f32 0.0, %v1450
  %1452 = vmatmul.f32.gmra.mxu0 %v1359
  %v1453 = vpop.f32.mrf.mxu0
  %v1454 = vadd.f32 0.0, %v1453
  %1455 = vmatmul.f32.gmra.mxu0 %v1362
  %v1456 = vpop.f32.mrf.mxu0
  %v1457 = vadd.f32 0.0, %v1456
  %1458 = vmatmul.f32.gmra.mxu0 %v1365
  %v1459 = vpop.f32.mrf.mxu0
  %v1460 = vadd.f32 0.0, %v1459
  %1461 = vmatmul.f32.gmra.mxu0 %v1368
  %v1462 = vpop.f32.mrf.mxu0
  %v1463 = vadd.f32 0.0, %v1462
  %1464 = vmatmul.f32.gmra.mxu0 %v1371
  %v1465 = vpop.f32.mrf.mxu0
  %v1466 = vadd.f32 0.0, %v1465
  %1467 = vmatmul.f32.gmra.mxu0 %v1374
  %v1468 = vpop.f32.mrf.mxu0
  %v1469 = vadd.f32 0.0, %v1468
  %1470 = vmatmul.f32.gmra.mxu0 %v1377
  %v1471 = vpop.f32.mrf.mxu0
  %v1472 = vadd.f32 0.0, %v1471
  %1473 = vmatmul.f32.gmra.mxu0 %v1380
  %v1474 = vpop.f32.mrf.mxu0
  %v1475 = vadd.f32 0.0, %v1474
  %1476 = vmatmul.f32.gmra.mxu0 %v1383
  %v1477 = vpop.f32.mrf.mxu0
  %v1478 = vadd.f32 0.0, %v1477
  %1479 = vmatmul.f32.gmra.mxu0 %v1386
  %v1480 = vpop.f32.mrf.mxu0
  %v1481 = vadd.f32 0.0, %v1480
  %1482 = vmatmul.f32.gmra.mxu0 %v1389
  %v1483 = vpop.f32.mrf.mxu0
  %v1484 = vadd.f32 0.0, %v1483
  %1485 = vmatmul.f32.gmra.mxu0 %v1392
  %v1486 = vpop.f32.mrf.mxu0
  %v1487 = vadd.f32 0.0, %v1486
  %1488 = vdwg.mxu0
  %1489 = vmatpush.msra.mxu0 0.0
  %1490 = vmatpush.msra.mxu0 0.0
  %1491 = vmatpush.msra.mxu0 0.0
  %1492 = vmatpush.msra.mxu0 0.0
  %1493 = vmatpush.msra.mxu0 0.0
  %1494 = vmatpush.msra.mxu0 0.0
  %1495 = vmatpush.msra.mxu0 0.0
  %1496 = vmatpush.msra.mxu0 0.0
  %1497 = vmatpush.msra.mxu0 0.0
  %1498 = vmatpush.msra.mxu0 0.0
  %1499 = vmatpush.msra.mxu0 0.0
  %1500 = vmatpush.msra.mxu0 0.0
  %1501 = vmatpush.msra.mxu0 %v1398
  %1502 = vmatpush.msra.mxu0 %v1319
  %1503 = vmatpush.msra.mxu0 %v1317
  %1504 = vmatpush.msra.mxu0 %v1315
  %1505 = vmatmul.f32.gmra.mxu0 %v1323
  %v1506 = vpop.f32.mrf.mxu0
  %v1507 = vadd.f32 0.0, %v1506
  %1508 = vmatmul.f32.gmra.mxu0 %v1326
  %v1509 = vpop.f32.mrf.mxu0
  %v1510 = vadd.f32 0.0, %v1509
  %1511 = vmatmul.f32.gmra.mxu0 %v1329
  %v1512 = vpop.f32.mrf.mxu0
  %v1513 = vadd.f32 0.0, %v1512
  %1514 = vmatmul.f32.gmra.mxu0 %v1332
  %v1515 = vpop.f32.mrf.mxu0
  %v1516 = vadd.f32 0.0, %v1515
  %1517 = vmatmul.f32.gmra.mxu0 %v1335
  %v1518 = vpop.f32.mrf.mxu0
  %v1519 = vadd.f32 0.0, %v1518
  %1520 = vmatmul.f32.gmra.mxu0 %v1338
  %v1521 = vpop.f32.mrf.mxu0
  %v1522 = vadd.f32 0.0, %v1521
  %1523 = vmatmul.f32.gmra.mxu0 %v1341
  %v1524 = vpop.f32.mrf.mxu0
  %v1525 = vadd.f32 0.0, %v1524
  %1526 = vmatmul.f32.gmra.mxu0 %v1344
  %v1527 = vpop.f32.mrf.mxu0
  %v1528 = vadd.f32 0.0, %v1527
  %1529 = vmatmul.f32.gmra.mxu0 %v1347
  %v1530 = vpop.f32.mrf.mxu0
  %v1531 = vadd.f32 0.0, %v1530
  %1532 = vmatmul.f32.gmra.mxu0 %v1350
  %v1533 = vpop.f32.mrf.mxu0
  %v1534 = vadd.f32 0.0, %v1533
  %1535 = vmatmul.f32.gmra.mxu0 %v1353
  %v1536 = vpop.f32.mrf.mxu0
  %v1537 = vadd.f32 0.0, %v1536
  %1538 = vmatmul.f32.gmra.mxu0 %v1356
  %v1539 = vpop.f32.mrf.mxu0
  %v1540 = vadd.f32 0.0, %v1539
  %1541 = vmatmul.f32.gmra.mxu0 %v1359
  %v1542 = vpop.f32.mrf.mxu0
  %v1543 = vadd.f32 0.0, %v1542
  %1544 = vmatmul.f32.gmra.mxu0 %v1362
  %v1545 = vpop.f32.mrf.mxu0
  %v1546 = vadd.f32 0.0, %v1545
  %1547 = vmatmul.f32.gmra.mxu0 %v1365
  %v1548 = vpop.f32.mrf.mxu0
  %v1549 = vadd.f32 0.0, %v1548
  %1550 = vmatmul.f32.gmra.mxu0 %v1368
  %v1551 = vpop.f32.mrf.mxu0
  %v1552 = vadd.f32 0.0, %v1551
  %1553 = vmatmul.f32.gmra.mxu0 %v1371
  %v1554 = vpop.f32.mrf.mxu0
  %v1555 = vadd.f32 0.0, %v1554
  %1556 = vmatmul.f32.gmra.mxu0 %v1374
  %v1557 = vpop.f32.mrf.mxu0
  %v1558 = vadd.f32 0.0, %v1557
  %1559 = vmatmul.f32.gmra.mxu0 %v1377
  %v1560 = vpop.f32.mrf.mxu0
  %v1561 = vadd.f32 0.0, %v1560
  %1562 = vmatmul.f32.gmra.mxu0 %v1380
  %v1563 = vpop.f32.mrf.mxu0
  %v1564 = vadd.f32 0.0, %v1563
  %1565 = vmatmul.f32.gmra.mxu0 %v1383
  %v1566 = vpop.f32.mrf.mxu0
  %v1567 = vadd.f32 0.0, %v1566
  %1568 = vmatmul.f32.gmra.mxu0 %v1386
  %v1569 = vpop.f32.mrf.mxu0
  %v1570 = vadd.f32 0.0, %v1569
  %1571 = vmatmul.f32.gmra.mxu0 %v1389
  %v1572 = vpop.f32.mrf.mxu0
  %v1573 = vadd.f32 0.0, %v1572
  %1574 = vmatmul.f32.gmra.mxu0 %v1392
  %v1575 = vpop.f32.mrf.mxu0
  %v1576 = vadd.f32 0.0, %v1575
  %1577 = vdwg.mxu0
  %v1578 = vadd.f32 %v1240, %v1418
  %v1579 = vadd.f32 %v1241, %v1507
  %v1580 = vadd.f32 %v1242, %v1421
  %v1581 = vadd.f32 %v1243, %v1510
  %v1582 = vadd.f32 %v1244, %v1424
  %v1583 = vadd.f32 %v1245, %v1513
  %v1584 = vadd.f32 %v1246, %v1427
  %v1585 = vadd.f32 %v1247, %v1516
  %v1586 = vadd.f32 %v1248, %v1430
  %v1587 = vadd.f32 %v1249, %v1519
  %v1588 = vadd.f32 %v1250, %v1433
  %v1589 = vadd.f32 %v1251, %v1522
  %v1590 = vadd.f32 %v1252, %v1436
  %v1591 = vadd.f32 %v1253, %v1525
  %v1592 = vadd.f32 %v1254, %v1439
  %v1593 = vadd.f32 %v1255, %v1528
  %v1594 = vadd.f32 %v1256, %v1442
  %v1595 = vadd.f32 %v1257, %v1531
  %v1596 = vadd.f32 %v1258, %v1445
  %v1597 = vadd.f32 %v1259, %v1534
  %v1598 = vadd.f32 %v1260, %v1448
  %v1599 = vadd.f32 %v1261, %v1537
  %v1600 = vadd.f32 %v1262, %v1451
  %v1601 = vadd.f32 %v1263, %v1540
  %v1602 = vadd.f32 %v1264, %v1454
  %v1603 = vadd.f32 %v1265, %v1543
  %v1604 = vadd.f32 %v1266, %v1457
  %v1605 = vadd.f32 %v1267, %v1546
  %v1606 = vadd.f32 %v1268, %v1460
  %v1607 = vadd.f32 %v1269, %v1549
  %v1608 = vadd.f32 %v1270, %v1463
  %v1609 = vadd.f32 %v1271, %v1552
  %v1610 = vadd.f32 %v1272, %v1466
  %v1611 = vadd.f32 %v1273, %v1555
  %v1612 = vadd.f32 %v1274, %v1469
  %v1613 = vadd.f32 %v1275, %v1558
  %v1614 = vadd.f32 %v1276, %v1472
  %v1615 = vadd.f32 %v1277, %v1561
  %v1616 = vadd.f32 %v1278, %v1475
  %v1617 = vadd.f32 %v1279, %v1564
  %v1618 = vadd.f32 %v1280, %v1478
  %v1619 = vadd.f32 %v1281, %v1567
  %v1620 = vadd.f32 %v1282, %v1481
  %v1621 = vadd.f32 %v1283, %v1570
  %v1622 = vadd.f32 %v1284, %v1484
  %v1623 = vadd.f32 %v1285, %v1573
  %v1624 = vadd.f32 %v1286, %v1487
  %v1625 = vadd.f32 %v1287, %v1576
  %v1626 = vld [vmem:[%s2] sm:$0x3]
  %v1628 = vperm.slane %v1626, 0
  %v1629 = vperm.slane %v1626, 1
  %v1632 = vadd.f32 %v1578, %v1628
  %v1633 = vadd.f32 %v1579, %v1629
  %v1634 = vadd.f32 %v1580, %v1628
  %v1635 = vadd.f32 %v1581, %v1629
  %v1636 = vadd.f32 %v1582, %v1628
  %v1637 = vadd.f32 %v1583, %v1629
  %v1638 = vadd.f32 %v1584, %v1628
  %v1639 = vadd.f32 %v1585, %v1629
  %v1640 = vadd.f32 %v1586, %v1628
  %v1641 = vadd.f32 %v1587, %v1629
  %v1642 = vadd.f32 %v1588, %v1628
  %v1643 = vadd.f32 %v1589, %v1629
  %v1644 = vadd.f32 %v1590, %v1628
  %v1645 = vadd.f32 %v1591, %v1629
  %v1646 = vadd.f32 %v1592, %v1628
  %v1647 = vadd.f32 %v1593, %v1629
  %v1648 = vadd.f32 %v1594, %v1628
  %v1649 = vadd.f32 %v1595, %v1629
  %v1650 = vadd.f32 %v1596, %v1628
  %v1651 = vadd.f32 %v1597, %v1629
  %v1652 = vadd.f32 %v1598, %v1628
  %v1653 = vadd.f32 %v1599, %v1629
  %v1654 = vadd.f32 %v1600, %v1628
  %v1655 = vadd.f32 %v1601, %v1629
  %v1656 = vadd.f32 %v1602, %v1628
  %v1657 = vadd.f32 %v1603, %v1629
  %v1658 = vadd.f32 %v1604, %v1628
  %v1659 = vadd.f32 %v1605, %v1629
  %v1660 = vadd.f32 %v1606, %v1628
  %v1661 = vadd.f32 %v1607, %v1629
  %v1662 = vadd.f32 %v1608, %v1628
  %v1663 = vadd.f32 %v1609, %v1629
  %v1664 = vadd.f32 %v1610, %v1628
  %v1665 = vadd.f32 %v1611, %v1629
  %v1666 = vadd.f32 %v1612, %v1628
  %v1667 = vadd.f32 %v1613, %v1629
  %v1668 = vadd.f32 %v1614, %v1628
  %v1669 = vadd.f32 %v1615, %v1629
  %v1670 = vadd.f32 %v1616, %v1628
  %v1671 = vadd.f32 %v1617, %v1629
  %v1672 = vadd.f32 %v1618, %v1628
  %v1673 = vadd.f32 %v1619, %v1629
  %v1674 = vadd.f32 %v1620, %v1628
  %v1675 = vadd.f32 %v1621, %v1629
  %v1676 = vadd.f32 %v1622, %v1628
  %v1677 = vadd.f32 %v1623, %v1629
  %v1678 = vadd.f32 %v1624, %v1628
  %v1679 = vadd.f32 %v1625, %v1629
  %v1680 = vmax.f32 %v1632, %v1634
  %v1681 = vmax.f32 %v1633, %v1635
  %v1682 = vmax.f32 %v1636, %v1638
  %v1683 = vmax.f32 %v1637, %v1639
  %v1684 = vmax.f32 %v1640, %v1642
  %v1685 = vmax.f32 %v1641, %v1643
  %v1686 = vmax.f32 %v1644, %v1646
  %v1687 = vmax.f32 %v1645, %v1647
  %v1688 = vmax.f32 %v1648, %v1650
  %v1689 = vmax.f32 %v1649, %v1651
  %v1690 = vmax.f32 %v1652, %v1654
  %v1691 = vmax.f32 %v1653, %v1655
  %v1692 = vmax.f32 %v1656, %v1658
  %v1693 = vmax.f32 %v1657, %v1659
  %v1694 = vmax.f32 %v1660, %v1662
  %v1695 = vmax.f32 %v1661, %v1663
  %v1696 = vmax.f32 %v1664, %v1666
  %v1697 = vmax.f32 %v1665, %v1667
  %v1698 = vmax.f32 %v1668, %v1670
  %v1699 = vmax.f32 %v1669, %v1671
  %v1700 = vmax.f32 %v1672, %v1674
  %v1701 = vmax.f32 %v1673, %v1675
  %v1702 = vmax.f32 %v1676, %v1678
  %v1703 = vmax.f32 %v1677, %v1679
  %1728 = vrot.lane.b32.xlu0 %v1680, 118
  %v1729 = vpop.permute.xlu0 %1728
  %1730 = vrot.lane.b32.xlu0 %v1681, 118
  %v1731 = vpop.permute.xlu0 %1730
  %1732 = vrot.lane.b32.xlu0 %v1682, 118
  %v1733 = vpop.permute.xlu0 %1732
  %1734 = vrot.lane.b32.xlu0 %v1683, 118
  %v1735 = vpop.permute.xlu0 %1734
  %1736 = vrot.lane.b32.xlu0 %v1684, 118
  %v1737 = vpop.permute.xlu0 %1736
  %1738 = vrot.lane.b32.xlu0 %v1685, 118
  %v1739 = vpop.permute.xlu0 %1738
  %1740 = vrot.lane.b32.xlu0 %v1686, 118
  %v1741 = vpop.permute.xlu0 %1740
  %1742 = vrot.lane.b32.xlu0 %v1687, 118
  %v1743 = vpop.permute.xlu0 %1742
  %1744 = vrot.lane.b32.xlu0 %v1688, 118
  %v1745 = vpop.permute.xlu0 %1744
  %1746 = vrot.lane.b32.xlu0 %v1689, 118
  %v1747 = vpop.permute.xlu0 %1746
  %1748 = vrot.lane.b32.xlu0 %v1690, 118
  %v1749 = vpop.permute.xlu0 %1748
  %1750 = vrot.lane.b32.xlu0 %v1691, 118
  %v1751 = vpop.permute.xlu0 %1750
  %1752 = vrot.lane.b32.xlu0 %v1692, 118
  %v1753 = vpop.permute.xlu0 %1752
  %1754 = vrot.lane.b32.xlu0 %v1693, 118
  %v1755 = vpop.permute.xlu0 %1754
  %1756 = vrot.lane.b32.xlu0 %v1694, 118
  %v1757 = vpop.permute.xlu0 %1756
  %1758 = vrot.lane.b32.xlu0 %v1695, 118
  %v1759 = vpop.permute.xlu0 %1758
  %1760 = vrot.lane.b32.xlu0 %v1696, 118
  %v1761 = vpop.permute.xlu0 %1760
  %1762 = vrot.lane.b32.xlu0 %v1697, 118
  %v1763 = vpop.permute.xlu0 %1762
  %1764 = vrot.lane.b32.xlu0 %v1698, 118
  %v1765 = vpop.permute.xlu0 %1764
  %1766 = vrot.lane.b32.xlu0 %v1699, 118
  %v1767 = vpop.permute.xlu0 %1766
  %1768 = vrot.lane.b32.xlu0 %v1700, 118
  %v1769 = vpop.permute.xlu0 %1768
  %1770 = vrot.lane.b32.xlu0 %v1701, 118
  %v1771 = vpop.permute.xlu0 %1770
  %1772 = vrot.lane.b32.xlu0 %v1702, 118
  %v1773 = vpop.permute.xlu0 %1772
  %1774 = vrot.lane.b32.xlu0 %v1703, 118
  %v1775 = vpop.permute.xlu0 %1774
  %vm1776 = vcmask 965632
  %v1777 = vsel %vm1776, %v1729, %v1731
  %v1778 = vsel %vm1776, %v1733, %v1735
  %v1779 = vsel %vm1776, %v1737, %v1739
  %v1780 = vsel %vm1776, %v1741, %v1743
  %v1781 = vsel %vm1776, %v1745, %v1747
  %v1782 = vsel %vm1776, %v1749, %v1751
  %v1783 = vsel %vm1776, %v1753, %v1755
  %v1784 = vsel %vm1776, %v1757, %v1759
  %v1785 = vsel %vm1776, %v1761, %v1763
  %v1786 = vsel %vm1776, %v1765, %v1767
  %v1787 = vsel %vm1776, %v1769, %v1771
  %v1788 = vsel %vm1776, %v1773, %v1775
  %v1813 = vmax.f32 %v1680, %v1777
  %v1814 = vmax.f32 %v1681, %v1731
  %v1815 = vmax.f32 %v1682, %v1778
  %v1816 = vmax.f32 %v1683, %v1735
  %v1817 = vmax.f32 %v1684, %v1779
  %v1818 = vmax.f32 %v1685, %v1739
  %v1819 = vmax.f32 %v1686, %v1780
  %v1820 = vmax.f32 %v1687, %v1743
  %v1821 = vmax.f32 %v1688, %v1781
  %v1822 = vmax.f32 %v1689, %v1747
  %v1823 = vmax.f32 %v1690, %v1782
  %v1824 = vmax.f32 %v1691, %v1751
  %v1825 = vmax.f32 %v1692, %v1783
  %v1826 = vmax.f32 %v1693, %v1755
  %v1827 = vmax.f32 %v1694, %v1784
  %v1828 = vmax.f32 %v1695, %v1759
  %v1829 = vmax.f32 %v1696, %v1785
  %v1830 = vmax.f32 %v1697, %v1763
  %v1831 = vmax.f32 %v1698, %v1786
  %v1832 = vmax.f32 %v1699, %v1767
  %v1833 = vmax.f32 %v1700, %v1787
  %v1834 = vmax.f32 %v1701, %v1771
  %v1835 = vmax.f32 %v1702, %v1788
  %v1836 = vmax.f32 %v1703, %v1775
  %v1837 = vmax.f32 %v1813, 0.0
  %v1838 = vmax.f32 %v1814, 0.0
  %v1839 = vmax.f32 %v1815, 0.0
  %v1840 = vmax.f32 %v1816, 0.0
  %v1841 = vmax.f32 %v1817, 0.0
  %v1842 = vmax.f32 %v1818, 0.0
  %v1843 = vmax.f32 %v1819, 0.0
  %v1844 = vmax.f32 %v1820, 0.0
  %v1845 = vmax.f32 %v1821, 0.0
  %v1846 = vmax.f32 %v1822, 0.0
  %v1847 = vmax.f32 %v1823, 0.0
  %v1848 = vmax.f32 %v1824, 0.0
  %v1849 = vmax.f32 %v1825, 0.0
  %v1850 = vmax.f32 %v1826, 0.0
  %v1851 = vmax.f32 %v1827, 0.0
  %v1852 = vmax.f32 %v1828, 0.0
  %v1853 = vmax.f32 %v1829, 0.0
  %v1854 = vmax.f32 %v1830, 0.0
  %v1855 = vmax.f32 %v1831, 0.0
  %v1856 = vmax.f32 %v1832, 0.0
  %v1857 = vmax.f32 %v1833, 0.0
  %v1858 = vmax.f32 %v1834, 0.0
  %v1859 = vmax.f32 %v1835, 0.0
  %v1860 = vmax.f32 %v1836, 0.0
  %v1861 = vld [vmem:[%s3] sm:$0xff]
  %v1862 = vld [vmem:[%s3 + $0x8] sm:$0xff]
  %v1863 = vld [vmem:[%s3 + $0x10] sm:$0xff]
  %v1864 = vld [vmem:[%s3 + $0x18] sm:$0xff]
  %v1865 = vld [vmem:[%s3 + $0x20] sm:$0xff]
  %v1866 = vld [vmem:[%s3 + $0x28] sm:$0xff]
  %v1867 = vld [vmem:[%s3 + $0x30] sm:$0xff]
  %v1868 = vld [vmem:[%s3 + $0x38] sm:$0xff]
  %v1869 = vld [vmem:[%s3 + $0x40] sm:$0xff]
  %v1870 = vld [vmem:[%s3 + $0x48] sm:$0xff]
  %v1871 = vld [vmem:[%s3 + $0x50] sm:$0xff]
  %v1872 = vld [vmem:[%s3 + $0x58] sm:$0xff]
  %v1873 = vld [vmem:[%s3 + $0x60] sm:$0xff]
  %v1874 = vld [vmem:[%s3 + $0x68] sm:$0xff]
  %v1875 = vld [vmem:[%s3 + $0x70] sm:$0xff]
  %v1876 = vld [vmem:[%s3 + $0x78] sm:$0xff]
  %v1877 = vld [vmem:[%s3 + $0x80] sm:$0xff]
  %v1878 = vld [vmem:[%s3 + $0x88] sm:$0xff]
  %v1879 = vld [vmem:[%s3 + $0x90] sm:$0xff]
  %v1880 = vld [vmem:[%s3 + $0x98] sm:$0xff]
  %v1881 = vld [vmem:[%s3 + $0xa0] sm:$0xff]
  %v1882 = vld [vmem:[%s3 + $0xa8] sm:$0xff]
  %v1883 = vld [vmem:[%s3 + $0xb0] sm:$0xff]
  %v1884 = vld [vmem:[%s3 + $0xb8] sm:$0xff]
  %v1885 = vld [vmem:[%s3 + $0xc0] sm:$0xff]
  %v1886 = vld [vmem:[%s3 + $0xc8] sm:$0xff]
  %v1887 = vld [vmem:[%s3 + $0xd0] sm:$0xff]
  %v1888 = vld [vmem:[%s3 + $0xd8] sm:$0xff]
  %v1889 = vld [vmem:[%s3 + $0xe0] sm:$0xff]
  %v1890 = vld [vmem:[%s3 + $0xe8] sm:$0xff]
  %v1891 = vld [vmem:[%s3 + $0xf0] sm:$0xff]
  %v1892 = vld [vmem:[%s3 + $0xf8] sm:$0xff]
  %v1893 = vld [vmem:[%s3 + $0x100] sm:$0xff]
  %v1894 = vld [vmem:[%s3 + $0x108] sm:$0xff]
  %v1895 = vld [vmem:[%s3 + $0x110] sm:$0xff]
  %v1896 = vld [vmem:[%s3 + $0x118] sm:$0xff]
  %v1897 = vld [vmem:[%s3 + $0x120] sm:$0xff]
  %v1898 = vld [vmem:[%s3 + $0x128] sm:$0xff]
  %v1899 = vld [vmem:[%s3 + $0x130] sm:$0xff]
  %v1900 = vld [vmem:[%s3 + $0x138] sm:$0xff]
  %v1901 = vld [vmem:[%s3 + $0x140] sm:$0xff]
  %v1902 = vld [vmem:[%s3 + $0x148] sm:$0xff]
  %v1903 = vld [vmem:[%s3 + $0x150] sm:$0xff]
  %v1904 = vld [vmem:[%s3 + $0x158] sm:$0xff]
  %v1905 = vld [vmem:[%s3 + $0x160] sm:$0xff]
  %v1906 = vld [vmem:[%s3 + $0x168] sm:$0xff]
  %v1907 = vld [vmem:[%s3 + $0x170] sm:$0xff]
  %v1908 = vld [vmem:[%s3 + $0x178] sm:$0xff]
  %v1909 = vld [vmem:[%s3 + $0x180] sm:$0xff]
  %v1910 = vld [vmem:[%s3 + $0x188] sm:$0xff]
  %v1911 = vld [vmem:[%s3 + $0x190] sm:$0xff]
  %v1912 = vld [vmem:[%s3 + $0x198] sm:$0xff]
  %v1913 = vld [vmem:[%s3 + $0x1a0] sm:$0xff]
  %v1914 = vld [vmem:[%s3 + $0x1a8] sm:$0xff]
  %v1915 = vld [vmem:[%s3 + $0x1b0] sm:$0xff]
  %v1916 = vld [vmem:[%s3 + $0x1b8] sm:$0xff]
  %v1917 = vld [vmem:[%s3 + $0x1c0] sm:$0x3f]
  %v1918 = vld [vmem:[%s3 + $0x1c8] sm:$0x3f]
  %s1919 = scalar_lea.vmem %s3, 464
  %v1920 = vld [vmem:[%s1919] sm:$0xff]
  %v1921 = vld [vmem:[%s1919 + $0x8] sm:$0xff]
  %v1922 = vld [vmem:[%s1919 + $0x10] sm:$0xff]
  %v1923 = vld [vmem:[%s1919 + $0x18] sm:$0xff]
  %v1924 = vld [vmem:[%s1919 + $0x20] sm:$0xff]
  %v1925 = vld [vmem:[%s1919 + $0x28] sm:$0xff]
  %v1926 = vld [vmem:[%s1919 + $0x30] sm:$0xff]
  %v1927 = vld [vmem:[%s1919 + $0x38] sm:$0xff]
  %v1928 = vld [vmem:[%s1919 + $0x40] sm:$0xff]
  %v1929 = vld [vmem:[%s1919 + $0x48] sm:$0xff]
  %v1930 = vld [vmem:[%s1919 + $0x50] sm:$0xff]
  %v1931 = vld [vmem:[%s1919 + $0x58] sm:$0xff]
  %v1932 = vld [vmem:[%s1919 + $0x60] sm:$0xff]
  %v1933 = vld [vmem:[%s1919 + $0x68] sm:$0xff]
  %v1934 = vld [vmem:[%s1919 + $0x70] sm:$0xff]
  %v1935 = vld [vmem:[%s1919 + $0x78] sm:$0xff]
  %v1936 = vld [vmem:[%s1919 + $0x80] sm:$0xff]
  %v1937 = vld [vmem:[%s1919 + $0x88] sm:$0xff]
  %v1938 = vld [vmem:[%s1919 + $0x90] sm:$0xff]
  %v1939 = vld [vmem:[%s1919 + $0x98] sm:$0xff]
  %v1940 = vld [vmem:[%s1919 + $0xa0] sm:$0xff]
  %v1941 = vld [vmem:[%s1919 + $0xa8] sm:$0xff]
  %v1942 = vld [vmem:[%s1919 + $0xb0] sm:$0xff]
  %v1943 = vld [vmem:[%s1919 + $0xb8] sm:$0xff]
  %v1944 = vld [vmem:[%s1919 + $0xc0] sm:$0xff]
  %v1945 = vld [vmem:[%s1919 + $0xc8] sm:$0xff]
  %v1946 = vld [vmem:[%s1919 + $0xd0] sm:$0xff]
  %v1947 = vld [vmem:[%s1919 + $0xd8] sm:$0xff]
  %v1948 = vld [vmem:[%s1919 + $0xe0] sm:$0xff]
  %v1949 = vld [vmem:[%s1919 + $0xe8] sm:$0xff]
  %v1950 = vld [vmem:[%s1919 + $0xf0] sm:$0xff]
  %v1951 = vld [vmem:[%s1919 + $0xf8] sm:$0xff]
  %v1952 = vld [vmem:[%s1919 + $0x100] sm:$0xff]
  %v1953 = vld [vmem:[%s1919 + $0x108] sm:$0xff]
  %v1954 = vld [vmem:[%s1919 + $0x110] sm:$0xff]
  %v1955 = vld [vmem:[%s1919 + $0x118] sm:$0xff]
  %v1956 = vld [vmem:[%s1919 + $0x120] sm:$0xff]
  %v1957 = vld [vmem:[%s1919 + $0x128] sm:$0xff]
  %v1958 = vld [vmem:[%s1919 + $0x130] sm:$0xff]
  %v1959 = vld [vmem:[%s1919 + $0x138] sm:$0xff]
  %v1960 = vld [vmem:[%s1919 + $0x140] sm:$0xff]
  %v1961 = vld [vmem:[%s1919 + $0x148] sm:$0xff]
  %v1962 = vld [vmem:[%s1919 + $0x150] sm:$0xff]
  %v1963 = vld [vmem:[%s1919 + $0x158] sm:$0xff]
  %v1964 = vld [vmem:[%s1919 + $0x160] sm:$0xff]
  %v1965 = vld [vmem:[%s1919 + $0x168] sm:$0xff]
  %v1966 = vld [vmem:[%s1919 + $0x170] sm:$0xff]
  %v1967 = vld [vmem:[%s1919 + $0x178] sm:$0xff]
  %v1968 = vld [vmem:[%s1919 + $0x180] sm:$0xff]
  %v1969 = vld [vmem:[%s1919 + $0x188] sm:$0xff]
  %v1970 = vld [vmem:[%s1919 + $0x190] sm:$0xff]
  %v1971 = vld [vmem:[%s1919 + $0x198] sm:$0xff]
  %v1972 = vld [vmem:[%s1919 + $0x1a0] sm:$0xff]
  %v1973 = vld [vmem:[%s1919 + $0x1a8] sm:$0xff]
  %v1974 = vld [vmem:[%s1919 + $0x1b0] sm:$0xff]
  %v1975 = vld [vmem:[%s1919 + $0x1b8] sm:$0xff]
  %v1976 = vld [vmem:[%s1919 + $0x1c0] sm:$0x3f]
  %v1977 = vld [vmem:[%s1919 + $0x1c8] sm:$0x3f]
  %vm1978 = vcmask 834560
  %v1980 = vsel %vm1978, %v1840, 0
  %v1983 = vsel %vm1978, %v1842, 0
  %v1986 = vsel %vm1978, %v1844, 0
  %v1989 = vsel %vm1978, %v1846, 0
  %v1992 = vsel %vm1978, %v1848, 0
  %v1995 = vsel %vm1978, %v1850, 0
  %v1998 = vsel %vm1978, %v1852, 0
  %v2001 = vsel %vm1978, %v1854, 0
  %vm2003 = vcmask 1045504
  %v2005 = vsel %vm2003, %v1976, 0
  %v2008 = vsel %vm2003, %v1977, 0
  %2010 = vmatpush.msra.mxu0 %v1950
  %2011 = vmatpush.msra.mxu0 %v1948
  %2012 = vmatpush.msra.mxu0 %v1946
  %2013 = vmatpush.msra.mxu0 %v1944
  %2014 = vmatpush.msra.mxu0 %v1942
  %2015 = vmatpush.msra.mxu0 %v1940
  %2016 = vmatpush.msra.mxu0 %v1938
  %2017 = vmatpush.msra.mxu0 %v1936
  %2018 = vmatpush.msra.mxu0 %v1934
  %2019 = vmatpush.msra.mxu0 %v1932
  %2020 = vmatpush.msra.mxu0 %v1930
  %2021 = vmatpush.msra.mxu0 %v1928
  %2022 = vmatpush.msra.mxu0 %v1926
  %2023 = vmatpush.msra.mxu0 %v1924
  %2024 = vmatpush.msra.mxu0 %v1922
  %2025 = vmatpush.msra.mxu0 %v1920
  %2026 = vmatmul.f32.gmra.mxu0 %v1839
  %v2027 = vpop.f32.mrf.mxu0
  %v2028 = vadd.f32 0.0, %v2027
  %2029 = vmatmul.f32.gmra.mxu0 %v1841
  %v2030 = vpop.f32.mrf.mxu0
  %v2031 = vadd.f32 0.0, %v2030
  %2032 = vmatmul.f32.gmra.mxu0 %v1843
  %v2033 = vpop.f32.mrf.mxu0
  %v2034 = vadd.f32 0.0, %v2033
  %2035 = vmatmul.f32.gmra.mxu0 %v1845
  %v2036 = vpop.f32.mrf.mxu0
  %v2037 = vadd.f32 0.0, %v2036
  %2038 = vmatmul.f32.gmra.mxu0 %v1847
  %v2039 = vpop.f32.mrf.mxu0
  %v2040 = vadd.f32 0.0, %v2039
  %2041 = vmatmul.f32.gmra.mxu0 %v1849
  %v2042 = vpop.f32.mrf.mxu0
  %v2043 = vadd.f32 0.0, %v2042
  %2044 = vmatmul.f32.gmra.mxu0 %v1851
  %v2045 = vpop.f32.mrf.mxu0
  %v2046 = vadd.f32 0.0, %v2045
  %2047 = vmatmul.f32.gmra.mxu0 %v1853
  %v2048 = vpop.f32.mrf.mxu0
  %v2049 = vadd.f32 0.0, %v2048
  %2050 = vdwg.mxu0
  %2051 = vmatpush.msra.mxu0 0.0
  %2052 = vmatpush.msra.mxu0 0.0
  %2053 = vmatpush.msra.mxu0 0.0
  %2054 = vmatpush.msra.mxu0 %v2005
  %2055 = vmatpush.msra.mxu0 %v1974
  %2056 = vmatpush.msra.mxu0 %v1972
  %2057 = vmatpush.msra.mxu0 %v1970
  %2058 = vmatpush.msra.mxu0 %v1968
  %2059 = vmatpush.msra.mxu0 %v1966
  %2060 = vmatpush.msra.mxu0 %v1964
  %2061 = vmatpush.msra.mxu0 %v1962
  %2062 = vmatpush.msra.mxu0 %v1960
  %2063 = vmatpush.msra.mxu0 %v1958
  %2064 = vmatpush.msra.mxu0 %v1956
  %2065 = vmatpush.msra.mxu0 %v1954
  %2066 = vmatpush.msra.mxu0 %v1952
  %2067 = vmatmul.f32.gmra.mxu0 %v1980
  %v2068 = vpop.f32.mrf.mxu0
  %v2069 = vadd.f32 %v2028, %v2068
  %2070 = vmatmul.f32.gmra.mxu0 %v1983
  %v2071 = vpop.f32.mrf.mxu0
  %v2072 = vadd.f32 %v2031, %v2071
  %2073 = vmatmul.f32.gmra.mxu0 %v1986
  %v2074 = vpop.f32.mrf.mxu0
  %v2075 = vadd.f32 %v2034, %v2074
  %2076 = vmatmul.f32.gmra.mxu0 %v1989
  %v2077 = vpop.f32.mrf.mxu0
  %v2078 = vadd.f32 %v2037, %v2077
  %2079 = vmatmul.f32.gmra.mxu0 %v1992
  %v2080 = vpop.f32.mrf.mxu0
  %v2081 = vadd.f32 %v2040, %v2080
  %2082 = vmatmul.f32.gmra.mxu0 %v1995
  %v2083 = vpop.f32.mrf.mxu0
  %v2084 = vadd.f32 %v2043, %v2083
  %2085 = vmatmul.f32.gmra.mxu0 %v1998
  %v2086 = vpop.f32.mrf.mxu0
  %v2087 = vadd.f32 %v2046, %v2086
  %2088 = vmatmul.f32.gmra.mxu0 %v2001
  %v2089 = vpop.f32.mrf.mxu0
  %v2090 = vadd.f32 %v2049, %v2089
  %2091 = vdwg.mxu0
  %2092 = vmatpush.msra.mxu0 %v1951
  %2093 = vmatpush.msra.mxu0 %v1949
  %2094 = vmatpush.msra.mxu0 %v1947
  %2095 = vmatpush.msra.mxu0 %v1945
  %2096 = vmatpush.msra.mxu0 %v1943
  %2097 = vmatpush.msra.mxu0 %v1941
  %2098 = vmatpush.msra.mxu0 %v1939
  %2099 = vmatpush.msra.mxu0 %v1937
  %2100 = vmatpush.msra.mxu0 %v1935
  %2101 = vmatpush.msra.mxu0 %v1933
  %2102 = vmatpush.msra.mxu0 %v1931
  %2103 = vmatpush.msra.mxu0 %v1929
  %2104 = vmatpush.msra.mxu0 %v1927
  %2105 = vmatpush.msra.mxu0 %v1925
  %2106 = vmatpush.msra.mxu0 %v1923
  %2107 = vmatpush.msra.mxu0 %v1921
  %2108 = vmatmul.f32.gmra.mxu0 %v1839
  %v2109 = vpop.f32.mrf.mxu0
  %v2110 = vadd.f32 0.0, %v2109
  %2111 = vmatmul.f32.gmra.mxu0 %v1841
  %v2112 = vpop.f32.mrf.mxu0
  %v2113 = vadd.f32 0.0, %v2112
  %2114 = vmatmul.f32.gmra.mxu0 %v1843
  %v2115 = vpop.f32.mrf.mxu0
  %v2116 = vadd.f32 0.0, %v2115
  %2117 = vmatmul.f32.gmra.mxu0 %v1845
  %v2118 = vpop.f32.mrf.mxu0
  %v2119 = vadd.f32 0.0, %v2118
  %2120 = vmatmul.f32.gmra.mxu0 %v1847
  %v2121 = vpop.f32.mrf.mxu0
  %v2122 = vadd.f32 0.0, %v2121
  %2123 = vmatmul.f32.gmra.mxu0 %v1849
  %v2124 = vpop.f32.mrf.mxu0
  %v2125 = vadd.f32 0.0, %v2124
  %2126 = vmatmul.f32.gmra.mxu0 %v1851
  %v2127 = vpop.f32.mrf.mxu0
  %v2128 = vadd.f32 0.0, %v2127
  %2129 = vmatmul.f32.gmra.mxu0 %v1853
  %v2130 = vpop.f32.mrf.mxu0
  %v2131 = vadd.f32 0.0, %v2130
  %2132 = vdwg.mxu0
  %2133 = vmatpush.msra.mxu0 0.0
  %2134 = vmatpush.msra.mxu0 0.0
  %2135 = vmatpush.msra.mxu0 0.0
  %2136 = vmatpush.msra.mxu0 %v2008
  %2137 = vmatpush.msra.mxu0 %v1975
  %2138 = vmatpush.msra.mxu0 %v1973
  %2139 = vmatpush.msra.mxu0 %v1971
  %2140 = vmatpush.msra.mxu0 %v1969
  %2141 = vmatpush.msra.mxu0 %v1967
  %2142 = vmatpush.msra.mxu0 %v1965
  %2143 = vmatpush.msra.mxu0 %v1963
  %2144 = vmatpush.msra.mxu0 %v1961
  %2145 = vmatpush.msra.mxu0 %v1959
  %2146 = vmatpush.msra.mxu0 %v1957
  %2147 = vmatpush.msra.mxu0 %v1955
  %2148 = vmatpush.msra.mxu0 %v1953
  %2149 = vmatmul.f32.gmra.mxu0 %v1980
  %v2150 = vpop.f32.mrf.mxu0
  %v2151 = vadd.f32 %v2110, %v2150
  %2152 = vmatmul.f32.gmra.mxu0 %v1983
  %v2153 = vpop.f32.mrf.mxu0
  %v2154 = vadd.f32 %v2113, %v2153
  %2155 = vmatmul.f32.gmra.mxu0 %v1986
  %v2156 = vpop.f32.mrf.mxu0
  %v2157 = vadd.f32 %v2116, %v2156
  %2158 = vmatmul.f32.gmra.mxu0 %v1989
  %v2159 = vpop.f32.mrf.mxu0
  %v2160 = vadd.f32 %v2119, %v2159
  %2161 = vmatmul.f32.gmra.mxu0 %v1992
  %v2162 = vpop.f32.mrf.mxu0
  %v2163 = vadd.f32 %v2122, %v2162
  %2164 = vmatmul.f32.gmra.mxu0 %v1995
  %v2165 = vpop.f32.mrf.mxu0
  %v2166 = vadd.f32 %v2125, %v2165
  %2167 = vmatmul.f32.gmra.mxu0 %v1998
  %v2168 = vpop.f32.mrf.mxu0
  %v2169 = vadd.f32 %v2128, %v2168
  %2170 = vmatmul.f32.gmra.mxu0 %v2001
  %v2171 = vpop.f32.mrf.mxu0
  %v2172 = vadd.f32 %v2131, %v2171
  %2173 = vdwg.mxu0
  %v2175 = vsel %vm1978, %v1838, 0
  %v2178 = vsel %vm2003, %v1917, 0
  %v2181 = vsel %vm2003, %v1918, 0
  %2183 = vmatpush.msra.mxu0 %v1891
  %2184 = vmatpush.msra.mxu0 %v1889
  %2185 = vmatpush.msra.mxu0 %v1887
  %2186 = vmatpush.msra.mxu0 %v1885
  %2187 = vmatpush.msra.mxu0 %v1883
  %2188 = vmatpush.msra.mxu0 %v1881
  %2189 = vmatpush.msra.mxu0 %v1879
  %2190 = vmatpush.msra.mxu0 %v1877
  %2191 = vmatpush.msra.mxu0 %v1875
  %2192 = vmatpush.msra.mxu0 %v1873
  %2193 = vmatpush.msra.mxu0 %v1871
  %2194 = vmatpush.msra.mxu0 %v1869
  %2195 = vmatpush.msra.mxu0 %v1867
  %2196 = vmatpush.msra.mxu0 %v1865
  %2197 = vmatpush.msra.mxu0 %v1863
  %2198 = vmatpush.msra.mxu0 %v1861
  %2199 = vmatmul.f32.gmra.mxu0 %v1837
  %v2200 = vpop.f32.mrf.mxu0
  %v2201 = vadd.f32 %v2069, %v2200
  %2202 = vmatmul.f32.gmra.mxu0 %v1839
  %v2203 = vpop.f32.mrf.mxu0
  %v2204 = vadd.f32 %v2072, %v2203
  %2205 = vmatmul.f32.gmra.mxu0 %v1841
  %v2206 = vpop.f32.mrf.mxu0
  %v2207 = vadd.f32 %v2075, %v2206
  %2208 = vmatmul.f32.gmra.mxu0 %v1843
  %v2209 = vpop.f32.mrf.mxu0
  %v2210 = vadd.f32 %v2078, %v2209
  %2211 = vmatmul.f32.gmra.mxu0 %v1845
  %v2212 = vpop.f32.mrf.mxu0
  %v2213 = vadd.f32 %v2081, %v2212
  %2214 = vmatmul.f32.gmra.mxu0 %v1847
  %v2215 = vpop.f32.mrf.mxu0
  %v2216 = vadd.f32 %v2084, %v2215
  %2217 = vmatmul.f32.gmra.mxu0 %v1849
  %v2218 = vpop.f32.mrf.mxu0
  %v2219 = vadd.f32 %v2087, %v2218
  %2220 = vmatmul.f32.gmra.mxu0 %v1851
  %v2221 = vpop.f32.mrf.mxu0
  %v2222 = vadd.f32 %v2090, %v2221
  %2223 = vdwg.mxu0
  %2224 = vmatpush.msra.mxu0 0.0
  %2225 = vmatpush.msra.mxu0 0.0
  %2226 = vmatpush.msra.mxu0 0.0
  %2227 = vmatpush.msra.mxu0 %v2178
  %2228 = vmatpush.msra.mxu0 %v1915
  %2229 = vmatpush.msra.mxu0 %v1913
  %2230 = vmatpush.msra.mxu0 %v1911
  %2231 = vmatpush.msra.mxu0 %v1909
  %2232 = vmatpush.msra.mxu0 %v1907
  %2233 = vmatpush.msra.mxu0 %v1905
  %2234 = vmatpush.msra.mxu0 %v1903
  %2235 = vmatpush.msra.mxu0 %v1901
  %2236 = vmatpush.msra.mxu0 %v1899
  %2237 = vmatpush.msra.mxu0 %v1897
  %2238 = vmatpush.msra.mxu0 %v1895
  %2239 = vmatpush.msra.mxu0 %v1893
  %2240 = vmatmul.f32.gmra.mxu0 %v2175
  %v2241 = vpop.f32.mrf.mxu0
  %v2242 = vadd.f32 %v2201, %v2241
  %2243 = vmatmul.f32.gmra.mxu0 %v1980
  %v2244 = vpop.f32.mrf.mxu0
  %v2245 = vadd.f32 %v2204, %v2244
  %2246 = vmatmul.f32.gmra.mxu0 %v1983
  %v2247 = vpop.f32.mrf.mxu0
  %v2248 = vadd.f32 %v2207, %v2247
  %2249 = vmatmul.f32.gmra.mxu0 %v1986
  %v2250 = vpop.f32.mrf.mxu0
  %v2251 = vadd.f32 %v2210, %v2250
  %2252 = vmatmul.f32.gmra.mxu0 %v1989
  %v2253 = vpop.f32.mrf.mxu0
  %v2254 = vadd.f32 %v2213, %v2253
  %2255 = vmatmul.f32.gmra.mxu0 %v1992
  %v2256 = vpop.f32.mrf.mxu0
  %v2257 = vadd.f32 %v2216, %v2256
  %2258 = vmatmul.f32.gmra.mxu0 %v1995
  %v2259 = vpop.f32.mrf.mxu0
  %v2260 = vadd.f32 %v2219, %v2259
  %2261 = vmatmul.f32.gmra.mxu0 %v1998
  %v2262 = vpop.f32.mrf.mxu0
  %v2263 = vadd.f32 %v2222, %v2262
  %2264 = vdwg.mxu0
  %2265 = vmatpush.msra.mxu0 %v1892
  %2266 = vmatpush.msra.mxu0 %v1890
  %2267 = vmatpush.msra.mxu0 %v1888
  %2268 = vmatpush.msra.mxu0 %v1886
  %2269 = vmatpush.msra.mxu0 %v1884
  %2270 = vmatpush.msra.mxu0 %v1882
  %2271 = vmatpush.msra.mxu0 %v1880
  %2272 = vmatpush.msra.mxu0 %v1878
  %2273 = vmatpush.msra.mxu0 %v1876
  %2274 = vmatpush.msra.mxu0 %v1874
  %2275 = vmatpush.msra.mxu0 %v1872
  %2276 = vmatpush.msra.mxu0 %v1870
  %2277 = vmatpush.msra.mxu0 %v1868
  %2278 = vmatpush.msra.mxu0 %v1866
  %2279 = vmatpush.msra.mxu0 %v1864
  %2280 = vmatpush.msra.mxu0 %v1862
  %2281 = vmatmul.f32.gmra.mxu0 %v1837
  %v2282 = vpop.f32.mrf.mxu0
  %v2283 = vadd.f32 %v2151, %v2282
  %2284 = vmatmul.f32.gmra.mxu0 %v1839
  %v2285 = vpop.f32.mrf.mxu0
  %v2286 = vadd.f32 %v2154, %v2285
  %2287 = vmatmul.f32.gmra.mxu0 %v1841
  %v2288 = vpop.f32.mrf.mxu0
  %v2289 = vadd.f32 %v2157, %v2288
  %2290 = vmatmul.f32.gmra.mxu0 %v1843
  %v2291 = vpop.f32.mrf.mxu0
  %v2292 = vadd.f32 %v2160, %v2291
  %2293 = vmatmul.f32.gmra.mxu0 %v1845
  %v2294 = vpop.f32.mrf.mxu0
  %v2295 = vadd.f32 %v2163, %v2294
  %2296 = vmatmul.f32.gmra.mxu0 %v1847
  %v2297 = vpop.f32.mrf.mxu0
  %v2298 = vadd.f32 %v2166, %v2297
  %2299 = vmatmul.f32.gmra.mxu0 %v1849
  %v2300 = vpop.f32.mrf.mxu0
  %v2301 = vadd.f32 %v2169, %v2300
  %2302 = vmatmul.f32.gmra.mxu0 %v1851
  %v2303 = vpop.f32.mrf.mxu0
  %v2304 = vadd.f32 %v2172, %v2303
  %2305 = vdwg.mxu0
  %2306 = vmatpush.msra.mxu0 0.0
  %2307 = vmatpush.msra.mxu0 0.0
  %2308 = vmatpush.msra.mxu0 0.0
  %2309 = vmatpush.msra.mxu0 %v2181
  %2310 = vmatpush.msra.mxu0 %v1916
  %2311 = vmatpush.msra.mxu0 %v1914
  %2312 = vmatpush.msra.mxu0 %v1912
  %2313 = vmatpush.msra.mxu0 %v1910
  %2314 = vmatpush.msra.mxu0 %v1908
  %2315 = vmatpush.msra.mxu0 %v1906
  %2316 = vmatpush.msra.mxu0 %v1904
  %2317 = vmatpush.msra.mxu0 %v1902
  %2318 = vmatpush.msra.mxu0 %v1900
  %2319 = vmatpush.msra.mxu0 %v1898
  %2320 = vmatpush.msra.mxu0 %v1896
  %2321 = vmatpush.msra.mxu0 %v1894
  %2322 = vmatmul.f32.gmra.mxu0 %v2175
  %v2323 = vpop.f32.mrf.mxu0
  %v2324 = vadd.f32 %v2283, %v2323
  %2325 = vmatmul.f32.gmra.mxu0 %v1980
  %v2326 = vpop.f32.mrf.mxu0
  %v2327 = vadd.f32 %v2286, %v2326
  %2328 = vmatmul.f32.gmra.mxu0 %v1983
  %v2329 = vpop.f32.mrf.mxu0
  %v2330 = vadd.f32 %v2289, %v2329
  %2331 = vmatmul.f32.gmra.mxu0 %v1986
  %v2332 = vpop.f32.mrf.mxu0
  %v2333 = vadd.f32 %v2292, %v2332
  %2334 = vmatmul.f32.gmra.mxu0 %v1989
  %v2335 = vpop.f32.mrf.mxu0
  %v2336 = vadd.f32 %v2295, %v2335
  %2337 = vmatmul.f32.gmra.mxu0 %v1992
  %v2338 = vpop.f32.mrf.mxu0
  %v2339 = vadd.f32 %v2298, %v2338
  %2340 = vmatmul.f32.gmra.mxu0 %v1995
  %v2341 = vpop.f32.mrf.mxu0
  %v2342 = vadd.f32 %v2301, %v2341
  %2343 = vmatmul.f32.gmra.mxu0 %v1998
  %v2344 = vpop.f32.mrf.mxu0
  %v2345 = vadd.f32 %v2304, %v2344
  %2346 = vdwg.mxu0
  %s2347 = scalar_lea.vmem %s3, 928
  %v2348 = vld [vmem:[%s2347] sm:$0xff]
  %v2349 = vld [vmem:[%s2347 + $0x8] sm:$0xff]
  %v2350 = vld [vmem:[%s2347 + $0x10] sm:$0xff]
  %v2351 = vld [vmem:[%s2347 + $0x18] sm:$0xff]
  %v2352 = vld [vmem:[%s2347 + $0x20] sm:$0xff]
  %v2353 = vld [vmem:[%s2347 + $0x28] sm:$0xff]
  %v2354 = vld [vmem:[%s2347 + $0x30] sm:$0xff]
  %v2355 = vld [vmem:[%s2347 + $0x38] sm:$0xff]
  %v2356 = vld [vmem:[%s2347 + $0x40] sm:$0xff]
  %v2357 = vld [vmem:[%s2347 + $0x48] sm:$0xff]
  %v2358 = vld [vmem:[%s2347 + $0x50] sm:$0xff]
  %v2359 = vld [vmem:[%s2347 + $0x58] sm:$0xff]
  %v2360 = vld [vmem:[%s2347 + $0x60] sm:$0xff]
  %v2361 = vld [vmem:[%s2347 + $0x68] sm:$0xff]
  %v2362 = vld [vmem:[%s2347 + $0x70] sm:$0xff]
  %v2363 = vld [vmem:[%s2347 + $0x78] sm:$0xff]
  %v2364 = vld [vmem:[%s2347 + $0x80] sm:$0xff]
  %v2365 = vld [vmem:[%s2347 + $0x88] sm:$0xff]
  %v2366 = vld [vmem:[%s2347 + $0x90] sm:$0xff]
  %v2367 = vld [vmem:[%s2347 + $0x98] sm:$0xff]
  %v2368 = vld [vmem:[%s2347 + $0xa0] sm:$0xff]
  %v2369 = vld [vmem:[%s2347 + $0xa8] sm:$0xff]
  %v2370 = vld [vmem:[%s2347 + $0xb0] sm:$0xff]
  %v2371 = vld [vmem:[%s2347 + $0xb8] sm:$0xff]
  %v2372 = vld [vmem:[%s2347 + $0xc0] sm:$0xff]
  %v2373 = vld [vmem:[%s2347 + $0xc8] sm:$0xff]
  %v2374 = vld [vmem:[%s2347 + $0xd0] sm:$0xff]
  %v2375 = vld [vmem:[%s2347 + $0xd8] sm:$0xff]
  %v2376 = vld [vmem:[%s2347 + $0xe0] sm:$0xff]
  %v2377 = vld [vmem:[%s2347 + $0xe8] sm:$0xff]
  %v2378 = vld [vmem:[%s2347 + $0xf0] sm:$0xff]
  %v2379 = vld [vmem:[%s2347 + $0xf8] sm:$0xff]
  %v2380 = vld [vmem:[%s2347 + $0x100] sm:$0xff]
  %v2381 = vld [vmem:[%s2347 + $0x108] sm:$0xff]
  %v2382 = vld [vmem:[%s2347 + $0x110] sm:$0xff]
  %v2383 = vld [vmem:[%s2347 + $0x118] sm:$0xff]
  %v2384 = vld [vmem:[%s2347 + $0x120] sm:$0xff]
  %v2385 = vld [vmem:[%s2347 + $0x128] sm:$0xff]
  %v2386 = vld [vmem:[%s2347 + $0x130] sm:$0xff]
  %v2387 = vld [vmem:[%s2347 + $0x138] sm:$0xff]
  %v2388 = vld [vmem:[%s2347 + $0x140] sm:$0xff]
  %v2389 = vld [vmem:[%s2347 + $0x148] sm:$0xff]
  %v2390 = vld [vmem:[%s2347 + $0x150] sm:$0xff]
  %v2391 = vld [vmem:[%s2347 + $0x158] sm:$0xff]
  %v2392 = vld [vmem:[%s2347 + $0x160] sm:$0xff]
  %v2393 = vld [vmem:[%s2347 + $0x168] sm:$0xff]
  %v2394 = vld [vmem:[%s2347 + $0x170] sm:$0xff]
  %v2395 = vld [vmem:[%s2347 + $0x178] sm:$0xff]
  %v2396 = vld [vmem:[%s2347 + $0x180] sm:$0xff]
  %v2397 = vld [vmem:[%s2347 + $0x188] sm:$0xff]
  %v2398 = vld [vmem:[%s2347 + $0x190] sm:$0xff]
  %v2399 = vld [vmem:[%s2347 + $0x198] sm:$0xff]
  %v2400 = vld [vmem:[%s2347 + $0x1a0] sm:$0xff]
  %v2401 = vld [vmem:[%s2347 + $0x1a8] sm:$0xff]
  %v2402 = vld [vmem:[%s2347 + $0x1b0] sm:$0xff]
  %v2403 = vld [vmem:[%s2347 + $0x1b8] sm:$0xff]
  %v2404 = vld [vmem:[%s2347 + $0x1c0] sm:$0x3f]
  %v2405 = vld [vmem:[%s2347 + $0x1c8] sm:$0x3f]
  %v2407 = vsel %vm1978, %v1856, 0
  %v2410 = vsel %vm2003, %v2404, 0
  %v2413 = vsel %vm2003, %v2405, 0
  %2415 = vmatpush.msra.mxu0 %v2378
  %2416 = vmatpush.msra.mxu0 %v2376
  %2417 = vmatpush.msra.mxu0 %v2374
  %2418 = vmatpush.msra.mxu0 %v2372
  %2419 = vmatpush.msra.mxu0 %v2370
  %2420 = vmatpush.msra.mxu0 %v2368
  %2421 = vmatpush.msra.mxu0 %v2366
  %2422 = vmatpush.msra.mxu0 %v2364
  %2423 = vmatpush.msra.mxu0 %v2362
  %2424 = vmatpush.msra.mxu0 %v2360
  %2425 = vmatpush.msra.mxu0 %v2358
  %2426 = vmatpush.msra.mxu0 %v2356
  %2427 = vmatpush.msra.mxu0 %v2354
  %2428 = vmatpush.msra.mxu0 %v2352
  %2429 = vmatpush.msra.mxu0 %v2350
  %2430 = vmatpush.msra.mxu0 %v2348
  %2431 = vmatmul.f32.gmra.mxu0 %v1841
  %v2432 = vpop.f32.mrf.mxu0
  %v2433 = vadd.f32 0.0, %v2432
  %2434 = vmatmul.f32.gmra.mxu0 %v1843
  %v2435 = vpop.f32.mrf.mxu0
  %v2436 = vadd.f32 0.0, %v2435
  %2437 = vmatmul.f32.gmra.mxu0 %v1845
  %v2438 = vpop.f32.mrf.mxu0
  %v2439 = vadd.f32 0.0, %v2438
  %2440 = vmatmul.f32.gmra.mxu0 %v1847
  %v2441 = vpop.f32.mrf.mxu0
  %v2442 = vadd.f32 0.0, %v2441
  %2443 = vmatmul.f32.gmra.mxu0 %v1849
  %v2444 = vpop.f32.mrf.mxu0
  %v2445 = vadd.f32 0.0, %v2444
  %2446 = vmatmul.f32.gmra.mxu0 %v1851
  %v2447 = vpop.f32.mrf.mxu0
  %v2448 = vadd.f32 0.0, %v2447
  %2449 = vmatmul.f32.gmra.mxu0 %v1853
  %v2450 = vpop.f32.mrf.mxu0
  %v2451 = vadd.f32 0.0, %v2450
  %2452 = vmatmul.f32.gmra.mxu0 %v1855
  %v2453 = vpop.f32.mrf.mxu0
  %v2454 = vadd.f32 0.0, %v2453
  %2455 = vdwg.mxu0
  %2456 = vmatpush.msra.mxu0 0.0
  %2457 = vmatpush.msra.mxu0 0.0
  %2458 = vmatpush.msra.mxu0 0.0
  %2459 = vmatpush.msra.mxu0 %v2410
  %2460 = vmatpush.msra.mxu0 %v2402
  %2461 = vmatpush.msra.mxu0 %v2400
  %2462 = vmatpush.msra.mxu0 %v2398
  %2463 = vmatpush.msra.mxu0 %v2396
  %2464 = vmatpush.msra.mxu0 %v2394
  %2465 = vmatpush.msra.mxu0 %v2392
  %2466 = vmatpush.msra.mxu0 %v2390
  %2467 = vmatpush.msra.mxu0 %v2388
  %2468 = vmatpush.msra.mxu0 %v2386
  %2469 = vmatpush.msra.mxu0 %v2384
  %2470 = vmatpush.msra.mxu0 %v2382
  %2471 = vmatpush.msra.mxu0 %v2380
  %2472 = vmatmul.f32.gmra.mxu0 %v1983
  %v2473 = vpop.f32.mrf.mxu0
  %v2474 = vadd.f32 %v2433, %v2473
  %2475 = vmatmul.f32.gmra.mxu0 %v1986
  %v2476 = vpop.f32.mrf.mxu0
  %v2477 = vadd.f32 %v2436, %v2476
  %2478 = vmatmul.f32.gmra.mxu0 %v1989
  %v2479 = vpop.f32.mrf.mxu0
  %v2480 = vadd.f32 %v2439, %v2479
  %2481 = vmatmul.f32.gmra.mxu0 %v1992
  %v2482 = vpop.f32.mrf.mxu0
  %v2483 = vadd.f32 %v2442, %v2482
  %2484 = vmatmul.f32.gmra.mxu0 %v1995
  %v2485 = vpop.f32.mrf.mxu0
  %v2486 = vadd.f32 %v2445, %v2485
  %2487 = vmatmul.f32.gmra.mxu0 %v1998
  %v2488 = vpop.f32.mrf.mxu0
  %v2489 = vadd.f32 %v2448, %v2488
  %2490 = vmatmul.f32.gmra.mxu0 %v2001
  %v2491 = vpop.f32.mrf.mxu0
  %v2492 = vadd.f32 %v2451, %v2491
  %2493 = vmatmul.f32.gmra.mxu0 %v2407
  %v2494 = vpop.f32.mrf.mxu0
  %v2495 = vadd.f32 %v2454, %v2494
  %2496 = vdwg.mxu0
  %2497 = vmatpush.msra.mxu0 %v2379
  %2498 = vmatpush.msra.mxu0 %v2377
  %2499 = vmatpush.msra.mxu0 %v2375
  %2500 = vmatpush.msra.mxu0 %v2373
  %2501 = vmatpush.msra.mxu0 %v2371
  %2502 = vmatpush.msra.mxu0 %v2369
  %2503 = vmatpush.msra.mxu0 %v2367
  %2504 = vmatpush.msra.mxu0 %v2365
  %2505 = vmatpush.msra.mxu0 %v2363
  %2506 = vmatpush.msra.mxu0 %v2361
  %2507 = vmatpush.msra.mxu0 %v2359
  %2508 = vmatpush.msra.mxu0 %v2357
  %2509 = vmatpush.msra.mxu0 %v2355
  %2510 = vmatpush.msra.mxu0 %v2353
  %2511 = vmatpush.msra.mxu0 %v2351
  %2512 = vmatpush.msra.mxu0 %v2349
  %2513 = vmatmul.f32.gmra.mxu0 %v1841
  %v2514 = vpop.f32.mrf.mxu0
  %v2515 = vadd.f32 0.0, %v2514
  %2516 = vmatmul.f32.gmra.mxu0 %v1843
  %v2517 = vpop.f32.mrf.mxu0
  %v2518 = vadd.f32 0.0, %v2517
  %2519 = vmatmul.f32.gmra.mxu0 %v1845
  %v2520 = vpop.f32.mrf.mxu0
  %v2521 = vadd.f32 0.0, %v2520
  %2522 = vmatmul.f32.gmra.mxu0 %v1847
  %v2523 = vpop.f32.mrf.mxu0
  %v2524 = vadd.f32 0.0, %v2523
  %2525 = vmatmul.f32.gmra.mxu0 %v1849
  %v2526 = vpop.f32.mrf.mxu0
  %v2527 = vadd.f32 0.0, %v2526
  %2528 = vmatmul.f32.gmra.mxu0 %v1851
  %v2529 = vpop.f32.mrf.mxu0
  %v2530 = vadd.f32 0.0, %v2529
  %2531 = vmatmul.f32.gmra.mxu0 %v1853
  %v2532 = vpop.f32.mrf.mxu0
  %v2533 = vadd.f32 0.0, %v2532
  %2534 = vmatmul.f32.gmra.mxu0 %v1855
  %v2535 = vpop.f32.mrf.mxu0
  %v2536 = vadd.f32 0.0, %v2535
  %2537 = vdwg.mxu0
  %2538 = vmatpush.msra.mxu0 0.0
  %2539 = vmatpush.msra.mxu0 0.0
  %2540 = vmatpush.msra.mxu0 0.0
  %2541 = vmatpush.msra.mxu0 %v2413
  %2542 = vmatpush.msra.mxu0 %v2403
  %2543 = vmatpush.msra.mxu0 %v2401
  %2544 = vmatpush.msra.mxu0 %v2399
  %2545 = vmatpush.msra.mxu0 %v2397
  %2546 = vmatpush.msra.mxu0 %v2395
  %2547 = vmatpush.msra.mxu0 %v2393
  %2548 = vmatpush.msra.mxu0 %v2391
  %2549 = vmatpush.msra.mxu0 %v2389
  %2550 = vmatpush.msra.mxu0 %v2387
  %2551 = vmatpush.msra.mxu0 %v2385
  %2552 = vmatpush.msra.mxu0 %v2383
  %2553 = vmatpush.msra.mxu0 %v2381
  %2554 = vmatmul.f32.gmra.mxu0 %v1983
  %v2555 = vpop.f32.mrf.mxu0
  %v2556 = vadd.f32 %v2515, %v2555
  %2557 = vmatmul.f32.gmra.mxu0 %v1986
  %v2558 = vpop.f32.mrf.mxu0
  %v2559 = vadd.f32 %v2518, %v2558
  %2560 = vmatmul.f32.gmra.mxu0 %v1989
  %v2561 = vpop.f32.mrf.mxu0
  %v2562 = vadd.f32 %v2521, %v2561
  %2563 = vmatmul.f32.gmra.mxu0 %v1992
  %v2564 = vpop.f32.mrf.mxu0
  %v2565 = vadd.f32 %v2524, %v2564
  %2566 = vmatmul.f32.gmra.mxu0 %v1995
  %v2567 = vpop.f32.mrf.mxu0
  %v2568 = vadd.f32 %v2527, %v2567
  %2569 = vmatmul.f32.gmra.mxu0 %v1998
  %v2570 = vpop.f32.mrf.mxu0
  %v2571 = vadd.f32 %v2530, %v2570
  %2572 = vmatmul.f32.gmra.mxu0 %v2001
  %v2573 = vpop.f32.mrf.mxu0
  %v2574 = vadd.f32 %v2533, %v2573
  %2575 = vmatmul.f32.gmra.mxu0 %v2407
  %v2576 = vpop.f32.mrf.mxu0
  %v2577 = vadd.f32 %v2536, %v2576
  %2578 = vdwg.mxu0
  %v2579 = vadd.f32 %v2242, %v2474
  %v2580 = vadd.f32 %v2324, %v2556
  %v2581 = vadd.f32 %v2245, %v2477
  %v2582 = vadd.f32 %v2327, %v2559
  %v2583 = vadd.f32 %v2248, %v2480
  %v2584 = vadd.f32 %v2330, %v2562
  %v2585 = vadd.f32 %v2251, %v2483
  %v2586 = vadd.f32 %v2333, %v2565
  %v2587 = vadd.f32 %v2254, %v2486
  %v2588 = vadd.f32 %v2336, %v2568
  %v2589 = vadd.f32 %v2257, %v2489
  %v2590 = vadd.f32 %v2339, %v2571
  %v2591 = vadd.f32 %v2260, %v2492
  %v2592 = vadd.f32 %v2342, %v2574
  %v2593 = vadd.f32 %v2263, %v2495
  %v2594 = vadd.f32 %v2345, %v2577
  %s2595 = scalar_lea.vmem %s3, 1392
  %v2596 = vld [vmem:[%s2595] sm:$0xff]
  %v2597 = vld [vmem:[%s2595 + $0x8] sm:$0xff]
  %v2598 = vld [vmem:[%s2595 + $0x10] sm:$0xff]
  %v2599 = vld [vmem:[%s2595 + $0x18] sm:$0xff]
  %v2600 = vld [vmem:[%s2595 + $0x20] sm:$0xff]
  %v2601 = vld [vmem:[%s2595 + $0x28] sm:$0xff]
  %v2602 = vld [vmem:[%s2595 + $0x30] sm:$0xff]
  %v2603 = vld [vmem:[%s2595 + $0x38] sm:$0xff]
  %v2604 = vld [vmem:[%s2595 + $0x40] sm:$0xff]
  %v2605 = vld [vmem:[%s2595 + $0x48] sm:$0xff]
  %v2606 = vld [vmem:[%s2595 + $0x50] sm:$0xff]
  %v2607 = vld [vmem:[%s2595 + $0x58] sm:$0xff]
  %v2608 = vld [vmem:[%s2595 + $0x60] sm:$0xff]
  %v2609 = vld [vmem:[%s2595 + $0x68] sm:$0xff]
  %v2610 = vld [vmem:[%s2595 + $0x70] sm:$0xff]
  %v2611 = vld [vmem:[%s2595 + $0x78] sm:$0xff]
  %v2612 = vld [vmem:[%s2595 + $0x80] sm:$0xff]
  %v2613 = vld [vmem:[%s2595 + $0x88] sm:$0xff]
  %v2614 = vld [vmem:[%s2595 + $0x90] sm:$0xff]
  %v2615 = vld [vmem:[%s2595 + $0x98] sm:$0xff]
  %v2616 = vld [vmem:[%s2595 + $0xa0] sm:$0xff]
  %v2617 = vld [vmem:[%s2595 + $0xa8] sm:$0xff]
  %v2618 = vld [vmem:[%s2595 + $0xb0] sm:$0xff]
  %v2619 = vld [vmem:[%s2595 + $0xb8] sm:$0xff]
  %v2620 = vld [vmem:[%s2595 + $0xc0] sm:$0xff]
  %v2621 = vld [vmem:[%s2595 + $0xc8] sm:$0xff]
  %v2622 = vld [vmem:[%s2595 + $0xd0] sm:$0xff]
  %v2623 = vld [vmem:[%s2595 + $0xd8] sm:$0xff]
  %v2624 = vld [vmem:[%s2595 + $0xe0] sm:$0xff]
  %v2625 = vld [vmem:[%s2595 + $0xe8] sm:$0xff]
  %v2626 = vld [vmem:[%s2595 + $0xf0] sm:$0xff]
  %v2627 = vld [vmem:[%s2595 + $0xf8] sm:$0xff]
  %v2628 = vld [vmem:[%s2595 + $0x100] sm:$0xff]
  %v2629 = vld [vmem:[%s2595 + $0x108] sm:$0xff]
  %v2630 = vld [vmem:[%s2595 + $0x110] sm:$0xff]
  %v2631 = vld [vmem:[%s2595 + $0x118] sm:$0xff]
  %v2632 = vld [vmem:[%s2595 + $0x120] sm:$0xff]
  %v2633 = vld [vmem:[%s2595 + $0x128] sm:$0xff]
  %v2634 = vld [vmem:[%s2595 + $0x130] sm:$0xff]
  %v2635 = vld [vmem:[%s2595 + $0x138] sm:$0xff]
  %v2636 = vld [vmem:[%s2595 + $0x140] sm:$0xff]
  %v2637 = vld [vmem:[%s2595 + $0x148] sm:$0xff]
  %v2638 = vld [vmem:[%s2595 + $0x150] sm:$0xff]
  %v2639 = vld [vmem:[%s2595 + $0x158] sm:$0xff]
  %v2640 = vld [vmem:[%s2595 + $0x160] sm:$0xff]
  %v2641 = vld [vmem:[%s2595 + $0x168] sm:$0xff]
  %v2642 = vld [vmem:[%s2595 + $0x170] sm:$0xff]
  %v2643 = vld [vmem:[%s2595 + $0x178] sm:$0xff]
  %v2644 = vld [vmem:[%s2595 + $0x180] sm:$0xff]
  %v2645 = vld [vmem:[%s2595 + $0x188] sm:$0xff]
  %v2646 = vld [vmem:[%s2595 + $0x190] sm:$0xff]
  %v2647 = vld [vmem:[%s2595 + $0x198] sm:$0xff]
  %v2648 = vld [vmem:[%s2595 + $0x1a0] sm:$0xff]
  %v2649 = vld [vmem:[%s2595 + $0x1a8] sm:$0xff]
  %v2650 = vld [vmem:[%s2595 + $0x1b0] sm:$0xff]
  %v2651 = vld [vmem:[%s2595 + $0x1b8] sm:$0xff]
  %v2652 = vld [vmem:[%s2595 + $0x1c0] sm:$0x3f]
  %v2653 = vld [vmem:[%s2595 + $0x1c8] sm:$0x3f]
  %v2655 = vsel %vm1978, %v1858, 0
  %v2658 = vsel %vm2003, %v2652, 0
  %v2661 = vsel %vm2003, %v2653, 0
  %2663 = vmatpush.msra.mxu0 %v2626
  %2664 = vmatpush.msra.mxu0 %v2624
  %2665 = vmatpush.msra.mxu0 %v2622
  %2666 = vmatpush.msra.mxu0 %v2620
  %2667 = vmatpush.msra.mxu0 %v2618
  %2668 = vmatpush.msra.mxu0 %v2616
  %2669 = vmatpush.msra.mxu0 %v2614
  %2670 = vmatpush.msra.mxu0 %v2612
  %2671 = vmatpush.msra.mxu0 %v2610
  %2672 = vmatpush.msra.mxu0 %v2608
  %2673 = vmatpush.msra.mxu0 %v2606
  %2674 = vmatpush.msra.mxu0 %v2604
  %2675 = vmatpush.msra.mxu0 %v2602
  %2676 = vmatpush.msra.mxu0 %v2600
  %2677 = vmatpush.msra.mxu0 %v2598
  %2678 = vmatpush.msra.mxu0 %v2596
  %2679 = vmatmul.f32.gmra.mxu0 %v1843
  %v2680 = vpop.f32.mrf.mxu0
  %v2681 = vadd.f32 0.0, %v2680
  %2682 = vmatmul.f32.gmra.mxu0 %v1845
  %v2683 = vpop.f32.mrf.mxu0
  %v2684 = vadd.f32 0.0, %v2683
  %2685 = vmatmul.f32.gmra.mxu0 %v1847
  %v2686 = vpop.f32.mrf.mxu0
  %v2687 = vadd.f32 0.0, %v2686
  %2688 = vmatmul.f32.gmra.mxu0 %v1849
  %v2689 = vpop.f32.mrf.mxu0
  %v2690 = vadd.f32 0.0, %v2689
  %2691 = vmatmul.f32.gmra.mxu0 %v1851
  %v2692 = vpop.f32.mrf.mxu0
  %v2693 = vadd.f32 0.0, %v2692
  %2694 = vmatmul.f32.gmra.mxu0 %v1853
  %v2695 = vpop.f32.mrf.mxu0
  %v2696 = vadd.f32 0.0, %v2695
  %2697 = vmatmul.f32.gmra.mxu0 %v1855
  %v2698 = vpop.f32.mrf.mxu0
  %v2699 = vadd.f32 0.0, %v2698
  %2700 = vmatmul.f32.gmra.mxu0 %v1857
  %v2701 = vpop.f32.mrf.mxu0
  %v2702 = vadd.f32 0.0, %v2701
  %2703 = vdwg.mxu0
  %2704 = vmatpush.msra.mxu0 0.0
  %2705 = vmatpush.msra.mxu0 0.0
  %2706 = vmatpush.msra.mxu0 0.0
  %2707 = vmatpush.msra.mxu0 %v2658
  %2708 = vmatpush.msra.mxu0 %v2650
  %2709 = vmatpush.msra.mxu0 %v2648
  %2710 = vmatpush.msra.mxu0 %v2646
  %2711 = vmatpush.msra.mxu0 %v2644
  %2712 = vmatpush.msra.mxu0 %v2642
  %2713 = vmatpush.msra.mxu0 %v2640
  %2714 = vmatpush.msra.mxu0 %v2638
  %2715 = vmatpush.msra.mxu0 %v2636
  %2716 = vmatpush.msra.mxu0 %v2634
  %2717 = vmatpush.msra.mxu0 %v2632
  %2718 = vmatpush.msra.mxu0 %v2630
  %2719 = vmatpush.msra.mxu0 %v2628
  %2720 = vmatmul.f32.gmra.mxu0 %v1986
  %v2721 = vpop.f32.mrf.mxu0
  %v2722 = vadd.f32 %v2681, %v2721
  %2723 = vmatmul.f32.gmra.mxu0 %v1989
  %v2724 = vpop.f32.mrf.mxu0
  %v2725 = vadd.f32 %v2684, %v2724
  %2726 = vmatmul.f32.gmra.mxu0 %v1992
  %v2727 = vpop.f32.mrf.mxu0
  %v2728 = vadd.f32 %v2687, %v2727
  %2729 = vmatmul.f32.gmra.mxu0 %v1995
  %v2730 = vpop.f32.mrf.mxu0
  %v2731 = vadd.f32 %v2690, %v2730
  %2732 = vmatmul.f32.gmra.mxu0 %v1998
  %v2733 = vpop.f32.mrf.mxu0
  %v2734 = vadd.f32 %v2693, %v2733
  %2735 = vmatmul.f32.gmra.mxu0 %v2001
  %v2736 = vpop.f32.mrf.mxu0
  %v2737 = vadd.f32 %v2696, %v2736
  %2738 = vmatmul.f32.gmra.mxu0 %v2407
  %v2739 = vpop.f32.mrf.mxu0
  %v2740 = vadd.f32 %v2699, %v2739
  %2741 = vmatmul.f32.gmra.mxu0 %v2655
  %v2742 = vpop.f32.mrf.mxu0
  %v2743 = vadd.f32 %v2702, %v2742
  %2744 = vdwg.mxu0
  %2745 = vmatpush.msra.mxu0 %v2627
  %2746 = vmatpush.msra.mxu0 %v2625
  %2747 = vmatpush.msra.mxu0 %v2623
  %2748 = vmatpush.msra.mxu0 %v2621
  %2749 = vmatpush.msra.mxu0 %v2619
  %2750 = vmatpush.msra.mxu0 %v2617
  %2751 = vmatpush.msra.mxu0 %v2615
  %2752 = vmatpush.msra.mxu0 %v2613
  %2753 = vmatpush.msra.mxu0 %v2611
  %2754 = vmatpush.msra.mxu0 %v2609
  %2755 = vmatpush.msra.mxu0 %v2607
  %2756 = vmatpush.msra.mxu0 %v2605
  %2757 = vmatpush.msra.mxu0 %v2603
  %2758 = vmatpush.msra.mxu0 %v2601
  %2759 = vmatpush.msra.mxu0 %v2599
  %2760 = vmatpush.msra.mxu0 %v2597
  %2761 = vmatmul.f32.gmra.mxu0 %v1843
  %v2762 = vpop.f32.mrf.mxu0
  %v2763 = vadd.f32 0.0, %v2762
  %2764 = vmatmul.f32.gmra.mxu0 %v1845
  %v2765 = vpop.f32.mrf.mxu0
  %v2766 = vadd.f32 0.0, %v2765
  %2767 = vmatmul.f32.gmra.mxu0 %v1847
  %v2768 = vpop.f32.mrf.mxu0
  %v2769 = vadd.f32 0.0, %v2768
  %2770 = vmatmul.f32.gmra.mxu0 %v1849
  %v2771 = vpop.f32.mrf.mxu0
  %v2772 = vadd.f32 0.0, %v2771
  %2773 = vmatmul.f32.gmra.mxu0 %v1851
  %v2774 = vpop.f32.mrf.mxu0
  %v2775 = vadd.f32 0.0, %v2774
  %2776 = vmatmul.f32.gmra.mxu0 %v1853
  %v2777 = vpop.f32.mrf.mxu0
  %v2778 = vadd.f32 0.0, %v2777
  %2779 = vmatmul.f32.gmra.mxu0 %v1855
  %v2780 = vpop.f32.mrf.mxu0
  %v2781 = vadd.f32 0.0, %v2780
  %2782 = vmatmul.f32.gmra.mxu0 %v1857
  %v2783 = vpop.f32.mrf.mxu0
  %v2784 = vadd.f32 0.0, %v2783
  %2785 = vdwg.mxu0
  %2786 = vmatpush.msra.mxu0 0.0
  %2787 = vmatpush.msra.mxu0 0.0
  %2788 = vmatpush.msra.mxu0 0.0
  %2789 = vmatpush.msra.mxu0 %v2661
  %2790 = vmatpush.msra.mxu0 %v2651
  %2791 = vmatpush.msra.mxu0 %v2649
  %2792 = vmatpush.msra.mxu0 %v2647
  %2793 = vmatpush.msra.mxu0 %v2645
  %2794 = vmatpush.msra.mxu0 %v2643
  %2795 = vmatpush.msra.mxu0 %v2641
  %2796 = vmatpush.msra.mxu0 %v2639
  %2797 = vmatpush.msra.mxu0 %v2637
  %2798 = vmatpush.msra.mxu0 %v2635
  %2799 = vmatpush.msra.mxu0 %v2633
  %2800 = vmatpush.msra.mxu0 %v2631
  %2801 = vmatpush.msra.mxu0 %v2629
  %2802 = vmatmul.f32.gmra.mxu0 %v1986
  %v2803 = vpop.f32.mrf.mxu0
  %v2804 = vadd.f32 %v2763, %v2803
  %2805 = vmatmul.f32.gmra.mxu0 %v1989
  %v2806 = vpop.f32.mrf.mxu0
  %v2807 = vadd.f32 %v2766, %v2806
  %2808 = vmatmul.f32.gmra.mxu0 %v1992
  %v2809 = vpop.f32.mrf.mxu0
  %v2810 = vadd.f32 %v2769, %v2809
  %2811 = vmatmul.f32.gmra.mxu0 %v1995
  %v2812 = vpop.f32.mrf.mxu0
  %v2813 = vadd.f32 %v2772, %v2812
  %2814 = vmatmul.f32.gmra.mxu0 %v1998
  %v2815 = vpop.f32.mrf.mxu0
  %v2816 = vadd.f32 %v2775, %v2815
  %2817 = vmatmul.f32.gmra.mxu0 %v2001
  %v2818 = vpop.f32.mrf.mxu0
  %v2819 = vadd.f32 %v2778, %v2818
  %2820 = vmatmul.f32.gmra.mxu0 %v2407
  %v2821 = vpop.f32.mrf.mxu0
  %v2822 = vadd.f32 %v2781, %v2821
  %2823 = vmatmul.f32.gmra.mxu0 %v2655
  %v2824 = vpop.f32.mrf.mxu0
  %v2825 = vadd.f32 %v2784, %v2824
  %2826 = vdwg.mxu0
  %v2827 = vadd.f32 %v2579, %v2722
  %v2828 = vadd.f32 %v2580, %v2804
  %v2829 = vadd.f32 %v2581, %v2725
  %v2830 = vadd.f32 %v2582, %v2807
  %v2831 = vadd.f32 %v2583, %v2728
  %v2832 = vadd.f32 %v2584, %v2810
  %v2833 = vadd.f32 %v2585, %v2731
  %v2834 = vadd.f32 %v2586, %v2813
  %v2835 = vadd.f32 %v2587, %v2734
  %v2836 = vadd.f32 %v2588, %v2816
  %v2837 = vadd.f32 %v2589, %v2737
  %v2838 = vadd.f32 %v2590, %v2819
  %v2839 = vadd.f32 %v2591, %v2740
  %v2840 = vadd.f32 %v2592, %v2822
  %v2841 = vadd.f32 %v2593, %v2743
  %v2842 = vadd.f32 %v2594, %v2825
  %s2843 = scalar_lea.vmem %s3, 1856
  %v2844 = vld [vmem:[%s2843] sm:$0xff]
  %v2845 = vld [vmem:[%s2843 + $0x8] sm:$0xff]
  %v2846 = vld [vmem:[%s2843 + $0x10] sm:$0xff]
  %v2847 = vld [vmem:[%s2843 + $0x18] sm:$0xff]
  %v2848 = vld [vmem:[%s2843 + $0x20] sm:$0xff]
  %v2849 = vld [vmem:[%s2843 + $0x28] sm:$0xff]
  %v2850 = vld [vmem:[%s2843 + $0x30] sm:$0xff]
  %v2851 = vld [vmem:[%s2843 + $0x38] sm:$0xff]
  %v2852 = vld [vmem:[%s2843 + $0x40] sm:$0xff]
  %v2853 = vld [vmem:[%s2843 + $0x48] sm:$0xff]
  %v2854 = vld [vmem:[%s2843 + $0x50] sm:$0xff]
  %v2855 = vld [vmem:[%s2843 + $0x58] sm:$0xff]
  %v2856 = vld [vmem:[%s2843 + $0x60] sm:$0xff]
  %v2857 = vld [vmem:[%s2843 + $0x68] sm:$0xff]
  %v2858 = vld [vmem:[%s2843 + $0x70] sm:$0xff]
  %v2859 = vld [vmem:[%s2843 + $0x78] sm:$0xff]
  %v2860 = vld [vmem:[%s2843 + $0x80] sm:$0xff]
  %v2861 = vld [vmem:[%s2843 + $0x88] sm:$0xff]
  %v2862 = vld [vmem:[%s2843 + $0x90] sm:$0xff]
  %v2863 = vld [vmem:[%s2843 + $0x98] sm:$0xff]
  %v2864 = vld [vmem:[%s2843 + $0xa0] sm:$0xff]
  %v2865 = vld [vmem:[%s2843 + $0xa8] sm:$0xff]
  %v2866 = vld [vmem:[%s2843 + $0xb0] sm:$0xff]
  %v2867 = vld [vmem:[%s2843 + $0xb8] sm:$0xff]
  %v2868 = vld [vmem:[%s2843 + $0xc0] sm:$0xff]
  %v2869 = vld [vmem:[%s2843 + $0xc8] sm:$0xff]
  %v2870 = vld [vmem:[%s2843 + $0xd0] sm:$0xff]
  %v2871 = vld [vmem:[%s2843 + $0xd8] sm:$0xff]
  %v2872 = vld [vmem:[%s2843 + $0xe0] sm:$0xff]
  %v2873 = vld [vmem:[%s2843 + $0xe8] sm:$0xff]
  %v2874 = vld [vmem:[%s2843 + $0xf0] sm:$0xff]
  %v2875 = vld [vmem:[%s2843 + $0xf8] sm:$0xff]
  %v2876 = vld [vmem:[%s2843 + $0x100] sm:$0xff]
  %v2877 = vld [vmem:[%s2843 + $0x108] sm:$0xff]
  %v2878 = vld [vmem:[%s2843 + $0x110] sm:$0xff]
  %v2879 = vld [vmem:[%s2843 + $0x118] sm:$0xff]
  %v2880 = vld [vmem:[%s2843 + $0x120] sm:$0xff]
  %v2881 = vld [vmem:[%s2843 + $0x128] sm:$0xff]
  %v2882 = vld [vmem:[%s2843 + $0x130] sm:$0xff]
  %v2883 = vld [vmem:[%s2843 + $0x138] sm:$0xff]
  %v2884 = vld [vmem:[%s2843 + $0x140] sm:$0xff]
  %v2885 = vld [vmem:[%s2843 + $0x148] sm:$0xff]
  %v2886 = vld [vmem:[%s2843 + $0x150] sm:$0xff]
  %v2887 = vld [vmem:[%s2843 + $0x158] sm:$0xff]
  %v2888 = vld [vmem:[%s2843 + $0x160] sm:$0xff]
  %v2889 = vld [vmem:[%s2843 + $0x168] sm:$0xff]
  %v2890 = vld [vmem:[%s2843 + $0x170] sm:$0xff]
  %v2891 = vld [vmem:[%s2843 + $0x178] sm:$0xff]
  %v2892 = vld [vmem:[%s2843 + $0x180] sm:$0xff]
  %v2893 = vld [vmem:[%s2843 + $0x188] sm:$0xff]
  %v2894 = vld [vmem:[%s2843 + $0x190] sm:$0xff]
  %v2895 = vld [vmem:[%s2843 + $0x198] sm:$0xff]
  %v2896 = vld [vmem:[%s2843 + $0x1a0] sm:$0xff]
  %v2897 = vld [vmem:[%s2843 + $0x1a8] sm:$0xff]
  %v2898 = vld [vmem:[%s2843 + $0x1b0] sm:$0xff]
  %v2899 = vld [vmem:[%s2843 + $0x1b8] sm:$0xff]
  %v2900 = vld [vmem:[%s2843 + $0x1c0] sm:$0x3f]
  %v2901 = vld [vmem:[%s2843 + $0x1c8] sm:$0x3f]
  %v2903 = vsel %vm1978, %v1860, 0
  %v2906 = vsel %vm2003, %v2900, 0
  %v2909 = vsel %vm2003, %v2901, 0
  %2911 = vmatpush.msra.mxu0 %v2874
  %2912 = vmatpush.msra.mxu0 %v2872
  %2913 = vmatpush.msra.mxu0 %v2870
  %2914 = vmatpush.msra.mxu0 %v2868
  %2915 = vmatpush.msra.mxu0 %v2866
  %2916 = vmatpush.msra.mxu0 %v2864
  %2917 = vmatpush.msra.mxu0 %v2862
  %2918 = vmatpush.msra.mxu0 %v2860
  %2919 = vmatpush.msra.mxu0 %v2858
  %2920 = vmatpush.msra.mxu0 %v2856
  %2921 = vmatpush.msra.mxu0 %v2854
  %2922 = vmatpush.msra.mxu0 %v2852
  %2923 = vmatpush.msra.mxu0 %v2850
  %2924 = vmatpush.msra.mxu0 %v2848
  %2925 = vmatpush.msra.mxu0 %v2846
  %2926 = vmatpush.msra.mxu0 %v2844
  %2927 = vmatmul.f32.gmra.mxu0 %v1845
  %v2928 = vpop.f32.mrf.mxu0
  %v2929 = vadd.f32 0.0, %v2928
  %2930 = vmatmul.f32.gmra.mxu0 %v1847
  %v2931 = vpop.f32.mrf.mxu0
  %v2932 = vadd.f32 0.0, %v2931
  %2933 = vmatmul.f32.gmra.mxu0 %v1849
  %v2934 = vpop.f32.mrf.mxu0
  %v2935 = vadd.f32 0.0, %v2934
  %2936 = vmatmul.f32.gmra.mxu0 %v1851
  %v2937 = vpop.f32.mrf.mxu0
  %v2938 = vadd.f32 0.0, %v2937
  %2939 = vmatmul.f32.gmra.mxu0 %v1853
  %v2940 = vpop.f32.mrf.mxu0
  %v2941 = vadd.f32 0.0, %v2940
  %2942 = vmatmul.f32.gmra.mxu0 %v1855
  %v2943 = vpop.f32.mrf.mxu0
  %v2944 = vadd.f32 0.0, %v2943
  %2945 = vmatmul.f32.gmra.mxu0 %v1857
  %v2946 = vpop.f32.mrf.mxu0
  %v2947 = vadd.f32 0.0, %v2946
  %2948 = vmatmul.f32.gmra.mxu0 %v1859
  %v2949 = vpop.f32.mrf.mxu0
  %v2950 = vadd.f32 0.0, %v2949
  %2951 = vdwg.mxu0
  %2952 = vmatpush.msra.mxu0 0.0
  %2953 = vmatpush.msra.mxu0 0.0
  %2954 = vmatpush.msra.mxu0 0.0
  %2955 = vmatpush.msra.mxu0 %v2906
  %2956 = vmatpush.msra.mxu0 %v2898
  %2957 = vmatpush.msra.mxu0 %v2896
  %2958 = vmatpush.msra.mxu0 %v2894
  %2959 = vmatpush.msra.mxu0 %v2892
  %2960 = vmatpush.msra.mxu0 %v2890
  %2961 = vmatpush.msra.mxu0 %v2888
  %2962 = vmatpush.msra.mxu0 %v2886
  %2963 = vmatpush.msra.mxu0 %v2884
  %2964 = vmatpush.msra.mxu0 %v2882
  %2965 = vmatpush.msra.mxu0 %v2880
  %2966 = vmatpush.msra.mxu0 %v2878
  %2967 = vmatpush.msra.mxu0 %v2876
  %2968 = vmatmul.f32.gmra.mxu0 %v1989
  %v2969 = vpop.f32.mrf.mxu0
  %v2970 = vadd.f32 %v2929, %v2969
  %2971 = vmatmul.f32.gmra.mxu0 %v1992
  %v2972 = vpop.f32.mrf.mxu0
  %v2973 = vadd.f32 %v2932, %v2972
  %2974 = vmatmul.f32.gmra.mxu0 %v1995
  %v2975 = vpop.f32.mrf.mxu0
  %v2976 = vadd.f32 %v2935, %v2975
  %2977 = vmatmul.f32.gmra.mxu0 %v1998
  %v2978 = vpop.f32.mrf.mxu0
  %v2979 = vadd.f32 %v2938, %v2978
  %2980 = vmatmul.f32.gmra.mxu0 %v2001
  %v2981 = vpop.f32.mrf.mxu0
  %v2982 = vadd.f32 %v2941, %v2981
  %2983 = vmatmul.f32.gmra.mxu0 %v2407
  %v2984 = vpop.f32.mrf.mxu0
  %v2985 = vadd.f32 %v2944, %v2984
  %2986 = vmatmul.f32.gmra.mxu0 %v2655
  %v2987 = vpop.f32.mrf.mxu0
  %v2988 = vadd.f32 %v2947, %v2987
  %2989 = vmatmul.f32.gmra.mxu0 %v2903
  %v2990 = vpop.f32.mrf.mxu0
  %v2991 = vadd.f32 %v2950, %v2990
  %2992 = vdwg.mxu0
  %2993 = vmatpush.msra.mxu0 %v2875
  %2994 = vmatpush.msra.mxu0 %v2873
  %2995 = vmatpush.msra.mxu0 %v2871
  %2996 = vmatpush.msra.mxu0 %v2869
  %2997 = vmatpush.msra.mxu0 %v2867
  %2998 = vmatpush.msra.mxu0 %v2865
  %2999 = vmatpush.msra.mxu0 %v2863
  %3000 = vmatpush.msra.mxu0 %v2861
  %3001 = vmatpush.msra.mxu0 %v2859
  %3002 = vmatpush.msra.mxu0 %v2857
  %3003 = vmatpush.msra.mxu0 %v2855
  %3004 = vmatpush.msra.mxu0 %v2853
  %3005 = vmatpush.msra.mxu0 %v2851
  %3006 = vmatpush.msra.mxu0 %v2849
  %3007 = vmatpush.msra.mxu0 %v2847
  %3008 = vmatpush.msra.mxu0 %v2845
  %3009 = vmatmul.f32.gmra.mxu0 %v1845
  %v3010 = vpop.f32.mrf.mxu0
  %v3011 = vadd.f32 0.0, %v3010
  %3012 = vmatmul.f32.gmra.mxu0 %v1847
  %v3013 = vpop.f32.mrf.mxu0
  %v3014 = vadd.f32 0.0, %v3013
  %3015 = vmatmul.f32.gmra.mxu0 %v1849
  %v3016 = vpop.f32.mrf.mxu0
  %v3017 = vadd.f32 0.0, %v3016
  %3018 = vmatmul.f32.gmra.mxu0 %v1851
  %v3019 = vpop.f32.mrf.mxu0
  %v3020 = vadd.f32 0.0, %v3019
  %3021 = vmatmul.f32.gmra.mxu0 %v1853
  %v3022 = vpop.f32.mrf.mxu0
  %v3023 = vadd.f32 0.0, %v3022
  %3024 = vmatmul.f32.gmra.mxu0 %v1855
  %v3025 = vpop.f32.mrf.mxu0
  %v3026 = vadd.f32 0.0, %v3025
  %3027 = vmatmul.f32.gmra.mxu0 %v1857
  %v3028 = vpop.f32.mrf.mxu0
  %v3029 = vadd.f32 0.0, %v3028
  %3030 = vmatmul.f32.gmra.mxu0 %v1859
  %v3031 = vpop.f32.mrf.mxu0
  %v3032 = vadd.f32 0.0, %v3031
  %3033 = vdwg.mxu0
  %3034 = vmatpush.msra.mxu0 0.0
  %3035 = vmatpush.msra.mxu0 0.0
  %3036 = vmatpush.msra.mxu0 0.0
  %3037 = vmatpush.msra.mxu0 %v2909
  %3038 = vmatpush.msra.mxu0 %v2899
  %3039 = vmatpush.msra.mxu0 %v2897
  %3040 = vmatpush.msra.mxu0 %v2895
  %3041 = vmatpush.msra.mxu0 %v2893
  %3042 = vmatpush.msra.mxu0 %v2891
  %3043 = vmatpush.msra.mxu0 %v2889
  %3044 = vmatpush.msra.mxu0 %v2887
  %3045 = vmatpush.msra.mxu0 %v2885
  %3046 = vmatpush.msra.mxu0 %v2883
  %3047 = vmatpush.msra.mxu0 %v2881
  %3048 = vmatpush.msra.mxu0 %v2879
  %3049 = vmatpush.msra.mxu0 %v2877
  %3050 = vmatmul.f32.gmra.mxu0 %v1989
  %v3051 = vpop.f32.mrf.mxu0
  %v3052 = vadd.f32 %v3011, %v3051
  %3053 = vmatmul.f32.gmra.mxu0 %v1992
  %v3054 = vpop.f32.mrf.mxu0
  %v3055 = vadd.f32 %v3014, %v3054
  %3056 = vmatmul.f32.gmra.mxu0 %v1995
  %v3057 = vpop.f32.mrf.mxu0
  %v3058 = vadd.f32 %v3017, %v3057
  %3059 = vmatmul.f32.gmra.mxu0 %v1998
  %v3060 = vpop.f32.mrf.mxu0
  %v3061 = vadd.f32 %v3020, %v3060
  %3062 = vmatmul.f32.gmra.mxu0 %v2001
  %v3063 = vpop.f32.mrf.mxu0
  %v3064 = vadd.f32 %v3023, %v3063
  %3065 = vmatmul.f32.gmra.mxu0 %v2407
  %v3066 = vpop.f32.mrf.mxu0
  %v3067 = vadd.f32 %v3026, %v3066
  %3068 = vmatmul.f32.gmra.mxu0 %v2655
  %v3069 = vpop.f32.mrf.mxu0
  %v3070 = vadd.f32 %v3029, %v3069
  %3071 = vmatmul.f32.gmra.mxu0 %v2903
  %v3072 = vpop.f32.mrf.mxu0
  %v3073 = vadd.f32 %v3032, %v3072
  %3074 = vdwg.mxu0
  %v3075 = vadd.f32 %v2827, %v2970
  %v3076 = vadd.f32 %v2828, %v3052
  %v3077 = vadd.f32 %v2829, %v2973
  %v3078 = vadd.f32 %v2830, %v3055
  %v3079 = vadd.f32 %v2831, %v2976
  %v3080 = vadd.f32 %v2832, %v3058
  %v3081 = vadd.f32 %v2833, %v2979
  %v3082 = vadd.f32 %v2834, %v3061
  %v3083 = vadd.f32 %v2835, %v2982
  %v3084 = vadd.f32 %v2836, %v3064
  %v3085 = vadd.f32 %v2837, %v2985
  %v3086 = vadd.f32 %v2838, %v3067
  %v3087 = vadd.f32 %v2839, %v2988
  %v3088 = vadd.f32 %v2840, %v3070
  %v3089 = vadd.f32 %v2841, %v2991
  %v3090 = vadd.f32 %v2842, %v3073
  %v3091 = vld [vmem:[%s4] sm:$0x3]
  %v3093 = vperm.slane %v3091, 0
  %v3094 = vperm.slane %v3091, 1
  %v3097 = vadd.f32 %v3075, %v3093
  %v3098 = vadd.f32 %v3076, %v3094
  %v3099 = vadd.f32 %v3077, %v3093
  %v3100 = vadd.f32 %v3078, %v3094
  %v3101 = vadd.f32 %v3079, %v3093
  %v3102 = vadd.f32 %v3080, %v3094
  %v3103 = vadd.f32 %v3081, %v3093
  %v3104 = vadd.f32 %v3082, %v3094
  %v3105 = vadd.f32 %v3083, %v3093
  %v3106 = vadd.f32 %v3084, %v3094
  %v3107 = vadd.f32 %v3085, %v3093
  %v3108 = vadd.f32 %v3086, %v3094
  %v3109 = vadd.f32 %v3087, %v3093
  %v3110 = vadd.f32 %v3088, %v3094
  %v3111 = vadd.f32 %v3089, %v3093
  %v3112 = vadd.f32 %v3090, %v3094
  %v3113 = vmax.f32 %v3097, %v3099
  %v3114 = vmax.f32 %v3098, %v3100
  %v3115 = vmax.f32 %v3101, %v3103
  %v3116 = vmax.f32 %v3102, %v3104
  %v3117 = vmax.f32 %v3105, %v3107
  %v3118 = vmax.f32 %v3106, %v3108
  %v3119 = vmax.f32 %v3109, %v3111
  %v3120 = vmax.f32 %v3110, %v3112
  %3129 = vrot.lane.b32.xlu0 %v3113, 108
  %v3130 = vpop.permute.xlu0 %3129
  %3131 = vrot.lane.b32.xlu0 %v3114, 108
  %v3132 = vpop.permute.xlu0 %3131
  %3133 = vrot.lane.b32.xlu0 %v3115, 108
  %v3134 = vpop.permute.xlu0 %3133
  %3135 = vrot.lane.b32.xlu0 %v3116, 108
  %v3136 = vpop.permute.xlu0 %3135
  %3137 = vrot.lane.b32.xlu0 %v3117, 108
  %v3138 = vpop.permute.xlu0 %3137
  %3139 = vrot.lane.b32.xlu0 %v3118, 108
  %v3140 = vpop.permute.xlu0 %3139
  %3141 = vrot.lane.b32.xlu0 %v3119, 108
  %v3142 = vpop.permute.xlu0 %3141
  %3143 = vrot.lane.b32.xlu0 %v3120, 108
  %v3144 = vpop.permute.xlu0 %3143
  %vm3145 = vcmask 883712
  %v3146 = vsel %vm3145, %v3130, %v3132
  %v3147 = vsel %vm3145, %v3134, %v3136
  %v3148 = vsel %vm3145, %v3138, %v3140
  %v3149 = vsel %vm3145, %v3142, %v3144
  %v3158 = vmax.f32 %v3113, %v3146
  %v3159 = vmax.f32 %v3114, %v3132
  %v3160 = vmax.f32 %v3115, %v3147
  %v3161 = vmax.f32 %v3116, %v3136
  %v3162 = vmax.f32 %v3117, %v3148
  %v3163 = vmax.f32 %v3118, %v3140
  %v3164 = vmax.f32 %v3119, %v3149
  %v3165 = vmax.f32 %v3120, %v3144
  %v3166 = vmax.f32 %v3158, 0.0
  %v3167 = vmax.f32 %v3159, 0.0
  %v3168 = vmax.f32 %v3160, 0.0
  %v3169 = vmax.f32 %v3161, 0.0
  %v3170 = vmax.f32 %v3162, 0.0
  %v3171 = vmax.f32 %v3163, 0.0
  %v3172 = vmax.f32 %v3164, 0.0
  %v3173 = vmax.f32 %v3165, 0.0
  %v3174 = vld [vmem:[%s5] sm:$0xff]
  %v3175 = vld [vmem:[%s5 + $0x8] sm:$0xff]
  %v3176 = vld [vmem:[%s5 + $0x10] sm:$0xff]
  %v3177 = vld [vmem:[%s5 + $0x18] sm:$0xff]
  %v3178 = vld [vmem:[%s5 + $0x20] sm:$0xff]
  %v3179 = vld [vmem:[%s5 + $0x28] sm:$0xff]
  %v3180 = vld [vmem:[%s5 + $0x30] sm:$0xff]
  %v3181 = vld [vmem:[%s5 + $0x38] sm:$0xff]
  %v3182 = vld [vmem:[%s5 + $0x40] sm:$0xff]
  %v3183 = vld [vmem:[%s5 + $0x48] sm:$0xff]
  %v3184 = vld [vmem:[%s5 + $0x50] sm:$0xff]
  %v3185 = vld [vmem:[%s5 + $0x58] sm:$0xff]
  %v3186 = vld [vmem:[%s5 + $0x60] sm:$0xff]
  %v3187 = vld [vmem:[%s5 + $0x68] sm:$0xff]
  %v3188 = vld [vmem:[%s5 + $0x70] sm:$0xff]
  %v3189 = vld [vmem:[%s5 + $0x78] sm:$0xff]
  %v3190 = vld [vmem:[%s5 + $0x80] sm:$0xff]
  %v3191 = vld [vmem:[%s5 + $0x88] sm:$0xf]
  %s3192 = scalar_lea.vmem %s5, 144
  %v3193 = vld [vmem:[%s3192] sm:$0xff]
  %v3194 = vld [vmem:[%s3192 + $0x8] sm:$0xff]
  %v3195 = vld [vmem:[%s3192 + $0x10] sm:$0xff]
  %v3196 = vld [vmem:[%s3192 + $0x18] sm:$0xff]
  %v3197 = vld [vmem:[%s3192 + $0x20] sm:$0xff]
  %v3198 = vld [vmem:[%s3192 + $0x28] sm:$0xff]
  %v3199 = vld [vmem:[%s3192 + $0x30] sm:$0xff]
  %v3200 = vld [vmem:[%s3192 + $0x38] sm:$0xff]
  %v3201 = vld [vmem:[%s3192 + $0x40] sm:$0xff]
  %v3202 = vld [vmem:[%s3192 + $0x48] sm:$0xff]
  %v3203 = vld [vmem:[%s3192 + $0x50] sm:$0xff]
  %v3204 = vld [vmem:[%s3192 + $0x58] sm:$0xff]
  %v3205 = vld [vmem:[%s3192 + $0x60] sm:$0xff]
  %v3206 = vld [vmem:[%s3192 + $0x68] sm:$0xff]
  %v3207 = vld [vmem:[%s3192 + $0x70] sm:$0xff]
  %v3208 = vld [vmem:[%s3192 + $0x78] sm:$0xff]
  %v3209 = vld [vmem:[%s3192 + $0x80] sm:$0xff]
  %v3210 = vld [vmem:[%s3192 + $0x88] sm:$0xf]
  %vm3211 = vcmask 97280
  %v3213 = vsel %vm3211, %v3169, 0
  %v3216 = vsel %vm171, %v3210, 0
  %3218 = vmatpush.msra.mxu0 %v3208
  %3219 = vmatpush.msra.mxu0 %v3207
  %3220 = vmatpush.msra.mxu0 %v3206
  %3221 = vmatpush.msra.mxu0 %v3205
  %3222 = vmatpush.msra.mxu0 %v3204
  %3223 = vmatpush.msra.mxu0 %v3203
  %3224 = vmatpush.msra.mxu0 %v3202
  %3225 = vmatpush.msra.mxu0 %v3201
  %3226 = vmatpush.msra.mxu0 %v3200
  %3227 = vmatpush.msra.mxu0 %v3199
  %3228 = vmatpush.msra.mxu0 %v3198
  %3229 = vmatpush.msra.mxu0 %v3197
  %3230 = vmatpush.msra.mxu0 %v3196
  %3231 = vmatpush.msra.mxu0 %v3195
  %3232 = vmatpush.msra.mxu0 %v3194
  %3233 = vmatpush.msra.mxu0 %v3193
  %3234 = vmatmul.f32.gmra.mxu0 %v3168
  %v3235 = vpop.f32.mrf.mxu0
  %v3236 = vadd.f32 0.0, %v3235
  %3237 = vdwg.mxu0
  %3238 = vmatpush.msra.mxu0 0.0
  %3239 = vmatpush.msra.mxu0 0.0
  %3240 = vmatpush.msra.mxu0 0.0
  %3241 = vmatpush.msra.mxu0 0.0
  %3242 = vmatpush.msra.mxu0 0.0
  %3243 = vmatpush.msra.mxu0 0.0
  %3244 = vmatpush.msra.mxu0 0.0
  %3245 = vmatpush.msra.mxu0 0.0
  %3246 = vmatpush.msra.mxu0 0.0
  %3247 = vmatpush.msra.mxu0 0.0
  %3248 = vmatpush.msra.mxu0 0.0
  %3249 = vmatpush.msra.mxu0 0.0
  %3250 = vmatpush.msra.mxu0 0.0
  %3251 = vmatpush.msra.mxu0 0.0
  %3252 = vmatpush.msra.mxu0 %v3216
  %3253 = vmatpush.msra.mxu0 %v3209
  %3254 = vmatmul.f32.gmra.mxu0 %v3213
  %v3255 = vpop.f32.mrf.mxu0
  %v3256 = vadd.f32 %v3236, %v3255
  %3257 = vdwg.mxu0
  %v3259 = vsel %vm3211, %v3167, 0
  %v3262 = vsel %vm171, %v3191, 0
  %3264 = vmatpush.msra.mxu0 %v3189
  %3265 = vmatpush.msra.mxu0 %v3188
  %3266 = vmatpush.msra.mxu0 %v3187
  %3267 = vmatpush.msra.mxu0 %v3186
  %3268 = vmatpush.msra.mxu0 %v3185
  %3269 = vmatpush.msra.mxu0 %v3184
  %3270 = vmatpush.msra.mxu0 %v3183
  %3271 = vmatpush.msra.mxu0 %v3182
  %3272 = vmatpush.msra.mxu0 %v3181
  %3273 = vmatpush.msra.mxu0 %v3180
  %3274 = vmatpush.msra.mxu0 %v3179
  %3275 = vmatpush.msra.mxu0 %v3178
  %3276 = vmatpush.msra.mxu0 %v3177
  %3277 = vmatpush.msra.mxu0 %v3176
  %3278 = vmatpush.msra.mxu0 %v3175
  %3279 = vmatpush.msra.mxu0 %v3174
  %3280 = vmatmul.f32.gmra.mxu0 %v3166
  %v3281 = vpop.f32.mrf.mxu0
  %v3282 = vadd.f32 %v3256, %v3281
  %3283 = vdwg.mxu0
  %3284 = vmatpush.msra.mxu0 0.0
  %3285 = vmatpush.msra.mxu0 0.0
  %3286 = vmatpush.msra.mxu0 0.0
  %3287 = vmatpush.msra.mxu0 0.0
  %3288 = vmatpush.msra.mxu0 0.0
  %3289 = vmatpush.msra.mxu0 0.0
  %3290 = vmatpush.msra.mxu0 0.0
  %3291 = vmatpush.msra.mxu0 0.0
  %3292 = vmatpush.msra.mxu0 0.0
  %3293 = vmatpush.msra.mxu0 0.0
  %3294 = vmatpush.msra.mxu0 0.0
  %3295 = vmatpush.msra.mxu0 0.0
  %3296 = vmatpush.msra.mxu0 0.0
  %3297 = vmatpush.msra.mxu0 0.0
  %3298 = vmatpush.msra.mxu0 %v3262
  %3299 = vmatpush.msra.mxu0 %v3190
  %3300 = vmatmul.f32.gmra.mxu0 %v3259
  %v3301 = vpop.f32.mrf.mxu0
  %v3302 = vadd.f32 %v3282, %v3301
  %3303 = vdwg.mxu0
  %s3304 = scalar_lea.vmem %s5, 288
  %v3305 = vld [vmem:[%s3304] sm:$0xff]
  %v3306 = vld [vmem:[%s3304 + $0x8] sm:$0xff]
  %v3307 = vld [vmem:[%s3304 + $0x10] sm:$0xff]
  %v3308 = vld [vmem:[%s3304 + $0x18] sm:$0xff]
  %v3309 = vld [vmem:[%s3304 + $0x20] sm:$0xff]
  %v3310 = vld [vmem:[%s3304 + $0x28] sm:$0xff]
  %v3311 = vld [vmem:[%s3304 + $0x30] sm:$0xff]
  %v3312 = vld [vmem:[%s3304 + $0x38] sm:$0xff]
  %v3313 = vld [vmem:[%s3304 + $0x40] sm:$0xff]
  %v3314 = vld [vmem:[%s3304 + $0x48] sm:$0xff]
  %v3315 = vld [vmem:[%s3304 + $0x50] sm:$0xff]
  %v3316 = vld [vmem:[%s3304 + $0x58] sm:$0xff]
  %v3317 = vld [vmem:[%s3304 + $0x60] sm:$0xff]
  %v3318 = vld [vmem:[%s3304 + $0x68] sm:$0xff]
  %v3319 = vld [vmem:[%s3304 + $0x70] sm:$0xff]
  %v3320 = vld [vmem:[%s3304 + $0x78] sm:$0xff]
  %v3321 = vld [vmem:[%s3304 + $0x80] sm:$0xff]
  %v3322 = vld [vmem:[%s3304 + $0x88] sm:$0xf]
  %v3324 = vsel %vm3211, %v3171, 0
  %v3327 = vsel %vm171, %v3322, 0
  %3329 = vmatpush.msra.mxu0 %v3320
  %3330 = vmatpush.msra.mxu0 %v3319
  %3331 = vmatpush.msra.mxu0 %v3318
  %3332 = vmatpush.msra.mxu0 %v3317
  %3333 = vmatpush.msra.mxu0 %v3316
  %3334 = vmatpush.msra.mxu0 %v3315
  %3335 = vmatpush.msra.mxu0 %v3314
  %3336 = vmatpush.msra.mxu0 %v3313
  %3337 = vmatpush.msra.mxu0 %v3312
  %3338 = vmatpush.msra.mxu0 %v3311
  %3339 = vmatpush.msra.mxu0 %v3310
  %3340 = vmatpush.msra.mxu0 %v3309
  %3341 = vmatpush.msra.mxu0 %v3308
  %3342 = vmatpush.msra.mxu0 %v3307
  %3343 = vmatpush.msra.mxu0 %v3306
  %3344 = vmatpush.msra.mxu0 %v3305
  %3345 = vmatmul.f32.gmra.mxu0 %v3170
  %v3346 = vpop.f32.mrf.mxu0
  %v3347 = vadd.f32 0.0, %v3346
  %3348 = vdwg.mxu0
  %3349 = vmatpush.msra.mxu0 0.0
  %3350 = vmatpush.msra.mxu0 0.0
  %3351 = vmatpush.msra.mxu0 0.0
  %3352 = vmatpush.msra.mxu0 0.0
  %3353 = vmatpush.msra.mxu0 0.0
  %3354 = vmatpush.msra.mxu0 0.0
  %3355 = vmatpush.msra.mxu0 0.0
  %3356 = vmatpush.msra.mxu0 0.0
  %3357 = vmatpush.msra.mxu0 0.0
  %3358 = vmatpush.msra.mxu0 0.0
  %3359 = vmatpush.msra.mxu0 0.0
  %3360 = vmatpush.msra.mxu0 0.0
  %3361 = vmatpush.msra.mxu0 0.0
  %3362 = vmatpush.msra.mxu0 0.0
  %3363 = vmatpush.msra.mxu0 %v3327
  %3364 = vmatpush.msra.mxu0 %v3321
  %3365 = vmatmul.f32.gmra.mxu0 %v3324
  %v3366 = vpop.f32.mrf.mxu0
  %v3367 = vadd.f32 %v3347, %v3366
  %3368 = vdwg.mxu0
  %v3369 = vadd.f32 %v3302, %v3367
  %s3370 = scalar_lea.vmem %s5, 432
  %v3371 = vld [vmem:[%s3370] sm:$0xff]
  %v3372 = vld [vmem:[%s3370 + $0x8] sm:$0xff]
  %v3373 = vld [vmem:[%s3370 + $0x10] sm:$0xff]
  %v3374 = vld [vmem:[%s3370 + $0x18] sm:$0xff]
  %v3375 = vld [vmem:[%s3370 + $0x20] sm:$0xff]
  %v3376 = vld [vmem:[%s3370 + $0x28] sm:$0xff]
  %v3377 = vld [vmem:[%s3370 + $0x30] sm:$0xff]
  %v3378 = vld [vmem:[%s3370 + $0x38] sm:$0xff]
  %v3379 = vld [vmem:[%s3370 + $0x40] sm:$0xff]
  %v3380 = vld [vmem:[%s3370 + $0x48] sm:$0xff]
  %v3381 = vld [vmem:[%s3370 + $0x50] sm:$0xff]
  %v3382 = vld [vmem:[%s3370 + $0x58] sm:$0xff]
  %v3383 = vld [vmem:[%s3370 + $0x60] sm:$0xff]
  %v3384 = vld [vmem:[%s3370 + $0x68] sm:$0xff]
  %v3385 = vld [vmem:[%s3370 + $0x70] sm:$0xff]
  %v3386 = vld [vmem:[%s3370 + $0x78] sm:$0xff]
  %v3387 = vld [vmem:[%s3370 + $0x80] sm:$0xff]
  %v3388 = vld [vmem:[%s3370 + $0x88] sm:$0xf]
  %v3390 = vsel %vm3211, %v3173, 0
  %v3393 = vsel %vm171, %v3388, 0
  %3395 = vmatpush.msra.mxu0 %v3386
  %3396 = vmatpush.msra.mxu0 %v3385
  %3397 = vmatpush.msra.mxu0 %v3384
  %3398 = vmatpush.msra.mxu0 %v3383
  %3399 = vmatpush.msra.mxu0 %v3382
  %3400 = vmatpush.msra.mxu0 %v3381
  %3401 = vmatpush.msra.mxu0 %v3380
  %3402 = vmatpush.msra.mxu0 %v3379
  %3403 = vmatpush.msra.mxu0 %v3378
  %3404 = vmatpush.msra.mxu0 %v3377
  %3405 = vmatpush.msra.mxu0 %v3376
  %3406 = vmatpush.msra.mxu0 %v3375
  %3407 = vmatpush.msra.mxu0 %v3374
  %3408 = vmatpush.msra.mxu0 %v3373
  %3409 = vmatpush.msra.mxu0 %v3372
  %3410 = vmatpush.msra.mxu0 %v3371
  %3411 = vmatmul.f32.gmra.mxu0 %v3172
  %v3412 = vpop.f32.mrf.mxu0
  %v3413 = vadd.f32 0.0, %v3412
  %3414 = vdwg.mxu0
  %3415 = vmatpush.msra.mxu0 0.0
  %3416 = vmatpush.msra.mxu0 0.0
  %3417 = vmatpush.msra.mxu0 0.0
  %3418 = vmatpush.msra.mxu0 0.0
  %3419 = vmatpush.msra.mxu0 0.0
  %3420 = vmatpush.msra.mxu0 0.0
  %3421 = vmatpush.msra.mxu0 0.0
  %3422 = vmatpush.msra.mxu0 0.0
  %3423 = vmatpush.msra.mxu0 0.0
  %3424 = vmatpush.msra.mxu0 0.0
  %3425 = vmatpush.msra.mxu0 0.0
  %3426 = vmatpush.msra.mxu0 0.0
  %3427 = vmatpush.msra.mxu0 0.0
  %3428 = vmatpush.msra.mxu0 0.0
  %3429 = vmatpush.msra.mxu0 %v3393
  %3430 = vmatpush.msra.mxu0 %v3387
  %3431 = vmatmul.f32.gmra.mxu0 %v3390
  %v3432 = vpop.f32.mrf.mxu0
  %v3433 = vadd.f32 %v3413, %v3432
  %3434 = vdwg.mxu0
  %v3435 = vadd.f32 %v3369, %v3433
  %v3436 = vld [vmem:[%s6] sm:$0x1]
  %v3438 = vperm.slane %v3436, 0
  %v3440 = vadd.f32 %v3435, %v3438
  %v3441 = vmax.f32 %v3440, 0.0
  %v3442 = vld [vmem:[%s7] sm:$0xff]
  %v3443 = vld [vmem:[%s7 + $0x8] sm:$0xff]
  %v3444 = vld [vmem:[%s7 + $0x10] sm:$0xff]
  %v3445 = vld [vmem:[%s7 + $0x18] sm:$0xff]
  %v3446 = vld [vmem:[%s7 + $0x20] sm:$0xff]
  %v3447 = vld [vmem:[%s7 + $0x28] sm:$0xff]
  %v3448 = vld [vmem:[%s7 + $0x30] sm:$0x3]
  %v3449 = vld [vmem:[%s8] sm:$0x1]
  %v3451 = vperm.slane %v3449, 0
  %vm3453 = vcmask 408576
  %v3455 = vsel %vm3453, %v3441, 0
  %vm3457 = vcmask 1041408
  %v3459 = vsel %vm3457, %v3448, 0
  %3461 = vmatpush.msra.mxu0 0.0
  %3462 = vmatpush.msra.mxu0 0.0
  %3463 = vmatpush.msra.mxu0 0.0
  %3464 = vmatpush.msra.mxu0 0.0
  %3465 = vmatpush.msra.mxu0 0.0
  %3466 = vmatpush.msra.mxu0 0.0
  %3467 = vmatpush.msra.mxu0 0.0
  %3468 = vmatpush.msra.mxu0 0.0
  %3469 = vmatpush.msra.mxu0 0.0
  %3470 = vmatpush.msra.mxu0 %v3459
  %3471 = vmatpush.msra.mxu0 %v3447
  %3472 = vmatpush.msra.mxu0 %v3446
  %3473 = vmatpush.msra.mxu0 %v3445
  %3474 = vmatpush.msra.mxu0 %v3444
  %3475 = vmatpush.msra.mxu0 %v3443
  %3476 = vmatpush.msra.mxu0 %v3442
  %3477 = vmatmul.f32.gmra.mxu0 %v3455
  %v3478 = vpop.f32.mrf.mxu0
  %v3479 = vadd.f32 %v3451, %v3478
  %3480 = vdwg.mxu0
  %vm3481 = vcmask 80896
  %v3482 = vsel %vm3481, %v3479, -inf
  %3483 = vmax.xlane.f32.xlu0 %v3482
  %v3484 = vpop.xlane.xlu0 %3483
  %v3485 = vsub.f32 %v3479, %v3484
  %v3486 = vmul.f32 %v3485, 1.442695
  %v3487 = vpow.pop %v3486
  %v3488 = vsel %vm3481, %v3487, 0.0
  %3489 = vadd.xlane.f32.xlu0 %v3488
  %v3490 = vpop.xlane.xlu0 %3489
  %v3491 = vlog2.pop %v3490
  %v3492 = vmul.f32 %v3491, 0.6931472
  %v3493 = vsub.f32 %v3485, %v3492
  %3494 = vst.msk [vmem:[%s9] sm:$0xff] %vm3481, %v3493
  // Predicated region
  $region38: #{net_forward.1} parent=0 // pred_check
    _
  $region39: #{net_forward.1} parent=0 // pred_check_branch
    %3496 = sbr.rel (0) target = $region41
  $region40: #{net_forward.1} parent=0 // pred_region
    _
  $region41: #{net_forward.1} parent=0 // pred_fallthru
    _
  // Predicated region
  $region42: #{net_forward.1} parent=0 // pred_check
    _
  $region43: #{net_forward.1} parent=0 // pred_check_branch
    %3498 = sbr.rel (0) target = $region45
  $region44: #{net_forward.1} parent=0 // pred_region
    _
  $region45: #{net_forward.1} parent=0 // pred_fallthru
    _

</llo_original>
